<compile_context>
chip_gen: v7x
topology: tpu7x:2x2x1
jax: 0.10.0
libtpu: 0.0.40
codegen_flags: <defaults>
</compile_context>

<pallas_src>
import functools

import jax
import jax.numpy as jnp
from jax.experimental import pallas as pl
from jax.experimental.pallas import tpu as pltpu


# ---------------------------------------------------------------------------
# Kernel
# ---------------------------------------------------------------------------
def make_autoencoder_kernel(lat_pad: int, bf16_epilogue: bool):
    act_dtype = jnp.bfloat16 if bf16_epilogue else jnp.float32

    def kernel(x_ref, *refs):
        # refs = [w0,b0, w1,b1, w2,b2, wcat,bcat, w5,b5, w6,b6, w7,b7,
        #         enc_ref, dec_ref]
        param_refs = refs[:-2]
        enc_ref, dec_ref = refs[-2], refs[-1]
        ws = param_refs[0::2]   # bf16 weights, (fan_in, fan_out)
        bs = param_refs[1::2]   # f32 biases, (1, fan_out)

        def relu_dense(h, w_ref, b_ref):
            # bf16 MXU operands, f32 accumulation + f32 bias-add; ReLU in
            # act_dtype (bf16 on v6e/v7x, f32 on v4/v5), then bf16 for the
            # next matmul.  max(cast(y),0) == cast(max(y,0)), so this is
            # numerically identical to the f32-epilogue path.
            y = jnp.dot(h, w_ref[...], preferred_element_type=jnp.float32)
            y = (y + b_ref[...]).astype(act_dtype)
            return jnp.maximum(y, 0).astype(jnp.bfloat16)

        h = x_ref[...].astype(jnp.bfloat16)        # (TB, D)
        h = relu_dense(h, ws[0], bs[0])            # D   -> 512
        h = relu_dense(h, ws[1], bs[1])            # 512 -> 256
        h3 = relu_dense(h, ws[2], bs[2])           # 256 -> 128

        # Single N = lat_pad + 128 matmul covering both the (lane-padded)
        # encoder projection and the fused bottleneck (W3 @ W4).
        y = jnp.dot(h3, ws[3][...], preferred_element_type=jnp.float32) + bs[3][...]
        enc_ref[...] = y[:, :lat_pad].astype(enc_ref.dtype)              # no ReLU
        h = jnp.maximum(y[:, lat_pad:].astype(act_dtype), 0).astype(jnp.bfloat16)

        h = relu_dense(h, ws[4], bs[4])            # 128 -> 256
        h = relu_dense(h, ws[5], bs[5])            # 256 -> 512
        dec = jnp.dot(h, ws[6][...], preferred_element_type=jnp.float32) + bs[6][...]
        dec_ref[...] = dec.astype(dec_ref.dtype)   # 512 -> D

    return kernel


# ---------------------------------------------------------------------------
# Parameter construction / one-time preparation
# ---------------------------------------------------------------------------
def init_params(input_dim: int, latent_dim: int, key):
    """PyTorch-style init: uniform(-1/sqrt(fan_in), 1/sqrt(fan_in)), f32."""
    dims = [
        (input_dim, 512), (512, 256), (256, 128), (128, latent_dim),   # encoder
        (latent_dim, 128), (128, 256), (256, 512), (512, input_dim),   # decoder
    ]
    params = []
    for fan_in, fan_out in dims:
        key, kw, kb = jax.random.split(key, 3)
        bound = float(fan_in) ** -0.5
        w = jax.random.uniform(kw, (fan_in, fan_out), jnp.float32, -bound, bound)
        b = jax.random.uniform(kb, (1, fan_out), jnp.float32, -bound, bound)
        params.append((w, b))
    return params


def prepare_params(params, latent_dim: int):
    """One-time prep: pad the latent projection to a 128-lane multiple, fuse
    the bottleneck (W3@W4), concatenate it with the padded encoder projection
    along N, and cast weights to bf16 (biases stay f32)."""
    (w0, b0), (w1, b1), (w2, b2), (w3, b3), (w4, b4), (w5, b5), (w6, b6), (w7, b7) = params

    lat_pad = ((latent_dim + 127) // 128) * 128
    w3p = jnp.zeros((w3.shape[0], lat_pad), jnp.float32).at[:, :latent_dim].set(w3)
    b3p = jnp.zeros((1, lat_pad), jnp.float32).at[:, :latent_dim].set(b3)

    # Exact fusion: there is no activation between encoder out and decoder L0.
    w34 = w3 @ w4              # (128, 128)
    b34 = b3 @ w4 + b4         # (1, 128)

    # One N = lat_pad + 128 matmul for both heads of the bottleneck stage.
    w_cat = jnp.concatenate([w3p, w34], axis=1)
    b_cat = jnp.concatenate([b3p, b34], axis=1)

    weights = [w0, w1, w2, w_cat, w5, w6, w7]
    biases = [b0, b1, b2, b_cat, b5, b6, b7]
    flat = []
    for w, b in zip(weights, biases):
        flat.append(w.astype(jnp.bfloat16))
        flat.append(b.astype(jnp.float32))
    return tuple(flat), lat_pad


def _default_bf16_epilogue() -> bool:
    """bf16 ReLU epilogue only on chips with a packed-bf16 VALU (v6e/v7x)."""
    try:
        kind = jax.devices()[0].device_kind.lower()
    except Exception:
        return True
    return not ("v4" in kind or "v5" in kind)


def _choose_batch_tile(B: int, max_tile: int = 1024) -> int:
    """Largest 8-row-aligned batch tile (<= max_tile) that still yields >= 2
    grid steps when B >= 16, so v7x megacore can shard the batch axis.
    Awkward batch sizes are handled by padding B up to a tile multiple."""
    if B <= 8:
        return 8
    half = (B + 1) // 2
    return min(max_tile, ((half + 7) // 8) * 8)


# ---------------------------------------------------------------------------
# Forward wrapper
# ---------------------------------------------------------------------------
def autoencoder_forward(x, prepared_flat, latent_dim, lat_pad, bf16_epilogue):
    B, D = x.shape
    # NOTE: (TB, D) blocks are legal for any D because the block spans the full
    # last dim of x; only the batch dim is tiled (and it is 8-row aligned).
    TB = _choose_batch_tile(B)
    n_steps = -(-B // TB)
    B_pad = n_steps * TB
    x_p = x if B_pad == B else jnp.pad(x, ((0, B_pad - B), (0, 0)))

    kernel = make_autoencoder_kernel(lat_pad, bf16_epilogue)

    x_spec = pl.BlockSpec((TB, D), lambda i: (i, 0))
    # Full-array blocks with constant index_map -> fetched once, VMEM-resident.
    param_specs = [pl.BlockSpec(p.shape, lambda i: (0, 0)) for p in prepared_flat]
    out_specs = (
        pl.BlockSpec((TB, lat_pad), lambda i: (i, 0)),   # padded encoder out (bf16)
        pl.BlockSpec((TB, D), lambda i: (i, 0)),         # decoder out
    )
    out_shapes = (
        jax.ShapeDtypeStruct((B_pad, lat_pad), jnp.bfloat16),
        jax.ShapeDtypeStruct((B_pad, D), x.dtype),
    )

    weights = prepared_flat[0::2]
    flops = 2 * B_pad * sum(int(w.shape[0]) * int(w.shape[1]) for w in weights)
    bytes_accessed = (
        sum(int(p.size) * p.dtype.itemsize for p in prepared_flat)
        + int(x_p.size) * x_p.dtype.itemsize
        + B_pad * lat_pad * 2
        + B_pad * D * x.dtype.itemsize
    )

    enc_pad, dec = pl.pallas_call(
        kernel,
        out_shape=out_shapes,
        grid=(n_steps,),
        in_specs=[x_spec] + param_specs,
        out_specs=out_specs,
        compiler_params=pltpu.CompilerParams(
            dimension_semantics=("parallel",),
            # 48 MiB: above v5e's 16 MiB default scoped limit (needed for big
            # batch tiles), below v7x's 64 MiB physical VMEM.
            vmem_limit_bytes=48 * 1024 * 1024,
        ),
        cost_estimate=pl.CostEstimate(
            flops=flops, transcendentals=0, bytes_accessed=bytes_accessed
        ),
    )(x_p, *prepared_flat)

    encoded = enc_pad[:B, :latent_dim].astype(jnp.float32)
    decoded = dec[:B]
    return encoded, decoded


# ---------------------------------------------------------------------------
# References
# ---------------------------------------------------------------------------
def reference_forward_prepared(x, prepared_flat, latent_dim, lat_pad, bf16_epilogue):
    """Pure-JAX reference doing the exact same prepared (bf16/fused) math."""
    ws = prepared_flat[0::2]
    bs = prepared_flat[1::2]
    act = jnp.bfloat16 if bf16_epilogue else jnp.float32

    def relu_dense(h, w, b):
        y = (jnp.dot(h, w, preferred_element_type=jnp.float32) + b).astype(act)
        return jnp.maximum(y, 0).astype(jnp.bfloat16)

    h = x.astype(jnp.bfloat16)
    h = relu_dense(h, ws[0], bs[0])
    h = relu_dense(h, ws[1], bs[1])
    h3 = relu_dense(h, ws[2], bs[2])
    y = jnp.dot(h3, ws[3], preferred_element_type=jnp.float32) + bs[3]
    enc = y[:, :latent_dim].astype(jnp.bfloat16).astype(jnp.float32)
    h = jnp.maximum(y[:, lat_pad:].astype(act), 0).astype(jnp.bfloat16)
    h = relu_dense(h, ws[4], bs[4])
    h = relu_dense(h, ws[5], bs[5])
    dec = jnp.dot(h, ws[6], preferred_element_type=jnp.float32) + bs[6]
    return enc, dec.astype(x.dtype)


def reference_forward_f32(x, params):
    """Original (unfused, all-f32) semantics, matching the PyTorch module."""
    h = x
    n = len(params)
    enc = None
    for i, (w, b) in enumerate(params):
        h = h @ w + b
        if i == n // 2 - 1:
            enc = h                      # encoder output, no ReLU
        elif i != n - 1:
            h = jnp.maximum(h, 0.0)
    return enc, h


# ---------------------------------------------------------------------------
# Demo / self-check
# ---------------------------------------------------------------------------
if __name__ == "__main__":
    input_dim = 256
    latent_dim = 2

    key = jax.random.PRNGKey(0)
    key, kx = jax.random.split(key)
    params = init_params(input_dim, latent_dim, key)

    # One-time parameter preparation (bf16 cast, padding, bottleneck fusion).
    bf16_epi = _default_bf16_epilogue()
    prepared, lat_pad = prepare_params(params, latent_dim)

    fwd = jax.jit(functools.partial(
        autoencoder_forward,
        latent_dim=latent_dim, lat_pad=lat_pad, bf16_epilogue=bf16_epi))

    def check(batch, seed):
        x = jax.random.normal(jax.random.PRNGKey(seed), (batch, input_dim),
                              jnp.float32)
        encoded, decoded = jax.block_until_ready(fwd(x, prepared))
        assert encoded.shape == (batch, latent_dim)
        assert decoded.shape == (batch, input_dim)

        # Exact-math check vs a pure-JAX reference doing the identical
        # bf16-weight / fused-bottleneck computation.
        enc_ref, dec_ref = reference_forward_prepared(
            x, prepared, latent_dim, lat_pad, bf16_epi)
        assert jnp.allclose(encoded, enc_ref, atol=1e-3, rtol=1e-3)
        assert jnp.allclose(decoded, dec_ref, atol=1e-3, rtol=1e-3)

        # Loose check vs the original full-f32, unfused semantics
        # (bf16 weights introduce ~1% error).
        enc_f32, dec_f32 = reference_forward_f32(x, params)
        assert jnp.allclose(encoded, enc_f32, atol=1e-1, rtol=1e-1)
        assert jnp.allclose(decoded, dec_f32, atol=1e-1, rtol=1e-1)

    check(512, 1)   # B % TB == 0 path: TB=256, grid of 2 "parallel" steps
    check(200, 2)   # awkward batch: padded to 2 steps of TB=104 (no TB=8 fallback)

    print("KERNEL_OK")
</pallas_src>

<mosaic_0001>
module attributes {stable_mosaic.version = 11 : i64} {
  func.func @kernel(%arg0: i32, %arg1: memref<256x256xf32, #tpu.memory_space<vmem>>, %arg2: memref<256x512xbf16, #tpu.memory_space<vmem>>, %arg3: memref<1x512xf32, #tpu.memory_space<vmem>>, %arg4: memref<512x256xbf16, #tpu.memory_space<vmem>>, %arg5: memref<1x256xf32, #tpu.memory_space<vmem>>, %arg6: memref<256x128xbf16, #tpu.memory_space<vmem>>, %arg7: memref<1x128xf32, #tpu.memory_space<vmem>>, %arg8: memref<128x256xbf16, #tpu.memory_space<vmem>>, %arg9: memref<1x256xf32, #tpu.memory_space<vmem>>, %arg10: memref<128x256xbf16, #tpu.memory_space<vmem>>, %arg11: memref<1x256xf32, #tpu.memory_space<vmem>>, %arg12: memref<256x512xbf16, #tpu.memory_space<vmem>>, %arg13: memref<1x512xf32, #tpu.memory_space<vmem>>, %arg14: memref<512x256xbf16, #tpu.memory_space<vmem>>, %arg15: memref<1x256xf32, #tpu.memory_space<vmem>>, %arg16: memref<256x128xbf16, #tpu.memory_space<vmem>>, %arg17: memref<256x256xf32, #tpu.memory_space<vmem>>) attributes {dimension_semantics = [#tpu.dimension_semantics<parallel>], iteration_bounds = array<i64: 2>, scalar_prefetch = 0 : i64, scratch_operands = 0 : i64, tpu.core_type = #tpu.core_type<tc>, window_params = [{transform_indices = @transform_0, window_bounds = array<i64: 256, 256>}, {pipeline_mode = #tpu.pipeline_mode<synchronous>, transform_indices = @transform_1, window_bounds = array<i64: 256, 512>}, {pipeline_mode = #tpu.pipeline_mode<synchronous>, transform_indices = @transform_2, window_bounds = array<i64: 1, 512>}, {pipeline_mode = #tpu.pipeline_mode<synchronous>, transform_indices = @transform_3, window_bounds = array<i64: 512, 256>}, {pipeline_mode = #tpu.pipeline_mode<synchronous>, transform_indices = @transform_4, window_bounds = array<i64: 1, 256>}, {pipeline_mode = #tpu.pipeline_mode<synchronous>, transform_indices = @transform_5, window_bounds = array<i64: 256, 128>}, {pipeline_mode = #tpu.pipeline_mode<synchronous>, transform_indices = @transform_6, window_bounds = array<i64: 1, 128>}, {pipeline_mode = #tpu.pipeline_mode<synchronous>, transform_indices = @transform_7, window_bounds = array<i64: 128, 256>}, {pipeline_mode = #tpu.pipeline_mode<synchronous>, transform_indices = @transform_8, window_bounds = array<i64: 1, 256>}, {pipeline_mode = #tpu.pipeline_mode<synchronous>, transform_indices = @transform_9, window_bounds = array<i64: 128, 256>}, {pipeline_mode = #tpu.pipeline_mode<synchronous>, transform_indices = @transform_10, window_bounds = array<i64: 1, 256>}, {pipeline_mode = #tpu.pipeline_mode<synchronous>, transform_indices = @transform_11, window_bounds = array<i64: 256, 512>}, {pipeline_mode = #tpu.pipeline_mode<synchronous>, transform_indices = @transform_12, window_bounds = array<i64: 1, 512>}, {pipeline_mode = #tpu.pipeline_mode<synchronous>, transform_indices = @transform_13, window_bounds = array<i64: 512, 256>}, {pipeline_mode = #tpu.pipeline_mode<synchronous>, transform_indices = @transform_14, window_bounds = array<i64: 1, 256>}, {transform_indices = @transform_15, window_bounds = array<i64: 256, 128>}, {transform_indices = @transform_16, window_bounds = array<i64: 256, 256>}]} {
    %c0 = arith.constant 0 : index
    %c0_0 = arith.constant 0 : index
    %0 = vector.load %arg1[%c0, %c0_0] : memref<256x256xf32, #tpu.memory_space<vmem>>, vector<256x256xf32>
    %1 = arith.truncf %0 : vector<256x256xf32> to vector<256x256xbf16>
    %c0_1 = arith.constant 0 : index
    %c0_2 = arith.constant 0 : index
    %2 = vector.load %arg2[%c0_1, %c0_2] : memref<256x512xbf16, #tpu.memory_space<vmem>>, vector<256x512xbf16>
    %cst = arith.constant dense<0.000000e+00> : vector<256x512xf32>
    %3 = tpu.matmul %1, %2, %cst {dimension_numbers = #tpu.dot_dimension_numbers<[1], [0], [0], [1], [0, 0, 1, 1], [], []>} : vector<256x256xbf16>, vector<256x512xbf16>, vector<256x512xf32> -> vector<256x512xf32>
    %c0_3 = arith.constant 0 : index
    %c0_4 = arith.constant 0 : index
    %4 = vector.load %arg3[%c0_3, %c0_4] : memref<1x512xf32, #tpu.memory_space<vmem>>, vector<1x512xf32>
    %5 = vector.broadcast %4 : vector<1x512xf32> to vector<256x512xf32>
    %6 = arith.addf %3, %5 : vector<256x512xf32>
    %7 = arith.truncf %6 : vector<256x512xf32> to vector<256x512xbf16>
    %cst_5 = arith.constant 0.000000e+00 : bf16
    %8 = vector.broadcast %cst_5 : bf16 to vector<256x512xbf16>
    %9 = arith.maximumf %7, %8 : vector<256x512xbf16>
    %c0_6 = arith.constant 0 : index
    %c0_7 = arith.constant 0 : index
    %10 = vector.load %arg4[%c0_6, %c0_7] : memref<512x256xbf16, #tpu.memory_space<vmem>>, vector<512x256xbf16>
    %cst_8 = arith.constant dense<0.000000e+00> : vector<256x256xf32>
    %11 = tpu.matmul %9, %10, %cst_8 {dimension_numbers = #tpu.dot_dimension_numbers<[1], [0], [0], [1], [0, 0, 1, 1], [], []>} : vector<256x512xbf16>, vector<512x256xbf16>, vector<256x256xf32> -> vector<256x256xf32>
    %c0_9 = arith.constant 0 : index
    %c0_10 = arith.constant 0 : index
    %12 = vector.load %arg5[%c0_9, %c0_10] : memref<1x256xf32, #tpu.memory_space<vmem>>, vector<1x256xf32>
    %13 = vector.broadcast %12 : vector<1x256xf32> to vector<256x256xf32>
    %14 = arith.addf %11, %13 : vector<256x256xf32>
    %15 = arith.truncf %14 : vector<256x256xf32> to vector<256x256xbf16>
    %cst_11 = arith.constant 0.000000e+00 : bf16
    %16 = vector.broadcast %cst_11 : bf16 to vector<256x256xbf16>
    %17 = arith.maximumf %15, %16 : vector<256x256xbf16>
    %c0_12 = arith.constant 0 : index
    %c0_13 = arith.constant 0 : index
    %18 = vector.load %arg6[%c0_12, %c0_13] : memref<256x128xbf16, #tpu.memory_space<vmem>>, vector<256x128xbf16>
    %cst_14 = arith.constant dense<0.000000e+00> : vector<256x128xf32>
    %19 = tpu.matmul %17, %18, %cst_14 {dimension_numbers = #tpu.dot_dimension_numbers<[1], [0], [0], [1], [0, 0, 1, 1], [], []>} : vector<256x256xbf16>, vector<256x128xbf16>, vector<256x128xf32> -> vector<256x128xf32>
    %c0_15 = arith.constant 0 : index
    %c0_16 = arith.constant 0 : index
    %20 = vector.load %arg7[%c0_15, %c0_16] : memref<1x128xf32, #tpu.memory_space<vmem>>, vector<1x128xf32>
    %21 = vector.broadcast %20 : vector<1x128xf32> to vector<256x128xf32>
    %22 = arith.addf %19, %21 : vector<256x128xf32>
    %23 = arith.truncf %22 : vector<256x128xf32> to vector<256x128xbf16>
    %cst_17 = arith.constant 0.000000e+00 : bf16
    %24 = vector.broadcast %cst_17 : bf16 to vector<256x128xbf16>
    %25 = arith.maximumf %23, %24 : vector<256x128xbf16>
    %c0_18 = arith.constant 0 : index
    %c0_19 = arith.constant 0 : index
    %26 = vector.load %arg8[%c0_18, %c0_19] : memref<128x256xbf16, #tpu.memory_space<vmem>>, vector<128x256xbf16>
    %cst_20 = arith.constant dense<0.000000e+00> : vector<256x256xf32>
    %27 = tpu.matmul %25, %26, %cst_20 {dimension_numbers = #tpu.dot_dimension_numbers<[1], [0], [0], [1], [0, 0, 1, 1], [], []>} : vector<256x128xbf16>, vector<128x256xbf16>, vector<256x256xf32> -> vector<256x256xf32>
    %c0_21 = arith.constant 0 : index
    %c0_22 = arith.constant 0 : index
    %28 = vector.load %arg9[%c0_21, %c0_22] : memref<1x256xf32, #tpu.memory_space<vmem>>, vector<1x256xf32>
    %29 = vector.broadcast %28 : vector<1x256xf32> to vector<256x256xf32>
    %30 = arith.addf %27, %29 : vector<256x256xf32>
    %31 = vector.extract_strided_slice %30 {offsets = [0, 0], sizes = [256, 128], strides = [1, 1]} : vector<256x256xf32> to vector<256x128xf32>
    %32 = arith.truncf %31 : vector<256x128xf32> to vector<256x128xbf16>
    %c0_23 = arith.constant 0 : index
    %c0_24 = arith.constant 0 : index
    %33 = vector.load %arg16[%c0_23, %c0_24] : memref<256x128xbf16, #tpu.memory_space<vmem>>, vector<256x128xbf16>
    tpu.vector_store %arg16[%c0_23, %c0_24], %32 {strides = array<i32>} : memref<256x128xbf16, #tpu.memory_space<vmem>>, vector<256x128xbf16>,
    %34 = vector.extract_strided_slice %30 {offsets = [0, 128], sizes = [256, 128], strides = [1, 1]} : vector<256x256xf32> to vector<256x128xf32>
    %35 = arith.truncf %34 : vector<256x128xf32> to vector<256x128xbf16>
    %cst_25 = arith.constant 0.000000e+00 : bf16
    %36 = vector.broadcast %cst_25 : bf16 to vector<256x128xbf16>
    %37 = arith.maximumf %35, %36 : vector<256x128xbf16>
    %c0_26 = arith.constant 0 : index
    %c0_27 = arith.constant 0 : index
    %38 = vector.load %arg10[%c0_26, %c0_27] : memref<128x256xbf16, #tpu.memory_space<vmem>>, vector<128x256xbf16>
    %cst_28 = arith.constant dense<0.000000e+00> : vector<256x256xf32>
    %39 = tpu.matmul %37, %38, %cst_28 {dimension_numbers = #tpu.dot_dimension_numbers<[1], [0], [0], [1], [0, 0, 1, 1], [], []>} : vector<256x128xbf16>, vector<128x256xbf16>, vector<256x256xf32> -> vector<256x256xf32>
    %c0_29 = arith.constant 0 : index
    %c0_30 = arith.constant 0 : index
    %40 = vector.load %arg11[%c0_29, %c0_30] : memref<1x256xf32, #tpu.memory_space<vmem>>, vector<1x256xf32>
    %41 = vector.broadcast %40 : vector<1x256xf32> to vector<256x256xf32>
    %42 = arith.addf %39, %41 : vector<256x256xf32>
    %43 = arith.truncf %42 : vector<256x256xf32> to vector<256x256xbf16>
    %cst_31 = arith.constant 0.000000e+00 : bf16
    %44 = vector.broadcast %cst_31 : bf16 to vector<256x256xbf16>
    %45 = arith.maximumf %43, %44 : vector<256x256xbf16>
    %c0_32 = arith.constant 0 : index
    %c0_33 = arith.constant 0 : index
    %46 = vector.load %arg12[%c0_32, %c0_33] : memref<256x512xbf16, #tpu.memory_space<vmem>>, vector<256x512xbf16>
    %cst_34 = arith.constant dense<0.000000e+00> : vector<256x512xf32>
    %47 = tpu.matmul %45, %46, %cst_34 {dimension_numbers = #tpu.dot_dimension_numbers<[1], [0], [0], [1], [0, 0, 1, 1], [], []>} : vector<256x256xbf16>, vector<256x512xbf16>, vector<256x512xf32> -> vector<256x512xf32>
    %c0_35 = arith.constant 0 : index
    %c0_36 = arith.constant 0 : index
    %48 = vector.load %arg13[%c0_35, %c0_36] : memref<1x512xf32, #tpu.memory_space<vmem>>, vector<1x512xf32>
    %49 = vector.broadcast %48 : vector<1x512xf32> to vector<256x512xf32>
    %50 = arith.addf %47, %49 : vector<256x512xf32>
    %51 = arith.truncf %50 : vector<256x512xf32> to vector<256x512xbf16>
    %cst_37 = arith.constant 0.000000e+00 : bf16
    %52 = vector.broadcast %cst_37 : bf16 to vector<256x512xbf16>
    %53 = arith.maximumf %51, %52 : vector<256x512xbf16>
    %c0_38 = arith.constant 0 : index
    %c0_39 = arith.constant 0 : index
    %54 = vector.load %arg14[%c0_38, %c0_39] : memref<512x256xbf16, #tpu.memory_space<vmem>>, vector<512x256xbf16>
    %cst_40 = arith.constant dense<0.000000e+00> : vector<256x256xf32>
    %55 = tpu.matmul %53, %54, %cst_40 {dimension_numbers = #tpu.dot_dimension_numbers<[1], [0], [0], [1], [0, 0, 1, 1], [], []>} : vector<256x512xbf16>, vector<512x256xbf16>, vector<256x256xf32> -> vector<256x256xf32>
    %c0_41 = arith.constant 0 : index
    %c0_42 = arith.constant 0 : index
    %56 = vector.load %arg15[%c0_41, %c0_42] : memref<1x256xf32, #tpu.memory_space<vmem>>, vector<1x256xf32>
    %57 = vector.broadcast %56 : vector<1x256xf32> to vector<256x256xf32>
    %58 = arith.addf %55, %57 : vector<256x256xf32>
    %c0_43 = arith.constant 0 : index
    %c0_44 = arith.constant 0 : index
    %59 = vector.load %arg17[%c0_43, %c0_44] : memref<256x256xf32, #tpu.memory_space<vmem>>, vector<256x256xf32>
    tpu.vector_store %arg17[%c0_43, %c0_44], %58 {strides = array<i32>} : memref<256x256xf32, #tpu.memory_space<vmem>>, vector<256x256xf32>,
    return
  }
  func.func @transform_0(%arg0: i32) -> (i32, i32) {
    %c0_i32 = arith.constant 0 : i32
    %c0_i32_0 = arith.constant 0 : i32
    return %arg0, %c0_i32 : i32, i32
  }
  func.func @transform_1(%arg0: i32) -> (i32, i32) {
    %c0_i32 = arith.constant 0 : i32
    %c0_i32_0 = arith.constant 0 : i32
    %c0_i32_1 = arith.constant 0 : i32
    return %c0_i32, %c0_i32_0 : i32, i32
  }
  func.func @transform_2(%arg0: i32) -> (i32, i32) {
    %c0_i32 = arith.constant 0 : i32
    %c0_i32_0 = arith.constant 0 : i32
    %c0_i32_1 = arith.constant 0 : i32
    return %c0_i32, %c0_i32_0 : i32, i32
  }
  func.func @transform_3(%arg0: i32) -> (i32, i32) {
    %c0_i32 = arith.constant 0 : i32
    %c0_i32_0 = arith.constant 0 : i32
    %c0_i32_1 = arith.constant 0 : i32
    return %c0_i32, %c0_i32_0 : i32, i32
  }
  func.func @transform_4(%arg0: i32) -> (i32, i32) {
    %c0_i32 = arith.constant 0 : i32
    %c0_i32_0 = arith.constant 0 : i32
    %c0_i32_1 = arith.constant 0 : i32
    return %c0_i32, %c0_i32_0 : i32, i32
  }
  func.func @transform_5(%arg0: i32) -> (i32, i32) {
    %c0_i32 = arith.constant 0 : i32
    %c0_i32_0 = arith.constant 0 : i32
    %c0_i32_1 = arith.constant 0 : i32
    return %c0_i32, %c0_i32_0 : i32, i32
  }
  func.func @transform_6(%arg0: i32) -> (i32, i32) {
    %c0_i32 = arith.constant 0 : i32
    %c0_i32_0 = arith.constant 0 : i32
    %c0_i32_1 = arith.constant 0 : i32
    return %c0_i32, %c0_i32_0 : i32, i32
  }
  func.func @transform_7(%arg0: i32) -> (i32, i32) {
    %c0_i32 = arith.constant 0 : i32
    %c0_i32_0 = arith.constant 0 : i32
    %c0_i32_1 = arith.constant 0 : i32
    return %c0_i32, %c0_i32_0 : i32, i32
  }
  func.func @transform_8(%arg0: i32) -> (i32, i32) {
    %c0_i32 = arith.constant 0 : i32
    %c0_i32_0 = arith.constant 0 : i32
    %c0_i32_1 = arith.constant 0 : i32
    return %c0_i32, %c0_i32_0 : i32, i32
  }
  func.func @transform_9(%arg0: i32) -> (i32, i32) {
    %c0_i32 = arith.constant 0 : i32
    %c0_i32_0 = arith.constant 0 : i32
    %c0_i32_1 = arith.constant 0 : i32
    return %c0_i32, %c0_i32_0 : i32, i32
  }
  func.func @transform_10(%arg0: i32) -> (i32, i32) {
    %c0_i32 = arith.constant 0 : i32
    %c0_i32_0 = arith.constant 0 : i32
    %c0_i32_1 = arith.constant 0 : i32
    return %c0_i32, %c0_i32_0 : i32, i32
  }
  func.func @transform_11(%arg0: i32) -> (i32, i32) {
    %c0_i32 = arith.constant 0 : i32
    %c0_i32_0 = arith.constant 0 : i32
    %c0_i32_1 = arith.constant 0 : i32
    return %c0_i32, %c0_i32_0 : i32, i32
  }
  func.func @transform_12(%arg0: i32) -> (i32, i32) {
    %c0_i32 = arith.constant 0 : i32
    %c0_i32_0 = arith.constant 0 : i32
    %c0_i32_1 = arith.constant 0 : i32
    return %c0_i32, %c0_i32_0 : i32, i32
  }
  func.func @transform_13(%arg0: i32) -> (i32, i32) {
    %c0_i32 = arith.constant 0 : i32
    %c0_i32_0 = arith.constant 0 : i32
    %c0_i32_1 = arith.constant 0 : i32
    return %c0_i32, %c0_i32_0 : i32, i32
  }
  func.func @transform_14(%arg0: i32) -> (i32, i32) {
    %c0_i32 = arith.constant 0 : i32
    %c0_i32_0 = arith.constant 0 : i32
    %c0_i32_1 = arith.constant 0 : i32
    return %c0_i32, %c0_i32_0 : i32, i32
  }
  func.func @transform_15(%arg0: i32) -> (i32, i32) {
    %c0_i32 = arith.constant 0 : i32
    %c0_i32_0 = arith.constant 0 : i32
    return %arg0, %c0_i32 : i32, i32
  }
  func.func @transform_16(%arg0: i32) -> (i32, i32) {
    %c0_i32 = arith.constant 0 : i32
    %c0_i32_0 = arith.constant 0 : i32
    return %arg0, %c0_i32 : i32, i32
  }
}

</mosaic_0001>

<llo_original>
// kernel: autoencoder_forward.1
$region0: #{autoencoder_forward.1}
  #allocation0 [shape = 'u32[]', space=smem, size = 0x4, offset = 0x4, fixed_abs, tag = 'smem constant byte address 0x4 - core index']
  #allocation1 [shape = 'u32[144,128]{1,0:T(1,128)}', space=vmem, size = 0x12000, scoped, tag = 'internal scratch']
  %s0 = inlined_call_operand.hbm [shape: f32[512,256], index: 0, kind: input, shape index: {}]
  %s1 = inlined_call_operand.hbm [shape: bf16[256,512], index: 1, kind: input, shape index: {}]
  %s2 = inlined_call_operand.vmem [shape: f32[1,512], index: 2, kind: input, shape index: {}]
  %s3 = inlined_call_operand.hbm [shape: bf16[512,256], index: 3, kind: input, shape index: {}]
  %s4 = inlined_call_operand.vmem [shape: f32[1,256], index: 4, kind: input, shape index: {}]
  %s5 = inlined_call_operand.hbm [shape: bf16[256,128], index: 5, kind: input, shape index: {}]
  %s6 = inlined_call_operand.vmem [shape: f32[1,128], index: 6, kind: input, shape index: {}]
  %s7 = inlined_call_operand.hbm [shape: bf16[128,256], index: 7, kind: input, shape index: {}]
  %s8 = inlined_call_operand.vmem [shape: f32[1,256], index: 8, kind: input, shape index: {}]
  %s9 = inlined_call_operand.hbm [shape: bf16[128,256], index: 9, kind: input, shape index: {}]
  %s10 = inlined_call_operand.vmem [shape: f32[1,256], index: 10, kind: input, shape index: {}]
  %s11 = inlined_call_operand.hbm [shape: bf16[256,512], index: 11, kind: input, shape index: {}]
  %s12 = inlined_call_operand.vmem [shape: f32[1,512], index: 12, kind: input, shape index: {}]
  %s13 = inlined_call_operand.hbm [shape: bf16[512,256], index: 13, kind: input, shape index: {}]
  %s14 = inlined_call_operand.vmem [shape: f32[1,256], index: 14, kind: input, shape index: {}]
  %s15 = inlined_call_operand.vmem [shape: bf16[512,128], index: 15, kind: output, shape index: {0}]
  %s16 = inlined_call_operand.hbm [shape: f32[512,256], index: 16, kind: output, shape index: {1}]
  %17 = xla_tuple %s15, %s16
  %s18 = sld [smem:[#allocation0]]
  $region133: #{autoencoder_forward.1} parent=0
    _
  %s20 = ssub.s32 1, %s18
  %s21 = scalar_select 0, %s20, %s18
  $region1: #{autoencoder_forward.1} parent=0
    #allocation2 [shape = 'u8[524288]{0}', space=vmem, size = 0x80000, scoped, tag = 'input window, operand 0']
    #allocation3 [shape = 's32[2]{0}', space=sflag, size = 0x8, scoped, tag = 'scoped memory for autoencoder_forward.1']
    #allocation4 [shape = 's32[2]{0}', space=sflag, size = 0x8, scoped, tag = 'scoped memory for autoencoder_forward.1']
    #allocation5 [shape = 'u8[262144]{0}', space=vmem, size = 0x40000, scoped, tag = 'input window, operand 1, single buffered']
    #allocation6 [shape = 's32[1]{0}', space=sflag, size = 0x4, scoped, tag = 'scoped memory for autoencoder_forward.1']
    #allocation7 [shape = 'u8[262144]{0}', space=vmem, size = 0x40000, scoped, tag = 'input window, operand 3, single buffered']
    #allocation8 [shape = 'u8[65536]{0}', space=vmem, size = 0x10000, scoped, tag = 'input window, operand 5, single buffered']
    #allocation9 [shape = 's32[1]{0}', space=sflag, size = 0x4, scoped, tag = 'scoped memory for autoencoder_forward.1']
    #allocation10 [shape = 'u8[65536]{0}', space=vmem, size = 0x10000, scoped, tag = 'input window, operand 7, single buffered']
    #allocation11 [shape = 'u8[65536]{0}', space=vmem, size = 0x10000, scoped, tag = 'input window, operand 9, single buffered']
    #allocation12 [shape = 's32[1]{0}', space=sflag, size = 0x4, scoped, tag = 'scoped memory for autoencoder_forward.1']
    #allocation13 [shape = 'u8[262144]{0}', space=vmem, size = 0x40000, scoped, tag = 'input window, operand 11, single buffered']
    #allocation14 [shape = 'u8[262144]{0}', space=vmem, size = 0x40000, scoped, tag = 'input window, operand 13, single buffered']
    #allocation15 [shape = 's32[1]{0}', space=sflag, size = 0x4, scoped, tag = 'scoped memory for autoencoder_forward.1']
    #allocation16 [shape = 'u8[524288]{0}', space=vmem, size = 0x80000, scoped, tag = 'output window, operand 1']
    %22 = vsyncpa [#allocation3], 0
    %s23 = scalar_lea.sflag [#allocation3], 1
    %24 = vsyncpa %s23, 0
    %25 = vsyncpa [#allocation6], 0
    %26 = vsyncpa [#allocation9], 0
    %27 = vsyncpa [#allocation12], 0
    %28 = vsyncpa [#allocation15], 0
    %29 = vsyncpa [#allocation4], 0
    %s30 = scalar_lea.sflag [#allocation4], 1
    %31 = vsyncpa %s30, 0
    loop: start=0, step=1, limit=4
    $region2: #{autoencoder_forward.1} parent=1 // loop_pre_header
      _
    $region3: #{autoencoder_forward.1} parent=1 // loop_header
      %s33 = sphi 0, %s37
      %p34 = scmp.ge.s32.totalorder %s33, 4
      %s43 = sphi 0, %s45
      %s46 = sphi 0, %s43
      %s47 = sphi 0, %s46
      %s63 = sphi 0, %s47
      %s67 = sphi 0, %s67
      %s69 = sphi 0, %s67
      %s70 = sphi 0, %s69
      %s84 = sphi 0, %s70
      %s88 = sphi 0, %s88
      %s90 = sphi 0, %s88
      %s91 = sphi 0, %s90
      %s105 = sphi 0, %s91
      %s109 = sphi 0, %s109
      %s111 = sphi 0, %s109
      %s112 = sphi 0, %s111
      %s126 = sphi 0, %s112
      %s130 = sphi 0, %s130
      %s132 = sphi 0, %s130
      %s133 = sphi 0, %s132
      %s147 = sphi 0, %s133
      %s151 = sphi 0, %s151
      %s153 = sphi 0, %s151
      %s154 = sphi 0, %s153
      %s168 = sphi 0, %s154
      %s172 = sphi 0, %s172
      %s174 = sphi 0, %s172
      %s175 = sphi 0, %s174
      %s189 = sphi 0, %s175
      %s193 = sphi 0, %s193
      %s195 = sphi 0, %s193
      %s196 = sphi 0, %s195
      %s210 = sphi 0, %s196
      %s214 = sphi 0, %s214
      %s216 = sphi 0, %s214
      %s217 = sphi 0, %s216
      %s231 = sphi 0, %s217
      %s235 = sphi 0, %s235
      %s237 = sphi 0, %s235
      %s238 = sphi 0, %s237
      %s252 = sphi 0, %s238
      %s256 = sphi 0, %s256
      %s258 = sphi 0, %s256
      %s259 = sphi 0, %s258
      %s273 = sphi 0, %s259
      %s277 = sphi 0, %s277
      %s279 = sphi 0, %s277
      %s280 = sphi 0, %s279
      %s294 = sphi 0, %s280
      %s298 = sphi 0, %s298
      %s300 = sphi 0, %s298
      %s301 = sphi 0, %s300
      %s315 = sphi 0, %s301
      %s319 = sphi 0, %s319
      %s321 = sphi 0, %s319
      %s322 = sphi 0, %s321
      %s336 = sphi 0, %s322
      %s340 = sphi 0, %s340
      %s342 = sphi 0, %s340
      %s343 = sphi 0, %s342
      %s357 = sphi 0, %s343
      %s363 = sphi 0, %s365
      %s366 = sphi 0, %s363
      %s367 = sphi 0, %s366
      %s383 = sphi 0, %s367
      %s389 = sphi 0, %s391
      %s392 = sphi 0, %s389
      %s393 = sphi 0, %s392
      %s409 = sphi 0, %s393
    $region4: #{autoencoder_forward.1} parent=1 // loop_header_branch
      %36 = sbr.rel (%p34) target = $region8
    $region5: #{autoencoder_forward.1} parent=1 // loop_body
      %s38 = ssub.s32 %s33, 1
      %s39 = ssub.s32 %s33, 2
      %s40 = sadd.s32 %s33, 1
      %s41 = ssub.s32 %s33, %s40
      %p42 = scmp.eq.s32.totalorder %s41, 0
      %s44 = sadd.s32 %s43, 1
      %s45 = scalar_select %p42, %s43, %s44
      %p48 = pneg %p42
      %p49 = scmp.eq.s32.totalorder %s33, 1
      %p50 = por %p48, %p49
      %p51 = scmp.ne.s32.totalorder %s43, %s46
      %p52 = scmp.eq.s32.totalorder %s33, 0
      %p53 = por %p51, %p52
      %p54 = scmp.ne.s32.totalorder %s43, %s46
      %p55 = scmp.eq.s32.totalorder %s38, 1
      %p56 = por %p54, %p55
      %p57 = scmp.ne.s32.totalorder %s46, %s47
      %p58 = scmp.eq.s32.totalorder %s38, 0
      %p59 = por %p57, %p58
      %p60 = scmp.ne.s32.totalorder %s46, %s47
      %p61 = scmp.eq.s32.totalorder %s39, 1
      %p62 = por %p60, %p61
      %p64 = scmp.ne.s32.totalorder %s47, %s63
      %p65 = scmp.eq.s32.totalorder %s39, 0
      %p66 = por %p64, %p65
      %s68 = sadd.s32 %s67, 1
      %p71 = scmp.eq.s32.totalorder %s33, 1
      %p72 = scmp.ne.s32.totalorder %s67, %s69
      %p73 = scmp.eq.s32.totalorder %s33, 0
      %p74 = por %p72, %p73
      %p75 = scmp.ne.s32.totalorder %s67, %s69
      %p76 = scmp.eq.s32.totalorder %s38, 1
      %p77 = por %p75, %p76
      %p78 = scmp.ne.s32.totalorder %s69, %s70
      %p79 = scmp.eq.s32.totalorder %s38, 0
      %p80 = por %p78, %p79
      %p81 = scmp.ne.s32.totalorder %s69, %s70
      %p82 = scmp.eq.s32.totalorder %s39, 1
      %p83 = por %p81, %p82
      %p85 = scmp.ne.s32.totalorder %s70, %s84
      %p86 = scmp.eq.s32.totalorder %s39, 0
      %p87 = por %p85, %p86
      %s89 = sadd.s32 %s88, 1
      %p92 = scmp.eq.s32.totalorder %s33, 1
      %p93 = scmp.ne.s32.totalorder %s88, %s90
      %p94 = scmp.eq.s32.totalorder %s33, 0
      %p95 = por %p93, %p94
      %p96 = scmp.ne.s32.totalorder %s88, %s90
      %p97 = scmp.eq.s32.totalorder %s38, 1
      %p98 = por %p96, %p97
      %p99 = scmp.ne.s32.totalorder %s90, %s91
      %p100 = scmp.eq.s32.totalorder %s38, 0
      %p101 = por %p99, %p100
      %p102 = scmp.ne.s32.totalorder %s90, %s91
      %p103 = scmp.eq.s32.totalorder %s39, 1
      %p104 = por %p102, %p103
      %p106 = scmp.ne.s32.totalorder %s91, %s105
      %p107 = scmp.eq.s32.totalorder %s39, 0
      %p108 = por %p106, %p107
      %s110 = sadd.s32 %s109, 1
      %p113 = scmp.eq.s32.totalorder %s33, 1
      %p114 = scmp.ne.s32.totalorder %s109, %s111
      %p115 = scmp.eq.s32.totalorder %s33, 0
      %p116 = por %p114, %p115
      %p117 = scmp.ne.s32.totalorder %s109, %s111
      %p118 = scmp.eq.s32.totalorder %s38, 1
      %p119 = por %p117, %p118
      %p120 = scmp.ne.s32.totalorder %s111, %s112
      %p121 = scmp.eq.s32.totalorder %s38, 0
      %p122 = por %p120, %p121
      %p123 = scmp.ne.s32.totalorder %s111, %s112
      %p124 = scmp.eq.s32.totalorder %s39, 1
      %p125 = por %p123, %p124
      %p127 = scmp.ne.s32.totalorder %s112, %s126
      %p128 = scmp.eq.s32.totalorder %s39, 0
      %p129 = por %p127, %p128
      %s131 = sadd.s32 %s130, 1
      %p134 = scmp.eq.s32.totalorder %s33, 1
      %p135 = scmp.ne.s32.totalorder %s130, %s132
      %p136 = scmp.eq.s32.totalorder %s33, 0
      %p137 = por %p135, %p136
      %p138 = scmp.ne.s32.totalorder %s130, %s132
      %p139 = scmp.eq.s32.totalorder %s38, 1
      %p140 = por %p138, %p139
      %p141 = scmp.ne.s32.totalorder %s132, %s133
      %p142 = scmp.eq.s32.totalorder %s38, 0
      %p143 = por %p141, %p142
      %p144 = scmp.ne.s32.totalorder %s132, %s133
      %p145 = scmp.eq.s32.totalorder %s39, 1
      %p146 = por %p144, %p145
      %p148 = scmp.ne.s32.totalorder %s133, %s147
      %p149 = scmp.eq.s32.totalorder %s39, 0
      %p150 = por %p148, %p149
      %s152 = sadd.s32 %s151, 1
      %p155 = scmp.eq.s32.totalorder %s33, 1
      %p156 = scmp.ne.s32.totalorder %s151, %s153
      %p157 = scmp.eq.s32.totalorder %s33, 0
      %p158 = por %p156, %p157
      %p159 = scmp.ne.s32.totalorder %s151, %s153
      %p160 = scmp.eq.s32.totalorder %s38, 1
      %p161 = por %p159, %p160
      %p162 = scmp.ne.s32.totalorder %s153, %s154
      %p163 = scmp.eq.s32.totalorder %s38, 0
      %p164 = por %p162, %p163
      %p165 = scmp.ne.s32.totalorder %s153, %s154
      %p166 = scmp.eq.s32.totalorder %s39, 1
      %p167 = por %p165, %p166
      %p169 = scmp.ne.s32.totalorder %s154, %s168
      %p170 = scmp.eq.s32.totalorder %s39, 0
      %p171 = por %p169, %p170
      %s173 = sadd.s32 %s172, 1
      %p176 = scmp.eq.s32.totalorder %s33, 1
      %p177 = scmp.ne.s32.totalorder %s172, %s174
      %p178 = scmp.eq.s32.totalorder %s33, 0
      %p179 = por %p177, %p178
      %p180 = scmp.ne.s32.totalorder %s172, %s174
      %p181 = scmp.eq.s32.totalorder %s38, 1
      %p182 = por %p180, %p181
      %p183 = scmp.ne.s32.totalorder %s174, %s175
      %p184 = scmp.eq.s32.totalorder %s38, 0
      %p185 = por %p183, %p184
      %p186 = scmp.ne.s32.totalorder %s174, %s175
      %p187 = scmp.eq.s32.totalorder %s39, 1
      %p188 = por %p186, %p187
      %p190 = scmp.ne.s32.totalorder %s175, %s189
      %p191 = scmp.eq.s32.totalorder %s39, 0
      %p192 = por %p190, %p191
      %s194 = sadd.s32 %s193, 1
      %p197 = scmp.eq.s32.totalorder %s33, 1
      %p198 = scmp.ne.s32.totalorder %s193, %s195
      %p199 = scmp.eq.s32.totalorder %s33, 0
      %p200 = por %p198, %p199
      %p201 = scmp.ne.s32.totalorder %s193, %s195
      %p202 = scmp.eq.s32.totalorder %s38, 1
      %p203 = por %p201, %p202
      %p204 = scmp.ne.s32.totalorder %s195, %s196
      %p205 = scmp.eq.s32.totalorder %s38, 0
      %p206 = por %p204, %p205
      %p207 = scmp.ne.s32.totalorder %s195, %s196
      %p208 = scmp.eq.s32.totalorder %s39, 1
      %p209 = por %p207, %p208
      %p211 = scmp.ne.s32.totalorder %s196, %s210
      %p212 = scmp.eq.s32.totalorder %s39, 0
      %p213 = por %p211, %p212
      %s215 = sadd.s32 %s214, 1
      %p218 = scmp.eq.s32.totalorder %s33, 1
      %p219 = scmp.ne.s32.totalorder %s214, %s216
      %p220 = scmp.eq.s32.totalorder %s33, 0
      %p221 = por %p219, %p220
      %p222 = scmp.ne.s32.totalorder %s214, %s216
      %p223 = scmp.eq.s32.totalorder %s38, 1
      %p224 = por %p222, %p223
      %p225 = scmp.ne.s32.totalorder %s216, %s217
      %p226 = scmp.eq.s32.totalorder %s38, 0
      %p227 = por %p225, %p226
      %p228 = scmp.ne.s32.totalorder %s216, %s217
      %p229 = scmp.eq.s32.totalorder %s39, 1
      %p230 = por %p228, %p229
      %p232 = scmp.ne.s32.totalorder %s217, %s231
      %p233 = scmp.eq.s32.totalorder %s39, 0
      %p234 = por %p232, %p233
      %s236 = sadd.s32 %s235, 1
      %p239 = scmp.eq.s32.totalorder %s33, 1
      %p240 = scmp.ne.s32.totalorder %s235, %s237
      %p241 = scmp.eq.s32.totalorder %s33, 0
      %p242 = por %p240, %p241
      %p243 = scmp.ne.s32.totalorder %s235, %s237
      %p244 = scmp.eq.s32.totalorder %s38, 1
      %p245 = por %p243, %p244
      %p246 = scmp.ne.s32.totalorder %s237, %s238
      %p247 = scmp.eq.s32.totalorder %s38, 0
      %p248 = por %p246, %p247
      %p249 = scmp.ne.s32.totalorder %s237, %s238
      %p250 = scmp.eq.s32.totalorder %s39, 1
      %p251 = por %p249, %p250
      %p253 = scmp.ne.s32.totalorder %s238, %s252
      %p254 = scmp.eq.s32.totalorder %s39, 0
      %p255 = por %p253, %p254
      %s257 = sadd.s32 %s256, 1
      %p260 = scmp.eq.s32.totalorder %s33, 1
      %p261 = scmp.ne.s32.totalorder %s256, %s258
      %p262 = scmp.eq.s32.totalorder %s33, 0
      %p263 = por %p261, %p262
      %p264 = scmp.ne.s32.totalorder %s256, %s258
      %p265 = scmp.eq.s32.totalorder %s38, 1
      %p266 = por %p264, %p265
      %p267 = scmp.ne.s32.totalorder %s258, %s259
      %p268 = scmp.eq.s32.totalorder %s38, 0
      %p269 = por %p267, %p268
      %p270 = scmp.ne.s32.totalorder %s258, %s259
      %p271 = scmp.eq.s32.totalorder %s39, 1
      %p272 = por %p270, %p271
      %p274 = scmp.ne.s32.totalorder %s259, %s273
      %p275 = scmp.eq.s32.totalorder %s39, 0
      %p276 = por %p274, %p275
      %s278 = sadd.s32 %s277, 1
      %p281 = scmp.eq.s32.totalorder %s33, 1
      %p282 = scmp.ne.s32.totalorder %s277, %s279
      %p283 = scmp.eq.s32.totalorder %s33, 0
      %p284 = por %p282, %p283
      %p285 = scmp.ne.s32.totalorder %s277, %s279
      %p286 = scmp.eq.s32.totalorder %s38, 1
      %p287 = por %p285, %p286
      %p288 = scmp.ne.s32.totalorder %s279, %s280
      %p289 = scmp.eq.s32.totalorder %s38, 0
      %p290 = por %p288, %p289
      %p291 = scmp.ne.s32.totalorder %s279, %s280
      %p292 = scmp.eq.s32.totalorder %s39, 1
      %p293 = por %p291, %p292
      %p295 = scmp.ne.s32.totalorder %s280, %s294
      %p296 = scmp.eq.s32.totalorder %s39, 0
      %p297 = por %p295, %p296
      %s299 = sadd.s32 %s298, 1
      %p302 = scmp.eq.s32.totalorder %s33, 1
      %p303 = scmp.ne.s32.totalorder %s298, %s300
      %p304 = scmp.eq.s32.totalorder %s33, 0
      %p305 = por %p303, %p304
      %p306 = scmp.ne.s32.totalorder %s298, %s300
      %p307 = scmp.eq.s32.totalorder %s38, 1
      %p308 = por %p306, %p307
      %p309 = scmp.ne.s32.totalorder %s300, %s301
      %p310 = scmp.eq.s32.totalorder %s38, 0
      %p311 = por %p309, %p310
      %p312 = scmp.ne.s32.totalorder %s300, %s301
      %p313 = scmp.eq.s32.totalorder %s39, 1
      %p314 = por %p312, %p313
      %p316 = scmp.ne.s32.totalorder %s301, %s315
      %p317 = scmp.eq.s32.totalorder %s39, 0
      %p318 = por %p316, %p317
      %s320 = sadd.s32 %s319, 1
      %p323 = scmp.eq.s32.totalorder %s33, 1
      %p324 = scmp.ne.s32.totalorder %s319, %s321
      %p325 = scmp.eq.s32.totalorder %s33, 0
      %p326 = por %p324, %p325
      %p327 = scmp.ne.s32.totalorder %s319, %s321
      %p328 = scmp.eq.s32.totalorder %s38, 1
      %p329 = por %p327, %p328
      %p330 = scmp.ne.s32.totalorder %s321, %s322
      %p331 = scmp.eq.s32.totalorder %s38, 0
      %p332 = por %p330, %p331
      %p333 = scmp.ne.s32.totalorder %s321, %s322
      %p334 = scmp.eq.s32.totalorder %s39, 1
      %p335 = por %p333, %p334
      %p337 = scmp.ne.s32.totalorder %s322, %s336
      %p338 = scmp.eq.s32.totalorder %s39, 0
      %p339 = por %p337, %p338
      %s341 = sadd.s32 %s340, 1
      %p344 = scmp.eq.s32.totalorder %s33, 1
      %p345 = scmp.ne.s32.totalorder %s340, %s342
      %p346 = scmp.eq.s32.totalorder %s33, 0
      %p347 = por %p345, %p346
      %p348 = scmp.ne.s32.totalorder %s340, %s342
      %p349 = scmp.eq.s32.totalorder %s38, 1
      %p350 = por %p348, %p349
      %p351 = scmp.ne.s32.totalorder %s342, %s343
      %p352 = scmp.eq.s32.totalorder %s38, 0
      %p353 = por %p351, %p352
      %p354 = scmp.ne.s32.totalorder %s342, %s343
      %p355 = scmp.eq.s32.totalorder %s39, 1
      %p356 = por %p354, %p355
      %p358 = scmp.ne.s32.totalorder %s343, %s357
      %p359 = scmp.eq.s32.totalorder %s39, 0
      %p360 = por %p358, %p359
      %s361 = ssub.s32 %s33, %s40
      %p362 = scmp.eq.s32.totalorder %s361, 0
      %s364 = sadd.s32 %s363, 1
      %s365 = scalar_select %p362, %s363, %s364
      %p368 = pneg %p362
      %p369 = scmp.eq.s32.totalorder %s33, 1
      %p370 = por %p368, %p369
      %p371 = scmp.ne.s32.totalorder %s363, %s366
      %p372 = scmp.eq.s32.totalorder %s33, 0
      %p373 = por %p371, %p372
      %p374 = scmp.ne.s32.totalorder %s363, %s366
      %p375 = scmp.eq.s32.totalorder %s38, 1
      %p376 = por %p374, %p375
      %p377 = scmp.ne.s32.totalorder %s366, %s367
      %p378 = scmp.eq.s32.totalorder %s38, 0
      %p379 = por %p377, %p378
      %p380 = scmp.ne.s32.totalorder %s366, %s367
      %p381 = scmp.eq.s32.totalorder %s39, 1
      %p382 = por %p380, %p381
      %p384 = scmp.ne.s32.totalorder %s367, %s383
      %p385 = scmp.eq.s32.totalorder %s39, 0
      %p386 = por %p384, %p385
      %s387 = ssub.s32 %s33, %s40
      %p388 = scmp.eq.s32.totalorder %s387, 0
      %s390 = sadd.s32 %s389, 1
      %s391 = scalar_select %p388, %s389, %s390
      %p394 = pneg %p388
      %p395 = scmp.eq.s32.totalorder %s33, 1
      %p396 = por %p394, %p395
      %p397 = scmp.ne.s32.totalorder %s389, %s392
      %p398 = scmp.eq.s32.totalorder %s33, 0
      %p399 = por %p397, %p398
      %p400 = scmp.ne.s32.totalorder %s389, %s392
      %p401 = scmp.eq.s32.totalorder %s38, 1
      %p402 = por %p400, %p401
      %p403 = scmp.ne.s32.totalorder %s392, %s393
      %p404 = scmp.eq.s32.totalorder %s38, 0
      %p405 = por %p403, %p404
      %p406 = scmp.ne.s32.totalorder %s392, %s393
      %p407 = scmp.eq.s32.totalorder %s39, 1
      %p408 = por %p406, %p407
      %p410 = scmp.ne.s32.totalorder %s393, %s409
      %p411 = scmp.eq.s32.totalorder %s39, 0
      %p412 = por %p410, %p411
      %p413 = scmp.le.s32.totalorder 1, %s33
      %p414 = scmp.lt.s32.totalorder %s33, 3
      %p415 = pnand %p413, %p414
      %p416 = pneg %p415
      // Predicated region
      $region9: #{autoencoder_forward.1} parent=5 // pred_check
        _
      $region10: #{autoencoder_forward.1} parent=5 // pred_check_branch
        %418 = sbr.rel (%p415) target = $region12
      $region11: #{autoencoder_forward.1} parent=5 // pred_region
        %s419 = ssub.s32 %s33, 1
        // Predicated region
        $region13: #{autoencoder_forward.1} parent=11 // pred_check
          %p420 = pneg %p80
        $region14: #{autoencoder_forward.1} parent=11 // pred_check_branch
          %422 = sbr.rel (%p420) target = $region16
        $region15: #{autoencoder_forward.1} parent=11 // pred_region
          %s424 = ssub.s32 8192, 8192
          %425 = vsyncadd [#allocation6], %s424
          %s426 = sshll.u32 [#allocation5], 4
          %s427 = int_to_ptr.vmem [resolvable:$true] %s426
          %432 = dma.hbm_to_vmem [thread:$0]  %s1, 8192, %s427, [#allocation6], 256, 256, 16
        $region16: #{autoencoder_forward.1} parent=11 // pred_fallthru
          _
        // Predicated region
        $region17: #{autoencoder_forward.1} parent=11 // pred_check
          %p433 = pneg %p101
        $region18: #{autoencoder_forward.1} parent=11 // pred_check_branch
          %435 = sbr.rel (%p433) target = $region20
        $region19: #{autoencoder_forward.1} parent=11 // pred_region
          _
        $region20: #{autoencoder_forward.1} parent=11 // pred_fallthru
          _
        // Predicated region
        $region21: #{autoencoder_forward.1} parent=11 // pred_check
          %p436 = pneg %p122
        $region22: #{autoencoder_forward.1} parent=11 // pred_check_branch
          %438 = sbr.rel (%p436) target = $region24
        $region23: #{autoencoder_forward.1} parent=11 // pred_region
          %s440 = ssub.s32 8192, 8192
          %441 = vsyncadd [#allocation6], %s440
          %s442 = sshll.u32 [#allocation7], 4
          %s443 = int_to_ptr.vmem [resolvable:$true] %s442
          %448 = dma.hbm_to_vmem [thread:$0]  %s3, 8192, %s443, [#allocation6], 128, 128, 8
        $region24: #{autoencoder_forward.1} parent=11 // pred_fallthru
          _
        // Predicated region
        $region25: #{autoencoder_forward.1} parent=11 // pred_check
          %p449 = pneg %p143
        $region26: #{autoencoder_forward.1} parent=11 // pred_check_branch
          %451 = sbr.rel (%p449) target = $region28
        $region27: #{autoencoder_forward.1} parent=11 // pred_region
          _
        $region28: #{autoencoder_forward.1} parent=11 // pred_fallthru
          _
        // Predicated region
        $region29: #{autoencoder_forward.1} parent=11 // pred_check
          %p452 = pneg %p164
        $region30: #{autoencoder_forward.1} parent=11 // pred_check_branch
          %454 = sbr.rel (%p452) target = $region32
        $region31: #{autoencoder_forward.1} parent=11 // pred_region
          %s456 = ssub.s32 2048, 2048
          %457 = vsyncadd [#allocation9], %s456
          %s458 = sshll.u32 [#allocation8], 4
          %s459 = int_to_ptr.vmem [resolvable:$true] %s458
          %464 = dma.hbm_to_vmem [thread:$0]  %s5, 2048, %s459, [#allocation9], 64, 64, 4
        $region32: #{autoencoder_forward.1} parent=11 // pred_fallthru
          _
        // Predicated region
        $region33: #{autoencoder_forward.1} parent=11 // pred_check
          %p465 = pneg %p185
        $region34: #{autoencoder_forward.1} parent=11 // pred_check_branch
          %467 = sbr.rel (%p465) target = $region36
        $region35: #{autoencoder_forward.1} parent=11 // pred_region
          _
        $region36: #{autoencoder_forward.1} parent=11 // pred_fallthru
          _
        // Predicated region
        $region37: #{autoencoder_forward.1} parent=11 // pred_check
          %p468 = pneg %p206
        $region38: #{autoencoder_forward.1} parent=11 // pred_check_branch
          %470 = sbr.rel (%p468) target = $region40
        $region39: #{autoencoder_forward.1} parent=11 // pred_region
          %s472 = ssub.s32 2048, 2048
          %473 = vsyncadd [#allocation9], %s472
          %s474 = sshll.u32 [#allocation10], 4
          %s475 = int_to_ptr.vmem [resolvable:$true] %s474
          %480 = dma.hbm_to_vmem [thread:$0]  %s7, 2048, %s475, [#allocation9], 128, 128, 8
        $region40: #{autoencoder_forward.1} parent=11 // pred_fallthru
          _
        // Predicated region
        $region41: #{autoencoder_forward.1} parent=11 // pred_check
          %p481 = pneg %p227
        $region42: #{autoencoder_forward.1} parent=11 // pred_check_branch
          %483 = sbr.rel (%p481) target = $region44
        $region43: #{autoencoder_forward.1} parent=11 // pred_region
          _
        $region44: #{autoencoder_forward.1} parent=11 // pred_fallthru
          _
        // Predicated region
        $region45: #{autoencoder_forward.1} parent=11 // pred_check
          %p484 = pneg %p248
        $region46: #{autoencoder_forward.1} parent=11 // pred_check_branch
          %486 = sbr.rel (%p484) target = $region48
        $region47: #{autoencoder_forward.1} parent=11 // pred_region
          %s488 = ssub.s32 2048, 2048
          %489 = vsyncadd [#allocation12], %s488
          %s490 = sshll.u32 [#allocation11], 4
          %s491 = int_to_ptr.vmem [resolvable:$true] %s490
          %496 = dma.hbm_to_vmem [thread:$0]  %s9, 2048, %s491, [#allocation12], 128, 128, 8
        $region48: #{autoencoder_forward.1} parent=11 // pred_fallthru
          _
        // Predicated region
        $region49: #{autoencoder_forward.1} parent=11 // pred_check
          %p497 = pneg %p269
        $region50: #{autoencoder_forward.1} parent=11 // pred_check_branch
          %499 = sbr.rel (%p497) target = $region52
        $region51: #{autoencoder_forward.1} parent=11 // pred_region
          _
        $region52: #{autoencoder_forward.1} parent=11 // pred_fallthru
          _
        // Predicated region
        $region53: #{autoencoder_forward.1} parent=11 // pred_check
          %p500 = pneg %p290
        $region54: #{autoencoder_forward.1} parent=11 // pred_check_branch
          %502 = sbr.rel (%p500) target = $region56
        $region55: #{autoencoder_forward.1} parent=11 // pred_region
          %s504 = ssub.s32 8192, 8192
          %505 = vsyncadd [#allocation12], %s504
          %s506 = sshll.u32 [#allocation13], 4
          %s507 = int_to_ptr.vmem [resolvable:$true] %s506
          %512 = dma.hbm_to_vmem [thread:$0]  %s11, 8192, %s507, [#allocation12], 256, 256, 16
        $region56: #{autoencoder_forward.1} parent=11 // pred_fallthru
          _
        // Predicated region
        $region57: #{autoencoder_forward.1} parent=11 // pred_check
          %p513 = pneg %p311
        $region58: #{autoencoder_forward.1} parent=11 // pred_check_branch
          %515 = sbr.rel (%p513) target = $region60
        $region59: #{autoencoder_forward.1} parent=11 // pred_region
          _
        $region60: #{autoencoder_forward.1} parent=11 // pred_fallthru
          _
        // Predicated region
        $region61: #{autoencoder_forward.1} parent=11 // pred_check
          %p516 = pneg %p332
        $region62: #{autoencoder_forward.1} parent=11 // pred_check_branch
          %518 = sbr.rel (%p516) target = $region64
        $region63: #{autoencoder_forward.1} parent=11 // pred_region
          %s520 = ssub.s32 8192, 8192
          %521 = vsyncadd [#allocation15], %s520
          %s522 = sshll.u32 [#allocation14], 4
          %s523 = int_to_ptr.vmem [resolvable:$true] %s522
          %528 = dma.hbm_to_vmem [thread:$0]  %s13, 8192, %s523, [#allocation15], 128, 128, 8
        $region64: #{autoencoder_forward.1} parent=11 // pred_fallthru
          _
        // Predicated region
        $region65: #{autoencoder_forward.1} parent=11 // pred_check
          %p529 = pneg %p353
        $region66: #{autoencoder_forward.1} parent=11 // pred_check_branch
          %531 = sbr.rel (%p529) target = $region68
        $region67: #{autoencoder_forward.1} parent=11 // pred_region
          _
        $region68: #{autoencoder_forward.1} parent=11 // pred_fallthru
          _
      $region12: #{autoencoder_forward.1} parent=5 // pred_fallthru
        _
      %p532 = scmp.lt.s32.totalorder %s33, 2
      // Predicated region
      $region69: #{autoencoder_forward.1} parent=5 // pred_check
        %p533 = pneg %p532
      $region70: #{autoencoder_forward.1} parent=5 // pred_check_branch
        %535 = sbr.rel (%p533) target = $region72
      $region71: #{autoencoder_forward.1} parent=5 // pred_region
        // Predicated region
        $region73: #{autoencoder_forward.1} parent=71 // pred_check
          %p536 = pneg %p53
        $region74: #{autoencoder_forward.1} parent=71 // pred_check_branch
          %538 = sbr.rel (%p536) target = $region76
        $region75: #{autoencoder_forward.1} parent=71 // pred_region
          %s539 = sand.u32 %s43, 1
          %s540 = scalar_lea.sflag [#allocation3], %s539
          %s541 = sand.u32 %s43, 1
          %s542 = smul.addr %s541, 512
          %s543 = scalar_lea.vmem [#allocation2], %s542
          %s544 = smul.u32 32, %s33
          %s546 = ssub.s32 8192, 8192
          %547 = vsyncadd %s540, %s546
          %s548 = smul.addr %s544, 2
          %s549 = smul.addr %s548, 128
          %s550 = scalar_lea.hbm %s0, %s549
          %s551 = sshll.u32 %s543, 4
          %s552 = int_to_ptr.vmem [resolvable:$true] %s551
          %557 = dma.hbm_to_vmem [thread:$0]  %s550, 8192, %s552, %s540, 256, 256, 16
        $region76: #{autoencoder_forward.1} parent=71 // pred_fallthru
          _
      $region72: #{autoencoder_forward.1} parent=5 // pred_fallthru
        _
      %p558 = scmp.le.s32.totalorder 1, %s33
      %p559 = scmp.lt.s32.totalorder %s33, 3
      %p560 = pnand %p558, %p559
      %p561 = pneg %p560
      // Predicated region
      $region77: #{autoencoder_forward.1} parent=5 // pred_check
        _
      $region78: #{autoencoder_forward.1} parent=5 // pred_check_branch
        %563 = sbr.rel (%p560) target = $region80
      $region79: #{autoencoder_forward.1} parent=5 // pred_region
        %s564 = ssub.s32 %s33, 1
        %s565 = sand.u32 %s46, 1
        %s566 = scalar_lea.sflag [#allocation3], %s565
        %s567 = sand.u32 %s46, 1
        %s568 = smul.addr %s567, 512
        %s569 = scalar_lea.vmem [#allocation2], %s568
        // Predicated region
        $region81: #{autoencoder_forward.1} parent=79 // pred_check
          %p570 = pneg %p59
        $region82: #{autoencoder_forward.1} parent=79 // pred_check_branch
          %572 = sbr.rel (%p570) target = $region84
        $region83: #{autoencoder_forward.1} parent=79 // pred_region
          %573 = dma.done %s566, 8192
        $region84: #{autoencoder_forward.1} parent=79 // pred_fallthru
          _
        // Predicated region
        $region85: #{autoencoder_forward.1} parent=79 // pred_check
          %p574 = pneg %p80
        $region86: #{autoencoder_forward.1} parent=79 // pred_check_branch
          %576 = sbr.rel (%p574) target = $region88
        $region87: #{autoencoder_forward.1} parent=79 // pred_region
          %577 = dma.done [#allocation6], 8192
        $region88: #{autoencoder_forward.1} parent=79 // pred_fallthru
          _
        // Predicated region
        $region89: #{autoencoder_forward.1} parent=79 // pred_check
          %p578 = pneg %p122
        $region90: #{autoencoder_forward.1} parent=79 // pred_check_branch
          %580 = sbr.rel (%p578) target = $region92
        $region91: #{autoencoder_forward.1} parent=79 // pred_region
          %581 = dma.done [#allocation6], 8192
        $region92: #{autoencoder_forward.1} parent=79 // pred_fallthru
          _
        // Predicated region
        $region93: #{autoencoder_forward.1} parent=79 // pred_check
          %p582 = pneg %p164
        $region94: #{autoencoder_forward.1} parent=79 // pred_check_branch
          %584 = sbr.rel (%p582) target = $region96
        $region95: #{autoencoder_forward.1} parent=79 // pred_region
          %585 = dma.done [#allocation9], 2048
        $region96: #{autoencoder_forward.1} parent=79 // pred_fallthru
          _
        // Predicated region
        $region97: #{autoencoder_forward.1} parent=79 // pred_check
          %p586 = pneg %p206
        $region98: #{autoencoder_forward.1} parent=79 // pred_check_branch
          %588 = sbr.rel (%p586) target = $region100
        $region99: #{autoencoder_forward.1} parent=79 // pred_region
          %589 = dma.done [#allocation9], 2048
        $region100: #{autoencoder_forward.1} parent=79 // pred_fallthru
          _
        // Predicated region
        $region101: #{autoencoder_forward.1} parent=79 // pred_check
          %p590 = pneg %p248
        $region102: #{autoencoder_forward.1} parent=79 // pred_check_branch
          %592 = sbr.rel (%p590) target = $region104
        $region103: #{autoencoder_forward.1} parent=79 // pred_region
          %593 = dma.done [#allocation12], 2048
        $region104: #{autoencoder_forward.1} parent=79 // pred_fallthru
          _
        // Predicated region
        $region105: #{autoencoder_forward.1} parent=79 // pred_check
          %p594 = pneg %p290
        $region106: #{autoencoder_forward.1} parent=79 // pred_check_branch
          %596 = sbr.rel (%p594) target = $region108
        $region107: #{autoencoder_forward.1} parent=79 // pred_region
          %597 = dma.done [#allocation12], 8192
        $region108: #{autoencoder_forward.1} parent=79 // pred_fallthru
          _
        // Predicated region
        $region109: #{autoencoder_forward.1} parent=79 // pred_check
          %p598 = pneg %p332
        $region110: #{autoencoder_forward.1} parent=79 // pred_check_branch
          %600 = sbr.rel (%p598) target = $region112
        $region111: #{autoencoder_forward.1} parent=79 // pred_region
          %601 = dma.done [#allocation15], 8192
        $region112: #{autoencoder_forward.1} parent=79 // pred_fallthru
          _
        %s602 = sand.u32 %s46, 1
        %s603 = scalar_lea.sflag [#allocation3], %s602
        %s604 = sand.u32 %s46, 1
        %s605 = smul.addr %s604, 512
        %s606 = scalar_lea.vmem [#allocation2], %s605
        %p607 = pneg %p59
        %p608 = pneg %p56
        %p609 = pneg %p80
        %p610 = pneg %p77
        %p611 = pneg %p101
        %p612 = pneg %p98
        %p613 = pneg %p122
        %p614 = pneg %p119
        %p615 = pneg %p143
        %p616 = pneg %p140
        %p617 = pneg %p164
        %p618 = pneg %p161
        %p619 = pneg %p185
        %p620 = pneg %p182
        %p621 = pneg %p206
        %p622 = pneg %p203
        %p623 = pneg %p227
        %p624 = pneg %p224
        %p625 = pneg %p248
        %p626 = pneg %p245
        %p627 = pneg %p269
        %p628 = pneg %p266
        %p629 = pneg %p290
        %p630 = pneg %p287
        %p631 = pneg %p311
        %p632 = pneg %p308
        %p633 = pneg %p332
        %p634 = pneg %p329
        %p635 = pneg %p353
        %p636 = pneg %p350
        %p637 = pneg %p379
        %p638 = pneg %p376
        %s639 = smul.u32 32, %s38
        %p640 = scmp.lt.s32.totalorder %s639, 63
        %s641 = scalar_select %p640, %s639, 63
        %s642 = smul.addr %s641, 4
        %s643 = scalar_lea.vmem %s15, %s642
        %p644 = pneg %p405
        %p645 = pneg %p402
        %s646 = sand.u32 %s392, 1
        %s647 = scalar_lea.sflag [#allocation4], %s646
        %s648 = sand.u32 %s392, 1
        %s649 = smul.addr %s648, 512
        %s650 = scalar_lea.vmem [#allocation16], %s649
        %s651 = smul.u32 32, %s38
        %s652 = smul.u32 32, %s38
        %p653 = scmp.lt.s32.totalorder %s652, 63
        %s654 = scalar_select %p653, %s652, 63
        %s655 = smul.addr %s654, 4
        %s656 = scalar_lea.vmem %s15, %s655
        %s657 = smul.u32 32, %s38
        %s658 = smul.u32 32, %s38
        %v660 = vld [vmem:[%s569] sm:$0xff]
        %v661 = vld [vmem:[%s569 + $0x8] sm:$0xff]
        %v662 = vld [vmem:[%s569 + $0x10] sm:$0xff]
        %v663 = vld [vmem:[%s569 + $0x18] sm:$0xff]
        %v664 = vld [vmem:[%s569 + $0x20] sm:$0xff]
        %v665 = vld [vmem:[%s569 + $0x28] sm:$0xff]
        %v666 = vld [vmem:[%s569 + $0x30] sm:$0xff]
        %v667 = vld [vmem:[%s569 + $0x38] sm:$0xff]
        %v668 = vld [vmem:[%s569 + $0x40] sm:$0xff]
        %v669 = vld [vmem:[%s569 + $0x48] sm:$0xff]
        %v670 = vld [vmem:[%s569 + $0x50] sm:$0xff]
        %v671 = vld [vmem:[%s569 + $0x58] sm:$0xff]
        %v672 = vld [vmem:[%s569 + $0x60] sm:$0xff]
        %v673 = vld [vmem:[%s569 + $0x68] sm:$0xff]
        %v674 = vld [vmem:[%s569 + $0x70] sm:$0xff]
        %v675 = vld [vmem:[%s569 + $0x78] sm:$0xff]
        %v676 = vld [vmem:[%s569 + $0x80] sm:$0xff]
        %v677 = vld [vmem:[%s569 + $0x88] sm:$0xff]
        %v678 = vld [vmem:[%s569 + $0x90] sm:$0xff]
        %v679 = vld [vmem:[%s569 + $0x98] sm:$0xff]
        %v680 = vld [vmem:[%s569 + $0xa0] sm:$0xff]
        %v681 = vld [vmem:[%s569 + $0xa8] sm:$0xff]
        %v682 = vld [vmem:[%s569 + $0xb0] sm:$0xff]
        %v683 = vld [vmem:[%s569 + $0xb8] sm:$0xff]
        %v684 = vld [vmem:[%s569 + $0xc0] sm:$0xff]
        %v685 = vld [vmem:[%s569 + $0xc8] sm:$0xff]
        %v686 = vld [vmem:[%s569 + $0xd0] sm:$0xff]
        %v687 = vld [vmem:[%s569 + $0xd8] sm:$0xff]
        %v688 = vld [vmem:[%s569 + $0xe0] sm:$0xff]
        %v689 = vld [vmem:[%s569 + $0xe8] sm:$0xff]
        %v690 = vld [vmem:[%s569 + $0xf0] sm:$0xff]
        %v691 = vld [vmem:[%s569 + $0xf8] sm:$0xff]
        %v692 = vld [vmem:[%s569 + $0x100] sm:$0xff]
        %v693 = vld [vmem:[%s569 + $0x108] sm:$0xff]
        %v694 = vld [vmem:[%s569 + $0x110] sm:$0xff]
        %v695 = vld [vmem:[%s569 + $0x118] sm:$0xff]
        %v696 = vld [vmem:[%s569 + $0x120] sm:$0xff]
        %v697 = vld [vmem:[%s569 + $0x128] sm:$0xff]
        %v698 = vld [vmem:[%s569 + $0x130] sm:$0xff]
        %v699 = vld [vmem:[%s569 + $0x138] sm:$0xff]
        %v700 = vld [vmem:[%s569 + $0x140] sm:$0xff]
        %v701 = vld [vmem:[%s569 + $0x148] sm:$0xff]
        %v702 = vld [vmem:[%s569 + $0x150] sm:$0xff]
        %v703 = vld [vmem:[%s569 + $0x158] sm:$0xff]
        %v704 = vld [vmem:[%s569 + $0x160] sm:$0xff]
        %v705 = vld [vmem:[%s569 + $0x168] sm:$0xff]
        %v706 = vld [vmem:[%s569 + $0x170] sm:$0xff]
        %v707 = vld [vmem:[%s569 + $0x178] sm:$0xff]
        %v708 = vld [vmem:[%s569 + $0x180] sm:$0xff]
        %v709 = vld [vmem:[%s569 + $0x188] sm:$0xff]
        %v710 = vld [vmem:[%s569 + $0x190] sm:$0xff]
        %v711 = vld [vmem:[%s569 + $0x198] sm:$0xff]
        %v712 = vld [vmem:[%s569 + $0x1a0] sm:$0xff]
        %v713 = vld [vmem:[%s569 + $0x1a8] sm:$0xff]
        %v714 = vld [vmem:[%s569 + $0x1b0] sm:$0xff]
        %v715 = vld [vmem:[%s569 + $0x1b8] sm:$0xff]
        %v716 = vld [vmem:[%s569 + $0x1c0] sm:$0xff]
        %v717 = vld [vmem:[%s569 + $0x1c8] sm:$0xff]
        %v718 = vld [vmem:[%s569 + $0x1d0] sm:$0xff]
        %v719 = vld [vmem:[%s569 + $0x1d8] sm:$0xff]
        %v720 = vld [vmem:[%s569 + $0x1e0] sm:$0xff]
        %v721 = vld [vmem:[%s569 + $0x1e8] sm:$0xff]
        %v722 = vld [vmem:[%s569 + $0x1f0] sm:$0xff]
        %v723 = vld [vmem:[%s569 + $0x1f8] sm:$0xff]
        %v724 = vpack.c.bf16 %v662, %v660
        %v725 = vpack.c.bf16 %v663, %v661
        %v726 = vpack.c.bf16 %v666, %v664
        %v727 = vpack.c.bf16 %v667, %v665
        %v728 = vpack.c.bf16 %v670, %v668
        %v729 = vpack.c.bf16 %v671, %v669
        %v730 = vpack.c.bf16 %v674, %v672
        %v731 = vpack.c.bf16 %v675, %v673
        %v732 = vpack.c.bf16 %v678, %v676
        %v733 = vpack.c.bf16 %v679, %v677
        %v734 = vpack.c.bf16 %v682, %v680
        %v735 = vpack.c.bf16 %v683, %v681
        %v736 = vpack.c.bf16 %v686, %v684
        %v737 = vpack.c.bf16 %v687, %v685
        %v738 = vpack.c.bf16 %v690, %v688
        %v739 = vpack.c.bf16 %v691, %v689
        %v740 = vpack.c.bf16 %v694, %v692
        %v741 = vpack.c.bf16 %v695, %v693
        %v742 = vpack.c.bf16 %v698, %v696
        %v743 = vpack.c.bf16 %v699, %v697
        %v744 = vpack.c.bf16 %v702, %v700
        %v745 = vpack.c.bf16 %v703, %v701
        %v746 = vpack.c.bf16 %v706, %v704
        %v747 = vpack.c.bf16 %v707, %v705
        %v748 = vpack.c.bf16 %v710, %v708
        %v749 = vpack.c.bf16 %v711, %v709
        %v750 = vpack.c.bf16 %v714, %v712
        %v751 = vpack.c.bf16 %v715, %v713
        %v752 = vpack.c.bf16 %v718, %v716
        %v753 = vpack.c.bf16 %v719, %v717
        %v754 = vpack.c.bf16 %v722, %v720
        %v755 = vpack.c.bf16 %v723, %v721
        %v756 = vld [vmem:[#allocation5] sm:$0xff]
        %v757 = vld [vmem:[#allocation5 + $0x8] sm:$0xff]
        %v758 = vld [vmem:[#allocation5 + $0x10] sm:$0xff]
        %v759 = vld [vmem:[#allocation5 + $0x18] sm:$0xff]
        %v760 = vld [vmem:[#allocation5 + $0x20] sm:$0xff]
        %v761 = vld [vmem:[#allocation5 + $0x28] sm:$0xff]
        %v762 = vld [vmem:[#allocation5 + $0x30] sm:$0xff]
        %v763 = vld [vmem:[#allocation5 + $0x38] sm:$0xff]
        %v764 = vld [vmem:[#allocation5 + $0x40] sm:$0xff]
        %v765 = vld [vmem:[#allocation5 + $0x48] sm:$0xff]
        %v766 = vld [vmem:[#allocation5 + $0x50] sm:$0xff]
        %v767 = vld [vmem:[#allocation5 + $0x58] sm:$0xff]
        %v768 = vld [vmem:[#allocation5 + $0x60] sm:$0xff]
        %v769 = vld [vmem:[#allocation5 + $0x68] sm:$0xff]
        %v770 = vld [vmem:[#allocation5 + $0x70] sm:$0xff]
        %v771 = vld [vmem:[#allocation5 + $0x78] sm:$0xff]
        %v772 = vld [vmem:[#allocation5 + $0x80] sm:$0xff]
        %v773 = vld [vmem:[#allocation5 + $0x88] sm:$0xff]
        %v774 = vld [vmem:[#allocation5 + $0x90] sm:$0xff]
        %v775 = vld [vmem:[#allocation5 + $0x98] sm:$0xff]
        %v776 = vld [vmem:[#allocation5 + $0xa0] sm:$0xff]
        %v777 = vld [vmem:[#allocation5 + $0xa8] sm:$0xff]
        %v778 = vld [vmem:[#allocation5 + $0xb0] sm:$0xff]
        %v779 = vld [vmem:[#allocation5 + $0xb8] sm:$0xff]
        %v780 = vld [vmem:[#allocation5 + $0xc0] sm:$0xff]
        %v781 = vld [vmem:[#allocation5 + $0xc8] sm:$0xff]
        %v782 = vld [vmem:[#allocation5 + $0xd0] sm:$0xff]
        %v783 = vld [vmem:[#allocation5 + $0xd8] sm:$0xff]
        %v784 = vld [vmem:[#allocation5 + $0xe0] sm:$0xff]
        %v785 = vld [vmem:[#allocation5 + $0xe8] sm:$0xff]
        %v786 = vld [vmem:[#allocation5 + $0xf0] sm:$0xff]
        %v787 = vld [vmem:[#allocation5 + $0xf8] sm:$0xff]
        %v788 = vld [vmem:[#allocation5 + $0x100] sm:$0xff]
        %v789 = vld [vmem:[#allocation5 + $0x108] sm:$0xff]
        %v790 = vld [vmem:[#allocation5 + $0x110] sm:$0xff]
        %v791 = vld [vmem:[#allocation5 + $0x118] sm:$0xff]
        %v792 = vld [vmem:[#allocation5 + $0x120] sm:$0xff]
        %v793 = vld [vmem:[#allocation5 + $0x128] sm:$0xff]
        %v794 = vld [vmem:[#allocation5 + $0x130] sm:$0xff]
        %v795 = vld [vmem:[#allocation5 + $0x138] sm:$0xff]
        %v796 = vld [vmem:[#allocation5 + $0x140] sm:$0xff]
        %v797 = vld [vmem:[#allocation5 + $0x148] sm:$0xff]
        %v798 = vld [vmem:[#allocation5 + $0x150] sm:$0xff]
        %v799 = vld [vmem:[#allocation5 + $0x158] sm:$0xff]
        %v800 = vld [vmem:[#allocation5 + $0x160] sm:$0xff]
        %v801 = vld [vmem:[#allocation5 + $0x168] sm:$0xff]
        %v802 = vld [vmem:[#allocation5 + $0x170] sm:$0xff]
        %v803 = vld [vmem:[#allocation5 + $0x178] sm:$0xff]
        %v804 = vld [vmem:[#allocation5 + $0x180] sm:$0xff]
        %v805 = vld [vmem:[#allocation5 + $0x188] sm:$0xff]
        %v806 = vld [vmem:[#allocation5 + $0x190] sm:$0xff]
        %v807 = vld [vmem:[#allocation5 + $0x198] sm:$0xff]
        %v808 = vld [vmem:[#allocation5 + $0x1a0] sm:$0xff]
        %v809 = vld [vmem:[#allocation5 + $0x1a8] sm:$0xff]
        %v810 = vld [vmem:[#allocation5 + $0x1b0] sm:$0xff]
        %v811 = vld [vmem:[#allocation5 + $0x1b8] sm:$0xff]
        %v812 = vld [vmem:[#allocation5 + $0x1c0] sm:$0xff]
        %v813 = vld [vmem:[#allocation5 + $0x1c8] sm:$0xff]
        %v814 = vld [vmem:[#allocation5 + $0x1d0] sm:$0xff]
        %v815 = vld [vmem:[#allocation5 + $0x1d8] sm:$0xff]
        %v816 = vld [vmem:[#allocation5 + $0x1e0] sm:$0xff]
        %v817 = vld [vmem:[#allocation5 + $0x1e8] sm:$0xff]
        %v818 = vld [vmem:[#allocation5 + $0x1f0] sm:$0xff]
        %v819 = vld [vmem:[#allocation5 + $0x1f8] sm:$0xff]
        %v820 = vld [vmem:[%s2] sm:$0xf]
        %v822 = vlaneseq
        %v823 = vshrl.u32 %v822, 7
        %v824 = vsub.s32 0, %v823
        %v825 = vrot.slane %v820, %v824
        %v826 = vlaneseq
        %v827 = vshrl.u32 %v826, 7
        %v828 = vsub.s32 1, %v827
        %v829 = vrot.slane %v820, %v828
        %v830 = vlaneseq
        %v831 = vshrl.u32 %v830, 7
        %v832 = vsub.s32 2, %v831
        %v833 = vrot.slane %v820, %v832
        %v834 = vlaneseq
        %v835 = vshrl.u32 %v834, 7
        %v836 = vsub.s32 3, %v835
        %v837 = vrot.slane %v820, %v836
        %v906 = vunpack.c.l.b16 %v756
        %v907 = vunpack.c.h.b16 %v756
        %v908 = vunpack.c.l.b16 %v757
        %v909 = vunpack.c.h.b16 %v757
        %v910 = vunpack.c.l.b16 %v758
        %v911 = vunpack.c.h.b16 %v758
        %v912 = vunpack.c.l.b16 %v759
        %v913 = vunpack.c.h.b16 %v759
        %v914 = vunpack.c.l.b16 %v760
        %v915 = vunpack.c.h.b16 %v760
        %v916 = vunpack.c.l.b16 %v761
        %v917 = vunpack.c.h.b16 %v761
        %v918 = vunpack.c.l.b16 %v762
        %v919 = vunpack.c.h.b16 %v762
        %v920 = vunpack.c.l.b16 %v763
        %v921 = vunpack.c.h.b16 %v763
        %v922 = vunpack.c.l.b16 %v764
        %v923 = vunpack.c.h.b16 %v764
        %v924 = vunpack.c.l.b16 %v765
        %v925 = vunpack.c.h.b16 %v765
        %v926 = vunpack.c.l.b16 %v766
        %v927 = vunpack.c.h.b16 %v766
        %v928 = vunpack.c.l.b16 %v767
        %v929 = vunpack.c.h.b16 %v767
        %v930 = vunpack.c.l.b16 %v768
        %v931 = vunpack.c.h.b16 %v768
        %v932 = vunpack.c.l.b16 %v769
        %v933 = vunpack.c.h.b16 %v769
        %v934 = vunpack.c.l.b16 %v770
        %v935 = vunpack.c.h.b16 %v770
        %v936 = vunpack.c.l.b16 %v771
        %v937 = vunpack.c.h.b16 %v771
        %v938 = vunpack.c.l.b16 %v772
        %v939 = vunpack.c.h.b16 %v772
        %v940 = vunpack.c.l.b16 %v773
        %v941 = vunpack.c.h.b16 %v773
        %v942 = vunpack.c.l.b16 %v774
        %v943 = vunpack.c.h.b16 %v774
        %v944 = vunpack.c.l.b16 %v775
        %v945 = vunpack.c.h.b16 %v775
        %v946 = vunpack.c.l.b16 %v776
        %v947 = vunpack.c.h.b16 %v776
        %v948 = vunpack.c.l.b16 %v777
        %v949 = vunpack.c.h.b16 %v777
        %v950 = vunpack.c.l.b16 %v778
        %v951 = vunpack.c.h.b16 %v778
        %v952 = vunpack.c.l.b16 %v779
        %v953 = vunpack.c.h.b16 %v779
        %v954 = vunpack.c.l.b16 %v780
        %v955 = vunpack.c.h.b16 %v780
        %v956 = vunpack.c.l.b16 %v781
        %v957 = vunpack.c.h.b16 %v781
        %v958 = vunpack.c.l.b16 %v782
        %v959 = vunpack.c.h.b16 %v782
        %v960 = vunpack.c.l.b16 %v783
        %v961 = vunpack.c.h.b16 %v783
        %v962 = vunpack.c.l.b16 %v784
        %v963 = vunpack.c.h.b16 %v784
        %v964 = vunpack.c.l.b16 %v785
        %v965 = vunpack.c.h.b16 %v785
        %v966 = vunpack.c.l.b16 %v786
        %v967 = vunpack.c.h.b16 %v786
        %v968 = vunpack.c.l.b16 %v787
        %v969 = vunpack.c.h.b16 %v787
        %v970 = vunpack.c.l.b16 %v788
        %v971 = vunpack.c.h.b16 %v788
        %v972 = vunpack.c.l.b16 %v789
        %v973 = vunpack.c.h.b16 %v789
        %v974 = vunpack.c.l.b16 %v790
        %v975 = vunpack.c.h.b16 %v790
        %v976 = vunpack.c.l.b16 %v791
        %v977 = vunpack.c.h.b16 %v791
        %v978 = vunpack.c.l.b16 %v792
        %v979 = vunpack.c.h.b16 %v792
        %v980 = vunpack.c.l.b16 %v793
        %v981 = vunpack.c.h.b16 %v793
        %v982 = vunpack.c.l.b16 %v794
        %v983 = vunpack.c.h.b16 %v794
        %v984 = vunpack.c.l.b16 %v795
        %v985 = vunpack.c.h.b16 %v795
        %v986 = vunpack.c.l.b16 %v796
        %v987 = vunpack.c.h.b16 %v796
        %v988 = vunpack.c.l.b16 %v797
        %v989 = vunpack.c.h.b16 %v797
        %v990 = vunpack.c.l.b16 %v798
        %v991 = vunpack.c.h.b16 %v798
        %v992 = vunpack.c.l.b16 %v799
        %v993 = vunpack.c.h.b16 %v799
        %v994 = vunpack.c.l.b16 %v800
        %v995 = vunpack.c.h.b16 %v800
        %v996 = vunpack.c.l.b16 %v801
        %v997 = vunpack.c.h.b16 %v801
        %v998 = vunpack.c.l.b16 %v802
        %v999 = vunpack.c.h.b16 %v802
        %v1000 = vunpack.c.l.b16 %v803
        %v1001 = vunpack.c.h.b16 %v803
        %v1002 = vunpack.c.l.b16 %v804
        %v1003 = vunpack.c.h.b16 %v804
        %v1004 = vunpack.c.l.b16 %v805
        %v1005 = vunpack.c.h.b16 %v805
        %v1006 = vunpack.c.l.b16 %v806
        %v1007 = vunpack.c.h.b16 %v806
        %v1008 = vunpack.c.l.b16 %v807
        %v1009 = vunpack.c.h.b16 %v807
        %v1010 = vunpack.c.l.b16 %v808
        %v1011 = vunpack.c.h.b16 %v808
        %v1012 = vunpack.c.l.b16 %v809
        %v1013 = vunpack.c.h.b16 %v809
        %v1014 = vunpack.c.l.b16 %v810
        %v1015 = vunpack.c.h.b16 %v810
        %v1016 = vunpack.c.l.b16 %v811
        %v1017 = vunpack.c.h.b16 %v811
        %v1018 = vunpack.c.l.b16 %v812
        %v1019 = vunpack.c.h.b16 %v812
        %v1020 = vunpack.c.l.b16 %v813
        %v1021 = vunpack.c.h.b16 %v813
        %v1022 = vunpack.c.l.b16 %v814
        %v1023 = vunpack.c.h.b16 %v814
        %v1024 = vunpack.c.l.b16 %v815
        %v1025 = vunpack.c.h.b16 %v815
        %v1026 = vunpack.c.l.b16 %v816
        %v1027 = vunpack.c.h.b16 %v816
        %v1028 = vunpack.c.l.b16 %v817
        %v1029 = vunpack.c.h.b16 %v817
        %v1030 = vunpack.c.l.b16 %v818
        %v1031 = vunpack.c.h.b16 %v818
        %v1032 = vunpack.c.l.b16 %v819
        %v1033 = vunpack.c.h.b16 %v819
        %v1034 = vpack.c.b16 %v910, %v906
        %v1035 = vpack.c.b16 %v911, %v907
        %v1036 = vpack.c.b16 %v912, %v908
        %v1037 = vpack.c.b16 %v913, %v909
        %v1038 = vpack.c.b16 %v918, %v914
        %v1039 = vpack.c.b16 %v919, %v915
        %v1040 = vpack.c.b16 %v920, %v916
        %v1041 = vpack.c.b16 %v921, %v917
        %v1042 = vpack.c.b16 %v926, %v922
        %v1043 = vpack.c.b16 %v927, %v923
        %v1044 = vpack.c.b16 %v928, %v924
        %v1045 = vpack.c.b16 %v929, %v925
        %v1046 = vpack.c.b16 %v934, %v930
        %v1047 = vpack.c.b16 %v935, %v931
        %v1048 = vpack.c.b16 %v936, %v932
        %v1049 = vpack.c.b16 %v937, %v933
        %v1050 = vpack.c.b16 %v942, %v938
        %v1051 = vpack.c.b16 %v943, %v939
        %v1052 = vpack.c.b16 %v944, %v940
        %v1053 = vpack.c.b16 %v945, %v941
        %v1054 = vpack.c.b16 %v950, %v946
        %v1055 = vpack.c.b16 %v951, %v947
        %v1056 = vpack.c.b16 %v952, %v948
        %v1057 = vpack.c.b16 %v953, %v949
        %v1058 = vpack.c.b16 %v958, %v954
        %v1059 = vpack.c.b16 %v959, %v955
        %v1060 = vpack.c.b16 %v960, %v956
        %v1061 = vpack.c.b16 %v961, %v957
        %v1062 = vpack.c.b16 %v966, %v962
        %v1063 = vpack.c.b16 %v967, %v963
        %v1064 = vpack.c.b16 %v968, %v964
        %v1065 = vpack.c.b16 %v969, %v965
        %v1066 = vpack.c.b16 %v974, %v970
        %v1067 = vpack.c.b16 %v975, %v971
        %v1068 = vpack.c.b16 %v976, %v972
        %v1069 = vpack.c.b16 %v977, %v973
        %v1070 = vpack.c.b16 %v982, %v978
        %v1071 = vpack.c.b16 %v983, %v979
        %v1072 = vpack.c.b16 %v984, %v980
        %v1073 = vpack.c.b16 %v985, %v981
        %v1074 = vpack.c.b16 %v990, %v986
        %v1075 = vpack.c.b16 %v991, %v987
        %v1076 = vpack.c.b16 %v992, %v988
        %v1077 = vpack.c.b16 %v993, %v989
        %v1078 = vpack.c.b16 %v998, %v994
        %v1079 = vpack.c.b16 %v999, %v995
        %v1080 = vpack.c.b16 %v1000, %v996
        %v1081 = vpack.c.b16 %v1001, %v997
        %v1082 = vpack.c.b16 %v1006, %v1002
        %v1083 = vpack.c.b16 %v1007, %v1003
        %v1084 = vpack.c.b16 %v1008, %v1004
        %v1085 = vpack.c.b16 %v1009, %v1005
        %v1086 = vpack.c.b16 %v1014, %v1010
        %v1087 = vpack.c.b16 %v1015, %v1011
        %v1088 = vpack.c.b16 %v1016, %v1012
        %v1089 = vpack.c.b16 %v1017, %v1013
        %v1090 = vpack.c.b16 %v1022, %v1018
        %v1091 = vpack.c.b16 %v1023, %v1019
        %v1092 = vpack.c.b16 %v1024, %v1020
        %v1093 = vpack.c.b16 %v1025, %v1021
        %v1094 = vpack.c.b16 %v1030, %v1026
        %v1095 = vpack.c.b16 %v1031, %v1027
        %v1096 = vpack.c.b16 %v1032, %v1028
        %v1097 = vpack.c.b16 %v1033, %v1029
        %1162 = vmatprep.subr.bf16.mxu0 %v1035
        %1163 = vmatpush1.bf16.msra.mxu0 %v1034
        %1164 = vmatprep.subr.bf16.mxu0 %v1039
        %1165 = vmatpush1.bf16.msra.mxu0 %v1038
        %1166 = vmatprep.subr.bf16.mxu0 %v1043
        %1167 = vmatpush1.bf16.msra.mxu0 %v1042
        %1168 = vmatprep.subr.bf16.mxu0 %v1047
        %1169 = vmatpush1.bf16.msra.mxu0 %v1046
        %1170 = vmatprep.subr.bf16.mxu0 %v1051
        %1171 = vmatpush1.bf16.msra.mxu0 %v1050
        %1172 = vmatprep.subr.bf16.mxu0 %v1055
        %1173 = vmatpush1.bf16.msra.mxu0 %v1054
        %1174 = vmatprep.subr.bf16.mxu0 %v1059
        %1175 = vmatpush1.bf16.msra.mxu0 %v1058
        %1176 = vmatprep.subr.bf16.mxu0 %v1063
        %1177 = vmatpush1.bf16.msra.mxu0 %v1062
        %1178 = vmatprep.subr.bf16.mxu0 %v1067
        %1179 = vmatpush1.bf16.msra.mxu0 %v1066
        %1180 = vmatprep.subr.bf16.mxu0 %v1071
        %1181 = vmatpush1.bf16.msra.mxu0 %v1070
        %1182 = vmatprep.subr.bf16.mxu0 %v1075
        %1183 = vmatpush1.bf16.msra.mxu0 %v1074
        %1184 = vmatprep.subr.bf16.mxu0 %v1079
        %1185 = vmatpush1.bf16.msra.mxu0 %v1078
        %1186 = vmatprep.subr.bf16.mxu0 %v1083
        %1187 = vmatpush1.bf16.msra.mxu0 %v1082
        %1188 = vmatprep.subr.bf16.mxu0 %v1087
        %1189 = vmatpush1.bf16.msra.mxu0 %v1086
        %1190 = vmatprep.subr.bf16.mxu0 %v1091
        %1191 = vmatpush1.bf16.msra.mxu0 %v1090
        %1192 = vmatprep.subr.bf16.mxu0 %v1095
        %1193 = vmatpush1.bf16.msra.mxu0 %v1094
        %1194 = vmatprep.mubr.bf16.mxu0 %v725
        %1195 = vmatmul.mubr.bf16.gmra.mrb[0].mxu0 %v724
        %v1196 = vpop.f32.mrb[0].mxu0
        %v1197 = vadd.f32 %v825, %v1196
        %v1198 = vpop.f32.mrb[0].mxu0
        %v1199 = vadd.f32 %v829, %v1198
        %v1200 = vpop.f32.mrb[0].mxu0
        %v1201 = vadd.f32 %v825, %v1200
        %v1202 = vpop.f32.mrb[0].mxu0
        %v1203 = vadd.f32 %v829, %v1202
        %1204 = vmatprep.mubr.bf16.mxu0 %v727
        %1205 = vmatmul.mubr.bf16.gmra.mrb[0].mxu0 %v726
        %v1206 = vpop.f32.mrb[0].mxu0
        %v1207 = vadd.f32 %v825, %v1206
        %v1208 = vpop.f32.mrb[0].mxu0
        %v1209 = vadd.f32 %v829, %v1208
        %v1210 = vpop.f32.mrb[0].mxu0
        %v1211 = vadd.f32 %v825, %v1210
        %v1212 = vpop.f32.mrb[0].mxu0
        %v1213 = vadd.f32 %v829, %v1212
        %1214 = vmatprep.mubr.bf16.mxu0 %v729
        %1215 = vmatmul.mubr.bf16.gmra.mrb[0].mxu0 %v728
        %v1216 = vpop.f32.mrb[0].mxu0
        %v1217 = vadd.f32 %v825, %v1216
        %v1218 = vpop.f32.mrb[0].mxu0
        %v1219 = vadd.f32 %v829, %v1218
        %v1220 = vpop.f32.mrb[0].mxu0
        %v1221 = vadd.f32 %v825, %v1220
        %v1222 = vpop.f32.mrb[0].mxu0
        %v1223 = vadd.f32 %v829, %v1222
        %1224 = vmatprep.mubr.bf16.mxu0 %v731
        %1225 = vmatmul.mubr.bf16.gmra.mrb[0].mxu0 %v730
        %v1226 = vpop.f32.mrb[0].mxu0
        %v1227 = vadd.f32 %v825, %v1226
        %v1228 = vpop.f32.mrb[0].mxu0
        %v1229 = vadd.f32 %v829, %v1228
        %v1230 = vpop.f32.mrb[0].mxu0
        %v1231 = vadd.f32 %v825, %v1230
        %v1232 = vpop.f32.mrb[0].mxu0
        %v1233 = vadd.f32 %v829, %v1232
        %1234 = vmatprep.mubr.bf16.mxu0 %v733
        %1235 = vmatmul.mubr.bf16.gmra.mrb[0].mxu0 %v732
        %v1236 = vpop.f32.mrb[0].mxu0
        %v1237 = vadd.f32 %v825, %v1236
        %v1238 = vpop.f32.mrb[0].mxu0
        %v1239 = vadd.f32 %v829, %v1238
        %v1240 = vpop.f32.mrb[0].mxu0
        %v1241 = vadd.f32 %v825, %v1240
        %v1242 = vpop.f32.mrb[0].mxu0
        %v1243 = vadd.f32 %v829, %v1242
        %1244 = vmatprep.mubr.bf16.mxu0 %v735
        %1245 = vmatmul.mubr.bf16.gmra.mrb[0].mxu0 %v734
        %v1246 = vpop.f32.mrb[0].mxu0
        %v1247 = vadd.f32 %v825, %v1246
        %v1248 = vpop.f32.mrb[0].mxu0
        %v1249 = vadd.f32 %v829, %v1248
        %v1250 = vpop.f32.mrb[0].mxu0
        %v1251 = vadd.f32 %v825, %v1250
        %v1252 = vpop.f32.mrb[0].mxu0
        %v1253 = vadd.f32 %v829, %v1252
        %1254 = vmatprep.mubr.bf16.mxu0 %v737
        %1255 = vmatmul.mubr.bf16.gmra.mrb[0].mxu0 %v736
        %v1256 = vpop.f32.mrb[0].mxu0
        %v1257 = vadd.f32 %v825, %v1256
        %v1258 = vpop.f32.mrb[0].mxu0
        %v1259 = vadd.f32 %v829, %v1258
        %v1260 = vpop.f32.mrb[0].mxu0
        %v1261 = vadd.f32 %v825, %v1260
        %v1262 = vpop.f32.mrb[0].mxu0
        %v1263 = vadd.f32 %v829, %v1262
        %1264 = vmatprep.mubr.bf16.mxu0 %v739
        %1265 = vmatmul.mubr.bf16.gmra.mrb[0].mxu0 %v738
        %v1266 = vpop.f32.mrb[0].mxu0
        %v1267 = vadd.f32 %v825, %v1266
        %v1268 = vpop.f32.mrb[0].mxu0
        %v1269 = vadd.f32 %v829, %v1268
        %v1270 = vpop.f32.mrb[0].mxu0
        %v1271 = vadd.f32 %v825, %v1270
        %v1272 = vpop.f32.mrb[0].mxu0
        %v1273 = vadd.f32 %v829, %v1272
        %1274 = vmatprep.mubr.bf16.mxu0 %v741
        %1275 = vmatmul.mubr.bf16.gmra.mrb[0].mxu0 %v740
        %v1276 = vpop.f32.mrb[0].mxu0
        %v1277 = vadd.f32 %v825, %v1276
        %v1278 = vpop.f32.mrb[0].mxu0
        %v1279 = vadd.f32 %v829, %v1278
        %v1280 = vpop.f32.mrb[0].mxu0
        %v1281 = vadd.f32 %v825, %v1280
        %v1282 = vpop.f32.mrb[0].mxu0
        %v1283 = vadd.f32 %v829, %v1282
        %1284 = vmatprep.mubr.bf16.mxu0 %v743
        %1285 = vmatmul.mubr.bf16.gmra.mrb[0].mxu0 %v742
        %v1286 = vpop.f32.mrb[0].mxu0
        %v1287 = vadd.f32 %v825, %v1286
        %v1288 = vpop.f32.mrb[0].mxu0
        %v1289 = vadd.f32 %v829, %v1288
        %v1290 = vpop.f32.mrb[0].mxu0
        %v1291 = vadd.f32 %v825, %v1290
        %v1292 = vpop.f32.mrb[0].mxu0
        %v1293 = vadd.f32 %v829, %v1292
        %1294 = vmatprep.mubr.bf16.mxu0 %v745
        %1295 = vmatmul.mubr.bf16.gmra.mrb[0].mxu0 %v744
        %v1296 = vpop.f32.mrb[0].mxu0
        %v1297 = vadd.f32 %v825, %v1296
        %v1298 = vpop.f32.mrb[0].mxu0
        %v1299 = vadd.f32 %v829, %v1298
        %v1300 = vpop.f32.mrb[0].mxu0
        %v1301 = vadd.f32 %v825, %v1300
        %v1302 = vpop.f32.mrb[0].mxu0
        %v1303 = vadd.f32 %v829, %v1302
        %1304 = vmatprep.mubr.bf16.mxu0 %v747
        %1305 = vmatmul.mubr.bf16.gmra.mrb[0].mxu0 %v746
        %v1306 = vpop.f32.mrb[0].mxu0
        %v1307 = vadd.f32 %v825, %v1306
        %v1308 = vpop.f32.mrb[0].mxu0
        %v1309 = vadd.f32 %v829, %v1308
        %v1310 = vpop.f32.mrb[0].mxu0
        %v1311 = vadd.f32 %v825, %v1310
        %v1312 = vpop.f32.mrb[0].mxu0
        %v1313 = vadd.f32 %v829, %v1312
        %1314 = vmatprep.mubr.bf16.mxu0 %v749
        %1315 = vmatmul.mubr.bf16.gmra.mrb[0].mxu0 %v748
        %v1316 = vpop.f32.mrb[0].mxu0
        %v1317 = vadd.f32 %v825, %v1316
        %v1318 = vpop.f32.mrb[0].mxu0
        %v1319 = vadd.f32 %v829, %v1318
        %v1320 = vpop.f32.mrb[0].mxu0
        %v1321 = vadd.f32 %v825, %v1320
        %v1322 = vpop.f32.mrb[0].mxu0
        %v1323 = vadd.f32 %v829, %v1322
        %1324 = vmatprep.mubr.bf16.mxu0 %v751
        %1325 = vmatmul.mubr.bf16.gmra.mrb[0].mxu0 %v750
        %v1326 = vpop.f32.mrb[0].mxu0
        %v1327 = vadd.f32 %v825, %v1326
        %v1328 = vpop.f32.mrb[0].mxu0
        %v1329 = vadd.f32 %v829, %v1328
        %v1330 = vpop.f32.mrb[0].mxu0
        %v1331 = vadd.f32 %v825, %v1330
        %v1332 = vpop.f32.mrb[0].mxu0
        %v1333 = vadd.f32 %v829, %v1332
        %1334 = vmatprep.mubr.bf16.mxu0 %v753
        %1335 = vmatmul.mubr.bf16.gmra.mrb[0].mxu0 %v752
        %v1336 = vpop.f32.mrb[0].mxu0
        %v1337 = vadd.f32 %v825, %v1336
        %v1338 = vpop.f32.mrb[0].mxu0
        %v1339 = vadd.f32 %v829, %v1338
        %v1340 = vpop.f32.mrb[0].mxu0
        %v1341 = vadd.f32 %v825, %v1340
        %v1342 = vpop.f32.mrb[0].mxu0
        %v1343 = vadd.f32 %v829, %v1342
        %1344 = vmatprep.mubr.bf16.mxu0 %v755
        %1345 = vmatmul.mubr.bf16.gmra.mrb[0].mxu0 %v754
        %v1346 = vpop.f32.mrb[0].mxu0
        %v1347 = vadd.f32 %v825, %v1346
        %v1348 = vpop.f32.mrb[0].mxu0
        %v1349 = vadd.f32 %v829, %v1348
        %v1350 = vpop.f32.mrb[0].mxu0
        %v1351 = vadd.f32 %v825, %v1350
        %v1352 = vpop.f32.mrb[0].mxu0
        %v1353 = vadd.f32 %v829, %v1352
        %1354 = vdwg.mxu0
        %1355 = vmatprep.subr.bf16.mxu0 %v1037
        %1356 = vmatpush1.bf16.msra.mxu0 %v1036
        %1357 = vmatprep.subr.bf16.mxu0 %v1041
        %1358 = vmatpush1.bf16.msra.mxu0 %v1040
        %1359 = vmatprep.subr.bf16.mxu0 %v1045
        %1360 = vmatpush1.bf16.msra.mxu0 %v1044
        %1361 = vmatprep.subr.bf16.mxu0 %v1049
        %1362 = vmatpush1.bf16.msra.mxu0 %v1048
        %1363 = vmatprep.subr.bf16.mxu0 %v1053
        %1364 = vmatpush1.bf16.msra.mxu0 %v1052
        %1365 = vmatprep.subr.bf16.mxu0 %v1057
        %1366 = vmatpush1.bf16.msra.mxu0 %v1056
        %1367 = vmatprep.subr.bf16.mxu0 %v1061
        %1368 = vmatpush1.bf16.msra.mxu0 %v1060
        %1369 = vmatprep.subr.bf16.mxu0 %v1065
        %1370 = vmatpush1.bf16.msra.mxu0 %v1064
        %1371 = vmatprep.subr.bf16.mxu0 %v1069
        %1372 = vmatpush1.bf16.msra.mxu0 %v1068
        %1373 = vmatprep.subr.bf16.mxu0 %v1073
        %1374 = vmatpush1.bf16.msra.mxu0 %v1072
        %1375 = vmatprep.subr.bf16.mxu0 %v1077
        %1376 = vmatpush1.bf16.msra.mxu0 %v1076
        %1377 = vmatprep.subr.bf16.mxu0 %v1081
        %1378 = vmatpush1.bf16.msra.mxu0 %v1080
        %1379 = vmatprep.subr.bf16.mxu0 %v1085
        %1380 = vmatpush1.bf16.msra.mxu0 %v1084
        %1381 = vmatprep.subr.bf16.mxu0 %v1089
        %1382 = vmatpush1.bf16.msra.mxu0 %v1088
        %1383 = vmatprep.subr.bf16.mxu0 %v1093
        %1384 = vmatpush1.bf16.msra.mxu0 %v1092
        %1385 = vmatprep.subr.bf16.mxu0 %v1097
        %1386 = vmatpush1.bf16.msra.mxu0 %v1096
        %1387 = vmatprep.mubr.bf16.mxu0 %v725
        %1388 = vmatmul.mubr.bf16.gmra.mrb[0].mxu0 %v724
        %v1389 = vpop.f32.mrb[0].mxu0
        %v1390 = vadd.f32 %v833, %v1389
        %v1391 = vpop.f32.mrb[0].mxu0
        %v1392 = vadd.f32 %v837, %v1391
        %v1393 = vpop.f32.mrb[0].mxu0
        %v1394 = vadd.f32 %v833, %v1393
        %v1395 = vpop.f32.mrb[0].mxu0
        %v1396 = vadd.f32 %v837, %v1395
        %1397 = vmatprep.mubr.bf16.mxu0 %v727
        %1398 = vmatmul.mubr.bf16.gmra.mrb[0].mxu0 %v726
        %v1399 = vpop.f32.mrb[0].mxu0
        %v1400 = vadd.f32 %v833, %v1399
        %v1401 = vpop.f32.mrb[0].mxu0
        %v1402 = vadd.f32 %v837, %v1401
        %v1403 = vpop.f32.mrb[0].mxu0
        %v1404 = vadd.f32 %v833, %v1403
        %v1405 = vpop.f32.mrb[0].mxu0
        %v1406 = vadd.f32 %v837, %v1405
        %1407 = vmatprep.mubr.bf16.mxu0 %v729
        %1408 = vmatmul.mubr.bf16.gmra.mrb[0].mxu0 %v728
        %v1409 = vpop.f32.mrb[0].mxu0
        %v1410 = vadd.f32 %v833, %v1409
        %v1411 = vpop.f32.mrb[0].mxu0
        %v1412 = vadd.f32 %v837, %v1411
        %v1413 = vpop.f32.mrb[0].mxu0
        %v1414 = vadd.f32 %v833, %v1413
        %v1415 = vpop.f32.mrb[0].mxu0
        %v1416 = vadd.f32 %v837, %v1415
        %1417 = vmatprep.mubr.bf16.mxu0 %v731
        %1418 = vmatmul.mubr.bf16.gmra.mrb[0].mxu0 %v730
        %v1419 = vpop.f32.mrb[0].mxu0
        %v1420 = vadd.f32 %v833, %v1419
        %v1421 = vpop.f32.mrb[0].mxu0
        %v1422 = vadd.f32 %v837, %v1421
        %v1423 = vpop.f32.mrb[0].mxu0
        %v1424 = vadd.f32 %v833, %v1423
        %v1425 = vpop.f32.mrb[0].mxu0
        %v1426 = vadd.f32 %v837, %v1425
        %1427 = vmatprep.mubr.bf16.mxu0 %v733
        %1428 = vmatmul.mubr.bf16.gmra.mrb[0].mxu0 %v732
        %v1429 = vpop.f32.mrb[0].mxu0
        %v1430 = vadd.f32 %v833, %v1429
        %v1431 = vpop.f32.mrb[0].mxu0
        %v1432 = vadd.f32 %v837, %v1431
        %v1433 = vpop.f32.mrb[0].mxu0
        %v1434 = vadd.f32 %v833, %v1433
        %v1435 = vpop.f32.mrb[0].mxu0
        %v1436 = vadd.f32 %v837, %v1435
        %1437 = vmatprep.mubr.bf16.mxu0 %v735
        %1438 = vmatmul.mubr.bf16.gmra.mrb[0].mxu0 %v734
        %v1439 = vpop.f32.mrb[0].mxu0
        %v1440 = vadd.f32 %v833, %v1439
        %v1441 = vpop.f32.mrb[0].mxu0
        %v1442 = vadd.f32 %v837, %v1441
        %v1443 = vpop.f32.mrb[0].mxu0
        %v1444 = vadd.f32 %v833, %v1443
        %v1445 = vpop.f32.mrb[0].mxu0
        %v1446 = vadd.f32 %v837, %v1445
        %1447 = vmatprep.mubr.bf16.mxu0 %v737
        %1448 = vmatmul.mubr.bf16.gmra.mrb[0].mxu0 %v736
        %v1449 = vpop.f32.mrb[0].mxu0
        %v1450 = vadd.f32 %v833, %v1449
        %v1451 = vpop.f32.mrb[0].mxu0
        %v1452 = vadd.f32 %v837, %v1451
        %v1453 = vpop.f32.mrb[0].mxu0
        %v1454 = vadd.f32 %v833, %v1453
        %v1455 = vpop.f32.mrb[0].mxu0
        %v1456 = vadd.f32 %v837, %v1455
        %1457 = vmatprep.mubr.bf16.mxu0 %v739
        %1458 = vmatmul.mubr.bf16.gmra.mrb[0].mxu0 %v738
        %v1459 = vpop.f32.mrb[0].mxu0
        %v1460 = vadd.f32 %v833, %v1459
        %v1461 = vpop.f32.mrb[0].mxu0
        %v1462 = vadd.f32 %v837, %v1461
        %v1463 = vpop.f32.mrb[0].mxu0
        %v1464 = vadd.f32 %v833, %v1463
        %v1465 = vpop.f32.mrb[0].mxu0
        %v1466 = vadd.f32 %v837, %v1465
        %1467 = vmatprep.mubr.bf16.mxu0 %v741
        %1468 = vmatmul.mubr.bf16.gmra.mrb[0].mxu0 %v740
        %v1469 = vpop.f32.mrb[0].mxu0
        %v1470 = vadd.f32 %v833, %v1469
        %v1471 = vpop.f32.mrb[0].mxu0
        %v1472 = vadd.f32 %v837, %v1471
        %v1473 = vpop.f32.mrb[0].mxu0
        %v1474 = vadd.f32 %v833, %v1473
        %v1475 = vpop.f32.mrb[0].mxu0
        %v1476 = vadd.f32 %v837, %v1475
        %1477 = vmatprep.mubr.bf16.mxu0 %v743
        %1478 = vmatmul.mubr.bf16.gmra.mrb[0].mxu0 %v742
        %v1479 = vpop.f32.mrb[0].mxu0
        %v1480 = vadd.f32 %v833, %v1479
        %v1481 = vpop.f32.mrb[0].mxu0
        %v1482 = vadd.f32 %v837, %v1481
        %v1483 = vpop.f32.mrb[0].mxu0
        %v1484 = vadd.f32 %v833, %v1483
        %v1485 = vpop.f32.mrb[0].mxu0
        %v1486 = vadd.f32 %v837, %v1485
        %1487 = vmatprep.mubr.bf16.mxu0 %v745
        %1488 = vmatmul.mubr.bf16.gmra.mrb[0].mxu0 %v744
        %v1489 = vpop.f32.mrb[0].mxu0
        %v1490 = vadd.f32 %v833, %v1489
        %v1491 = vpop.f32.mrb[0].mxu0
        %v1492 = vadd.f32 %v837, %v1491
        %v1493 = vpop.f32.mrb[0].mxu0
        %v1494 = vadd.f32 %v833, %v1493
        %v1495 = vpop.f32.mrb[0].mxu0
        %v1496 = vadd.f32 %v837, %v1495
        %1497 = vmatprep.mubr.bf16.mxu0 %v747
        %1498 = vmatmul.mubr.bf16.gmra.mrb[0].mxu0 %v746
        %v1499 = vpop.f32.mrb[0].mxu0
        %v1500 = vadd.f32 %v833, %v1499
        %v1501 = vpop.f32.mrb[0].mxu0
        %v1502 = vadd.f32 %v837, %v1501
        %v1503 = vpop.f32.mrb[0].mxu0
        %v1504 = vadd.f32 %v833, %v1503
        %v1505 = vpop.f32.mrb[0].mxu0
        %v1506 = vadd.f32 %v837, %v1505
        %1507 = vmatprep.mubr.bf16.mxu0 %v749
        %1508 = vmatmul.mubr.bf16.gmra.mrb[0].mxu0 %v748
        %v1509 = vpop.f32.mrb[0].mxu0
        %v1510 = vadd.f32 %v833, %v1509
        %v1511 = vpop.f32.mrb[0].mxu0
        %v1512 = vadd.f32 %v837, %v1511
        %v1513 = vpop.f32.mrb[0].mxu0
        %v1514 = vadd.f32 %v833, %v1513
        %v1515 = vpop.f32.mrb[0].mxu0
        %v1516 = vadd.f32 %v837, %v1515
        %1517 = vmatprep.mubr.bf16.mxu0 %v751
        %1518 = vmatmul.mubr.bf16.gmra.mrb[0].mxu0 %v750
        %v1519 = vpop.f32.mrb[0].mxu0
        %v1520 = vadd.f32 %v833, %v1519
        %v1521 = vpop.f32.mrb[0].mxu0
        %v1522 = vadd.f32 %v837, %v1521
        %v1523 = vpop.f32.mrb[0].mxu0
        %v1524 = vadd.f32 %v833, %v1523
        %v1525 = vpop.f32.mrb[0].mxu0
        %v1526 = vadd.f32 %v837, %v1525
        %1527 = vmatprep.mubr.bf16.mxu0 %v753
        %1528 = vmatmul.mubr.bf16.gmra.mrb[0].mxu0 %v752
        %v1529 = vpop.f32.mrb[0].mxu0
        %v1530 = vadd.f32 %v833, %v1529
        %v1531 = vpop.f32.mrb[0].mxu0
        %v1532 = vadd.f32 %v837, %v1531
        %v1533 = vpop.f32.mrb[0].mxu0
        %v1534 = vadd.f32 %v833, %v1533
        %v1535 = vpop.f32.mrb[0].mxu0
        %v1536 = vadd.f32 %v837, %v1535
        %1537 = vmatprep.mubr.bf16.mxu0 %v755
        %1538 = vmatmul.mubr.bf16.gmra.mrb[0].mxu0 %v754
        %v1539 = vpop.f32.mrb[0].mxu0
        %v1540 = vadd.f32 %v833, %v1539
        %v1541 = vpop.f32.mrb[0].mxu0
        %v1542 = vadd.f32 %v837, %v1541
        %v1543 = vpop.f32.mrb[0].mxu0
        %v1544 = vadd.f32 %v833, %v1543
        %v1545 = vpop.f32.mrb[0].mxu0
        %v1546 = vadd.f32 %v837, %v1545
        %1547 = vdwg.mxu0
        %v1548 = vpack.c.bf16 %v1201, %v1197
        %v1549 = vpack.c.bf16 %v1203, %v1199
        %v1550 = vpack.c.bf16 %v1394, %v1390
        %v1551 = vpack.c.bf16 %v1396, %v1392
        %v1552 = vpack.c.bf16 %v1211, %v1207
        %v1553 = vpack.c.bf16 %v1213, %v1209
        %v1554 = vpack.c.bf16 %v1404, %v1400
        %v1555 = vpack.c.bf16 %v1406, %v1402
        %v1556 = vpack.c.bf16 %v1221, %v1217
        %v1557 = vpack.c.bf16 %v1223, %v1219
        %v1558 = vpack.c.bf16 %v1414, %v1410
        %v1559 = vpack.c.bf16 %v1416, %v1412
        %v1560 = vpack.c.bf16 %v1231, %v1227
        %v1561 = vpack.c.bf16 %v1233, %v1229
        %v1562 = vpack.c.bf16 %v1424, %v1420
        %v1563 = vpack.c.bf16 %v1426, %v1422
        %v1564 = vpack.c.bf16 %v1241, %v1237
        %v1565 = vpack.c.bf16 %v1243, %v1239
        %v1566 = vpack.c.bf16 %v1434, %v1430
        %v1567 = vpack.c.bf16 %v1436, %v1432
        %v1568 = vpack.c.bf16 %v1251, %v1247
        %v1569 = vpack.c.bf16 %v1253, %v1249
        %v1570 = vpack.c.bf16 %v1444, %v1440
        %v1571 = vpack.c.bf16 %v1446, %v1442
        %v1572 = vpack.c.bf16 %v1261, %v1257
        %v1573 = vpack.c.bf16 %v1263, %v1259
        %v1574 = vpack.c.bf16 %v1454, %v1450
        %v1575 = vpack.c.bf16 %v1456, %v1452
        %v1576 = vpack.c.bf16 %v1271, %v1267
        %v1577 = vpack.c.bf16 %v1273, %v1269
        %v1578 = vpack.c.bf16 %v1464, %v1460
        %v1579 = vpack.c.bf16 %v1466, %v1462
        %v1580 = vpack.c.bf16 %v1281, %v1277
        %v1581 = vpack.c.bf16 %v1283, %v1279
        %v1582 = vpack.c.bf16 %v1474, %v1470
        %v1583 = vpack.c.bf16 %v1476, %v1472
        %v1584 = vpack.c.bf16 %v1291, %v1287
        %v1585 = vpack.c.bf16 %v1293, %v1289
        %v1586 = vpack.c.bf16 %v1484, %v1480
        %v1587 = vpack.c.bf16 %v1486, %v1482
        %v1588 = vpack.c.bf16 %v1301, %v1297
        %v1589 = vpack.c.bf16 %v1303, %v1299
        %v1590 = vpack.c.bf16 %v1494, %v1490
        %v1591 = vpack.c.bf16 %v1496, %v1492
        %v1592 = vpack.c.bf16 %v1311, %v1307
        %v1593 = vpack.c.bf16 %v1313, %v1309
        %v1594 = vpack.c.bf16 %v1504, %v1500
        %v1595 = vpack.c.bf16 %v1506, %v1502
        %v1596 = vpack.c.bf16 %v1321, %v1317
        %v1597 = vpack.c.bf16 %v1323, %v1319
        %v1598 = vpack.c.bf16 %v1514, %v1510
        %v1599 = vpack.c.bf16 %v1516, %v1512
        %v1600 = vpack.c.bf16 %v1331, %v1327
        %v1601 = vpack.c.bf16 %v1333, %v1329
        %v1602 = vpack.c.bf16 %v1524, %v1520
        %v1603 = vpack.c.bf16 %v1526, %v1522
        %v1604 = vpack.c.bf16 %v1341, %v1337
        %v1605 = vpack.c.bf16 %v1343, %v1339
        %v1606 = vpack.c.bf16 %v1534, %v1530
        %v1607 = vpack.c.bf16 %v1536, %v1532
        %v1608 = vpack.c.bf16 %v1351, %v1347
        %v1609 = vpack.c.bf16 %v1353, %v1349
        %v1610 = vpack.c.bf16 %v1544, %v1540
        %v1611 = vpack.c.bf16 %v1546, %v1542
        %v1612 = vmax.bf16 %v1548, 0
        %v1613 = vmax.bf16 %v1549, 0
        %v1614 = vmax.bf16 %v1550, 0
        %v1615 = vmax.bf16 %v1551, 0
        %v1616 = vmax.bf16 %v1552, 0
        %v1617 = vmax.bf16 %v1553, 0
        %v1618 = vmax.bf16 %v1554, 0
        %v1619 = vmax.bf16 %v1555, 0
        %v1620 = vmax.bf16 %v1556, 0
        %v1621 = vmax.bf16 %v1557, 0
        %v1622 = vmax.bf16 %v1558, 0
        %v1623 = vmax.bf16 %v1559, 0
        %v1624 = vmax.bf16 %v1560, 0
        %v1625 = vmax.bf16 %v1561, 0
        %v1626 = vmax.bf16 %v1562, 0
        %v1627 = vmax.bf16 %v1563, 0
        %v1628 = vmax.bf16 %v1564, 0
        %v1629 = vmax.bf16 %v1565, 0
        %v1630 = vmax.bf16 %v1566, 0
        %v1631 = vmax.bf16 %v1567, 0
        %v1632 = vmax.bf16 %v1568, 0
        %v1633 = vmax.bf16 %v1569, 0
        %v1634 = vmax.bf16 %v1570, 0
        %v1635 = vmax.bf16 %v1571, 0
        %v1636 = vmax.bf16 %v1572, 0
        %v1637 = vmax.bf16 %v1573, 0
        %v1638 = vmax.bf16 %v1574, 0
        %v1639 = vmax.bf16 %v1575, 0
        %v1640 = vmax.bf16 %v1576, 0
        %v1641 = vmax.bf16 %v1577, 0
        %v1642 = vmax.bf16 %v1578, 0
        %v1643 = vmax.bf16 %v1579, 0
        %v1644 = vmax.bf16 %v1580, 0
        %v1645 = vmax.bf16 %v1581, 0
        %v1646 = vmax.bf16 %v1582, 0
        %v1647 = vmax.bf16 %v1583, 0
        %v1648 = vmax.bf16 %v1584, 0
        %v1649 = vmax.bf16 %v1585, 0
        %v1650 = vmax.bf16 %v1586, 0
        %v1651 = vmax.bf16 %v1587, 0
        %v1652 = vmax.bf16 %v1588, 0
        %v1653 = vmax.bf16 %v1589, 0
        %v1654 = vmax.bf16 %v1590, 0
        %v1655 = vmax.bf16 %v1591, 0
        %v1656 = vmax.bf16 %v1592, 0
        %v1657 = vmax.bf16 %v1593, 0
        %v1658 = vmax.bf16 %v1594, 0
        %v1659 = vmax.bf16 %v1595, 0
        %v1660 = vmax.bf16 %v1596, 0
        %v1661 = vmax.bf16 %v1597, 0
        %v1662 = vmax.bf16 %v1598, 0
        %v1663 = vmax.bf16 %v1599, 0
        %v1664 = vmax.bf16 %v1600, 0
        %v1665 = vmax.bf16 %v1601, 0
        %v1666 = vmax.bf16 %v1602, 0
        %v1667 = vmax.bf16 %v1603, 0
        %v1668 = vmax.bf16 %v1604, 0
        %v1669 = vmax.bf16 %v1605, 0
        %v1670 = vmax.bf16 %v1606, 0
        %v1671 = vmax.bf16 %v1607, 0
        %v1672 = vmax.bf16 %v1608, 0
        %v1673 = vmax.bf16 %v1609, 0
        %v1674 = vmax.bf16 %v1610, 0
        %v1675 = vmax.bf16 %v1611, 0
        %v1676 = vld [vmem:[#allocation7] sm:$0xff]
        %v1677 = vld [vmem:[#allocation7 + $0x8] sm:$0xff]
        %v1678 = vld [vmem:[#allocation7 + $0x10] sm:$0xff]
        %v1679 = vld [vmem:[#allocation7 + $0x18] sm:$0xff]
        %v1680 = vld [vmem:[#allocation7 + $0x20] sm:$0xff]
        %v1681 = vld [vmem:[#allocation7 + $0x28] sm:$0xff]
        %v1682 = vld [vmem:[#allocation7 + $0x30] sm:$0xff]
        %v1683 = vld [vmem:[#allocation7 + $0x38] sm:$0xff]
        %v1684 = vld [vmem:[#allocation7 + $0x40] sm:$0xff]
        %v1685 = vld [vmem:[#allocation7 + $0x48] sm:$0xff]
        %v1686 = vld [vmem:[#allocation7 + $0x50] sm:$0xff]
        %v1687 = vld [vmem:[#allocation7 + $0x58] sm:$0xff]
        %v1688 = vld [vmem:[#allocation7 + $0x60] sm:$0xff]
        %v1689 = vld [vmem:[#allocation7 + $0x68] sm:$0xff]
        %v1690 = vld [vmem:[#allocation7 + $0x70] sm:$0xff]
        %v1691 = vld [vmem:[#allocation7 + $0x78] sm:$0xff]
        %v1692 = vld [vmem:[#allocation7 + $0x80] sm:$0xff]
        %v1693 = vld [vmem:[#allocation7 + $0x88] sm:$0xff]
        %v1694 = vld [vmem:[#allocation7 + $0x90] sm:$0xff]
        %v1695 = vld [vmem:[#allocation7 + $0x98] sm:$0xff]
        %v1696 = vld [vmem:[#allocation7 + $0xa0] sm:$0xff]
        %v1697 = vld [vmem:[#allocation7 + $0xa8] sm:$0xff]
        %v1698 = vld [vmem:[#allocation7 + $0xb0] sm:$0xff]
        %v1699 = vld [vmem:[#allocation7 + $0xb8] sm:$0xff]
        %v1700 = vld [vmem:[#allocation7 + $0xc0] sm:$0xff]
        %v1701 = vld [vmem:[#allocation7 + $0xc8] sm:$0xff]
        %v1702 = vld [vmem:[#allocation7 + $0xd0] sm:$0xff]
        %v1703 = vld [vmem:[#allocation7 + $0xd8] sm:$0xff]
        %v1704 = vld [vmem:[#allocation7 + $0xe0] sm:$0xff]
        %v1705 = vld [vmem:[#allocation7 + $0xe8] sm:$0xff]
        %v1706 = vld [vmem:[#allocation7 + $0xf0] sm:$0xff]
        %v1707 = vld [vmem:[#allocation7 + $0xf8] sm:$0xff]
        %v1708 = vld [vmem:[#allocation7 + $0x100] sm:$0xff]
        %v1709 = vld [vmem:[#allocation7 + $0x108] sm:$0xff]
        %v1710 = vld [vmem:[#allocation7 + $0x110] sm:$0xff]
        %v1711 = vld [vmem:[#allocation7 + $0x118] sm:$0xff]
        %v1712 = vld [vmem:[#allocation7 + $0x120] sm:$0xff]
        %v1713 = vld [vmem:[#allocation7 + $0x128] sm:$0xff]
        %v1714 = vld [vmem:[#allocation7 + $0x130] sm:$0xff]
        %v1715 = vld [vmem:[#allocation7 + $0x138] sm:$0xff]
        %v1716 = vld [vmem:[#allocation7 + $0x140] sm:$0xff]
        %v1717 = vld [vmem:[#allocation7 + $0x148] sm:$0xff]
        %v1718 = vld [vmem:[#allocation7 + $0x150] sm:$0xff]
        %v1719 = vld [vmem:[#allocation7 + $0x158] sm:$0xff]
        %v1720 = vld [vmem:[#allocation7 + $0x160] sm:$0xff]
        %v1721 = vld [vmem:[#allocation7 + $0x168] sm:$0xff]
        %v1722 = vld [vmem:[#allocation7 + $0x170] sm:$0xff]
        %v1723 = vld [vmem:[#allocation7 + $0x178] sm:$0xff]
        %v1724 = vld [vmem:[#allocation7 + $0x180] sm:$0xff]
        %v1725 = vld [vmem:[#allocation7 + $0x188] sm:$0xff]
        %v1726 = vld [vmem:[#allocation7 + $0x190] sm:$0xff]
        %v1727 = vld [vmem:[#allocation7 + $0x198] sm:$0xff]
        %v1728 = vld [vmem:[#allocation7 + $0x1a0] sm:$0xff]
        %v1729 = vld [vmem:[#allocation7 + $0x1a8] sm:$0xff]
        %v1730 = vld [vmem:[#allocation7 + $0x1b0] sm:$0xff]
        %v1731 = vld [vmem:[#allocation7 + $0x1b8] sm:$0xff]
        %v1732 = vld [vmem:[#allocation7 + $0x1c0] sm:$0xff]
        %v1733 = vld [vmem:[#allocation7 + $0x1c8] sm:$0xff]
        %v1734 = vld [vmem:[#allocation7 + $0x1d0] sm:$0xff]
        %v1735 = vld [vmem:[#allocation7 + $0x1d8] sm:$0xff]
        %v1736 = vld [vmem:[#allocation7 + $0x1e0] sm:$0xff]
        %v1737 = vld [vmem:[#allocation7 + $0x1e8] sm:$0xff]
        %v1738 = vld [vmem:[#allocation7 + $0x1f0] sm:$0xff]
        %v1739 = vld [vmem:[#allocation7 + $0x1f8] sm:$0xff]
        %v1740 = vld [vmem:[%s4] sm:$0x3]
        %v1742 = vlaneseq
        %v1743 = vshrl.u32 %v1742, 7
        %v1744 = vsub.s32 0, %v1743
        %v1745 = vrot.slane %v1740, %v1744
        %v1746 = vlaneseq
        %v1747 = vshrl.u32 %v1746, 7
        %v1748 = vsub.s32 1, %v1747
        %v1749 = vrot.slane %v1740, %v1748
        %v1816 = vunpack.c.l.b16 %v1676
        %v1817 = vunpack.c.h.b16 %v1676
        %v1818 = vunpack.c.l.b16 %v1677
        %v1819 = vunpack.c.h.b16 %v1677
        %v1820 = vunpack.c.l.b16 %v1678
        %v1821 = vunpack.c.h.b16 %v1678
        %v1822 = vunpack.c.l.b16 %v1679
        %v1823 = vunpack.c.h.b16 %v1679
        %v1824 = vunpack.c.l.b16 %v1680
        %v1825 = vunpack.c.h.b16 %v1680
        %v1826 = vunpack.c.l.b16 %v1681
        %v1827 = vunpack.c.h.b16 %v1681
        %v1828 = vunpack.c.l.b16 %v1682
        %v1829 = vunpack.c.h.b16 %v1682
        %v1830 = vunpack.c.l.b16 %v1683
        %v1831 = vunpack.c.h.b16 %v1683
        %v1832 = vunpack.c.l.b16 %v1684
        %v1833 = vunpack.c.h.b16 %v1684
        %v1834 = vunpack.c.l.b16 %v1685
        %v1835 = vunpack.c.h.b16 %v1685
        %v1836 = vunpack.c.l.b16 %v1686
        %v1837 = vunpack.c.h.b16 %v1686
        %v1838 = vunpack.c.l.b16 %v1687
        %v1839 = vunpack.c.h.b16 %v1687
        %v1840 = vunpack.c.l.b16 %v1688
        %v1841 = vunpack.c.h.b16 %v1688
        %v1842 = vunpack.c.l.b16 %v1689
        %v1843 = vunpack.c.h.b16 %v1689
        %v1844 = vunpack.c.l.b16 %v1690
        %v1845 = vunpack.c.h.b16 %v1690
        %v1846 = vunpack.c.l.b16 %v1691
        %v1847 = vunpack.c.h.b16 %v1691
        %v1848 = vunpack.c.l.b16 %v1692
        %v1849 = vunpack.c.h.b16 %v1692
        %v1850 = vunpack.c.l.b16 %v1693
        %v1851 = vunpack.c.h.b16 %v1693
        %v1852 = vunpack.c.l.b16 %v1694
        %v1853 = vunpack.c.h.b16 %v1694
        %v1854 = vunpack.c.l.b16 %v1695
        %v1855 = vunpack.c.h.b16 %v1695
        %v1856 = vunpack.c.l.b16 %v1696
        %v1857 = vunpack.c.h.b16 %v1696
        %v1858 = vunpack.c.l.b16 %v1697
        %v1859 = vunpack.c.h.b16 %v1697
        %v1860 = vunpack.c.l.b16 %v1698
        %v1861 = vunpack.c.h.b16 %v1698
        %v1862 = vunpack.c.l.b16 %v1699
        %v1863 = vunpack.c.h.b16 %v1699
        %v1864 = vunpack.c.l.b16 %v1700
        %v1865 = vunpack.c.h.b16 %v1700
        %v1866 = vunpack.c.l.b16 %v1701
        %v1867 = vunpack.c.h.b16 %v1701
        %v1868 = vunpack.c.l.b16 %v1702
        %v1869 = vunpack.c.h.b16 %v1702
        %v1870 = vunpack.c.l.b16 %v1703
        %v1871 = vunpack.c.h.b16 %v1703
        %v1872 = vunpack.c.l.b16 %v1704
        %v1873 = vunpack.c.h.b16 %v1704
        %v1874 = vunpack.c.l.b16 %v1705
        %v1875 = vunpack.c.h.b16 %v1705
        %v1876 = vunpack.c.l.b16 %v1706
        %v1877 = vunpack.c.h.b16 %v1706
        %v1878 = vunpack.c.l.b16 %v1707
        %v1879 = vunpack.c.h.b16 %v1707
        %v1880 = vunpack.c.l.b16 %v1708
        %v1881 = vunpack.c.h.b16 %v1708
        %v1882 = vunpack.c.l.b16 %v1709
        %v1883 = vunpack.c.h.b16 %v1709
        %v1884 = vunpack.c.l.b16 %v1710
        %v1885 = vunpack.c.h.b16 %v1710
        %v1886 = vunpack.c.l.b16 %v1711
        %v1887 = vunpack.c.h.b16 %v1711
        %v1888 = vunpack.c.l.b16 %v1712
        %v1889 = vunpack.c.h.b16 %v1712
        %v1890 = vunpack.c.l.b16 %v1713
        %v1891 = vunpack.c.h.b16 %v1713
        %v1892 = vunpack.c.l.b16 %v1714
        %v1893 = vunpack.c.h.b16 %v1714
        %v1894 = vunpack.c.l.b16 %v1715
        %v1895 = vunpack.c.h.b16 %v1715
        %v1896 = vunpack.c.l.b16 %v1716
        %v1897 = vunpack.c.h.b16 %v1716
        %v1898 = vunpack.c.l.b16 %v1717
        %v1899 = vunpack.c.h.b16 %v1717
        %v1900 = vunpack.c.l.b16 %v1718
        %v1901 = vunpack.c.h.b16 %v1718
        %v1902 = vunpack.c.l.b16 %v1719
        %v1903 = vunpack.c.h.b16 %v1719
        %v1904 = vunpack.c.l.b16 %v1720
        %v1905 = vunpack.c.h.b16 %v1720
        %v1906 = vunpack.c.l.b16 %v1721
        %v1907 = vunpack.c.h.b16 %v1721
        %v1908 = vunpack.c.l.b16 %v1722
        %v1909 = vunpack.c.h.b16 %v1722
        %v1910 = vunpack.c.l.b16 %v1723
        %v1911 = vunpack.c.h.b16 %v1723
        %v1912 = vunpack.c.l.b16 %v1724
        %v1913 = vunpack.c.h.b16 %v1724
        %v1914 = vunpack.c.l.b16 %v1725
        %v1915 = vunpack.c.h.b16 %v1725
        %v1916 = vunpack.c.l.b16 %v1726
        %v1917 = vunpack.c.h.b16 %v1726
        %v1918 = vunpack.c.l.b16 %v1727
        %v1919 = vunpack.c.h.b16 %v1727
        %v1920 = vunpack.c.l.b16 %v1728
        %v1921 = vunpack.c.h.b16 %v1728
        %v1922 = vunpack.c.l.b16 %v1729
        %v1923 = vunpack.c.h.b16 %v1729
        %v1924 = vunpack.c.l.b16 %v1730
        %v1925 = vunpack.c.h.b16 %v1730
        %v1926 = vunpack.c.l.b16 %v1731
        %v1927 = vunpack.c.h.b16 %v1731
        %v1928 = vunpack.c.l.b16 %v1732
        %v1929 = vunpack.c.h.b16 %v1732
        %v1930 = vunpack.c.l.b16 %v1733
        %v1931 = vunpack.c.h.b16 %v1733
        %v1932 = vunpack.c.l.b16 %v1734
        %v1933 = vunpack.c.h.b16 %v1734
        %v1934 = vunpack.c.l.b16 %v1735
        %v1935 = vunpack.c.h.b16 %v1735
        %v1936 = vunpack.c.l.b16 %v1736
        %v1937 = vunpack.c.h.b16 %v1736
        %v1938 = vunpack.c.l.b16 %v1737
        %v1939 = vunpack.c.h.b16 %v1737
        %v1940 = vunpack.c.l.b16 %v1738
        %v1941 = vunpack.c.h.b16 %v1738
        %v1942 = vunpack.c.l.b16 %v1739
        %v1943 = vunpack.c.h.b16 %v1739
        %v1944 = vpack.c.b16 %v1818, %v1816
        %v1945 = vpack.c.b16 %v1819, %v1817
        %v1946 = vpack.c.b16 %v1822, %v1820
        %v1947 = vpack.c.b16 %v1823, %v1821
        %v1948 = vpack.c.b16 %v1826, %v1824
        %v1949 = vpack.c.b16 %v1827, %v1825
        %v1950 = vpack.c.b16 %v1830, %v1828
        %v1951 = vpack.c.b16 %v1831, %v1829
        %v1952 = vpack.c.b16 %v1834, %v1832
        %v1953 = vpack.c.b16 %v1835, %v1833
        %v1954 = vpack.c.b16 %v1838, %v1836
        %v1955 = vpack.c.b16 %v1839, %v1837
        %v1956 = vpack.c.b16 %v1842, %v1840
        %v1957 = vpack.c.b16 %v1843, %v1841
        %v1958 = vpack.c.b16 %v1846, %v1844
        %v1959 = vpack.c.b16 %v1847, %v1845
        %v1960 = vpack.c.b16 %v1850, %v1848
        %v1961 = vpack.c.b16 %v1851, %v1849
        %v1962 = vpack.c.b16 %v1854, %v1852
        %v1963 = vpack.c.b16 %v1855, %v1853
        %v1964 = vpack.c.b16 %v1858, %v1856
        %v1965 = vpack.c.b16 %v1859, %v1857
        %v1966 = vpack.c.b16 %v1862, %v1860
        %v1967 = vpack.c.b16 %v1863, %v1861
        %v1968 = vpack.c.b16 %v1866, %v1864
        %v1969 = vpack.c.b16 %v1867, %v1865
        %v1970 = vpack.c.b16 %v1870, %v1868
        %v1971 = vpack.c.b16 %v1871, %v1869
        %v1972 = vpack.c.b16 %v1874, %v1872
        %v1973 = vpack.c.b16 %v1875, %v1873
        %v1974 = vpack.c.b16 %v1878, %v1876
        %v1975 = vpack.c.b16 %v1879, %v1877
        %v1976 = vpack.c.b16 %v1882, %v1880
        %v1977 = vpack.c.b16 %v1883, %v1881
        %v1978 = vpack.c.b16 %v1886, %v1884
        %v1979 = vpack.c.b16 %v1887, %v1885
        %v1980 = vpack.c.b16 %v1890, %v1888
        %v1981 = vpack.c.b16 %v1891, %v1889
        %v1982 = vpack.c.b16 %v1894, %v1892
        %v1983 = vpack.c.b16 %v1895, %v1893
        %v1984 = vpack.c.b16 %v1898, %v1896
        %v1985 = vpack.c.b16 %v1899, %v1897
        %v1986 = vpack.c.b16 %v1902, %v1900
        %v1987 = vpack.c.b16 %v1903, %v1901
        %v1988 = vpack.c.b16 %v1906, %v1904
        %v1989 = vpack.c.b16 %v1907, %v1905
        %v1990 = vpack.c.b16 %v1910, %v1908
        %v1991 = vpack.c.b16 %v1911, %v1909
        %v1992 = vpack.c.b16 %v1914, %v1912
        %v1993 = vpack.c.b16 %v1915, %v1913
        %v1994 = vpack.c.b16 %v1918, %v1916
        %v1995 = vpack.c.b16 %v1919, %v1917
        %v1996 = vpack.c.b16 %v1922, %v1920
        %v1997 = vpack.c.b16 %v1923, %v1921
        %v1998 = vpack.c.b16 %v1926, %v1924
        %v1999 = vpack.c.b16 %v1927, %v1925
        %v2000 = vpack.c.b16 %v1930, %v1928
        %v2001 = vpack.c.b16 %v1931, %v1929
        %v2002 = vpack.c.b16 %v1934, %v1932
        %v2003 = vpack.c.b16 %v1935, %v1933
        %v2004 = vpack.c.b16 %v1938, %v1936
        %v2005 = vpack.c.b16 %v1939, %v1937
        %v2006 = vpack.c.b16 %v1942, %v1940
        %v2007 = vpack.c.b16 %v1943, %v1941
        %2072 = vmatprep.subr.bf16.mxu0 %v1945
        %2073 = vmatpush1.bf16.msra.mxu0 %v1944
        %2074 = vmatprep.subr.bf16.mxu0 %v1947
        %2075 = vmatpush1.bf16.msra.mxu0 %v1946
        %2076 = vmatprep.subr.bf16.mxu0 %v1949
        %2077 = vmatpush1.bf16.msra.mxu0 %v1948
        %2078 = vmatprep.subr.bf16.mxu0 %v1951
        %2079 = vmatpush1.bf16.msra.mxu0 %v1950
        %2080 = vmatprep.subr.bf16.mxu0 %v1953
        %2081 = vmatpush1.bf16.msra.mxu0 %v1952
        %2082 = vmatprep.subr.bf16.mxu0 %v1955
        %2083 = vmatpush1.bf16.msra.mxu0 %v1954
        %2084 = vmatprep.subr.bf16.mxu0 %v1957
        %2085 = vmatpush1.bf16.msra.mxu0 %v1956
        %2086 = vmatprep.subr.bf16.mxu0 %v1959
        %2087 = vmatpush1.bf16.msra.mxu0 %v1958
        %2088 = vmatprep.subr.bf16.mxu0 %v1961
        %2089 = vmatpush1.bf16.msra.mxu0 %v1960
        %2090 = vmatprep.subr.bf16.mxu0 %v1963
        %2091 = vmatpush1.bf16.msra.mxu0 %v1962
        %2092 = vmatprep.subr.bf16.mxu0 %v1965
        %2093 = vmatpush1.bf16.msra.mxu0 %v1964
        %2094 = vmatprep.subr.bf16.mxu0 %v1967
        %2095 = vmatpush1.bf16.msra.mxu0 %v1966
        %2096 = vmatprep.subr.bf16.mxu0 %v1969
        %2097 = vmatpush1.bf16.msra.mxu0 %v1968
        %2098 = vmatprep.subr.bf16.mxu0 %v1971
        %2099 = vmatpush1.bf16.msra.mxu0 %v1970
        %2100 = vmatprep.subr.bf16.mxu0 %v1973
        %2101 = vmatpush1.bf16.msra.mxu0 %v1972
        %2102 = vmatprep.subr.bf16.mxu0 %v1975
        %2103 = vmatpush1.bf16.msra.mxu0 %v1974
        %2104 = vmatprep.mubr.bf16.mxu0 %v1613
        %2105 = vmatmul.mubr.bf16.gmra.mrb[0].mxu0 %v1612
        %v2106 = vpop.f32.mrb[0].mxu0
        %v2107 = vadd.f32 %v1745, %v2106
        %v2108 = vpop.f32.mrb[0].mxu0
        %v2109 = vadd.f32 %v1749, %v2108
        %v2110 = vpop.f32.mrb[0].mxu0
        %v2111 = vadd.f32 %v1745, %v2110
        %v2112 = vpop.f32.mrb[0].mxu0
        %v2113 = vadd.f32 %v1749, %v2112
        %2114 = vmatprep.mubr.bf16.mxu0 %v1617
        %2115 = vmatmul.mubr.bf16.gmra.mrb[0].mxu0 %v1616
        %v2116 = vpop.f32.mrb[0].mxu0
        %v2117 = vadd.f32 %v1745, %v2116
        %v2118 = vpop.f32.mrb[0].mxu0
        %v2119 = vadd.f32 %v1749, %v2118
        %v2120 = vpop.f32.mrb[0].mxu0
        %v2121 = vadd.f32 %v1745, %v2120
        %v2122 = vpop.f32.mrb[0].mxu0
        %v2123 = vadd.f32 %v1749, %v2122
        %2124 = vmatprep.mubr.bf16.mxu0 %v1621
        %2125 = vmatmul.mubr.bf16.gmra.mrb[0].mxu0 %v1620
        %v2126 = vpop.f32.mrb[0].mxu0
        %v2127 = vadd.f32 %v1745, %v2126
        %v2128 = vpop.f32.mrb[0].mxu0
        %v2129 = vadd.f32 %v1749, %v2128
        %v2130 = vpop.f32.mrb[0].mxu0
        %v2131 = vadd.f32 %v1745, %v2130
        %v2132 = vpop.f32.mrb[0].mxu0
        %v2133 = vadd.f32 %v1749, %v2132
        %2134 = vmatprep.mubr.bf16.mxu0 %v1625
        %2135 = vmatmul.mubr.bf16.gmra.mrb[0].mxu0 %v1624
        %v2136 = vpop.f32.mrb[0].mxu0
        %v2137 = vadd.f32 %v1745, %v2136
        %v2138 = vpop.f32.mrb[0].mxu0
        %v2139 = vadd.f32 %v1749, %v2138
        %v2140 = vpop.f32.mrb[0].mxu0
        %v2141 = vadd.f32 %v1745, %v2140
        %v2142 = vpop.f32.mrb[0].mxu0
        %v2143 = vadd.f32 %v1749, %v2142
        %2144 = vmatprep.mubr.bf16.mxu0 %v1629
        %2145 = vmatmul.mubr.bf16.gmra.mrb[0].mxu0 %v1628
        %v2146 = vpop.f32.mrb[0].mxu0
        %v2147 = vadd.f32 %v1745, %v2146
        %v2148 = vpop.f32.mrb[0].mxu0
        %v2149 = vadd.f32 %v1749, %v2148
        %v2150 = vpop.f32.mrb[0].mxu0
        %v2151 = vadd.f32 %v1745, %v2150
        %v2152 = vpop.f32.mrb[0].mxu0
        %v2153 = vadd.f32 %v1749, %v2152
        %2154 = vmatprep.mubr.bf16.mxu0 %v1633
        %2155 = vmatmul.mubr.bf16.gmra.mrb[0].mxu0 %v1632
        %v2156 = vpop.f32.mrb[0].mxu0
        %v2157 = vadd.f32 %v1745, %v2156
        %v2158 = vpop.f32.mrb[0].mxu0
        %v2159 = vadd.f32 %v1749, %v2158
        %v2160 = vpop.f32.mrb[0].mxu0
        %v2161 = vadd.f32 %v1745, %v2160
        %v2162 = vpop.f32.mrb[0].mxu0
        %v2163 = vadd.f32 %v1749, %v2162
        %2164 = vmatprep.mubr.bf16.mxu0 %v1637
        %2165 = vmatmul.mubr.bf16.gmra.mrb[0].mxu0 %v1636
        %v2166 = vpop.f32.mrb[0].mxu0
        %v2167 = vadd.f32 %v1745, %v2166
        %v2168 = vpop.f32.mrb[0].mxu0
        %v2169 = vadd.f32 %v1749, %v2168
        %v2170 = vpop.f32.mrb[0].mxu0
        %v2171 = vadd.f32 %v1745, %v2170
        %v2172 = vpop.f32.mrb[0].mxu0
        %v2173 = vadd.f32 %v1749, %v2172
        %2174 = vmatprep.mubr.bf16.mxu0 %v1641
        %2175 = vmatmul.mubr.bf16.gmra.mrb[0].mxu0 %v1640
        %v2176 = vpop.f32.mrb[0].mxu0
        %v2177 = vadd.f32 %v1745, %v2176
        %v2178 = vpop.f32.mrb[0].mxu0
        %v2179 = vadd.f32 %v1749, %v2178
        %v2180 = vpop.f32.mrb[0].mxu0
        %v2181 = vadd.f32 %v1745, %v2180
        %v2182 = vpop.f32.mrb[0].mxu0
        %v2183 = vadd.f32 %v1749, %v2182
        %2184 = vmatprep.mubr.bf16.mxu0 %v1645
        %2185 = vmatmul.mubr.bf16.gmra.mrb[0].mxu0 %v1644
        %v2186 = vpop.f32.mrb[0].mxu0
        %v2187 = vadd.f32 %v1745, %v2186
        %v2188 = vpop.f32.mrb[0].mxu0
        %v2189 = vadd.f32 %v1749, %v2188
        %v2190 = vpop.f32.mrb[0].mxu0
        %v2191 = vadd.f32 %v1745, %v2190
        %v2192 = vpop.f32.mrb[0].mxu0
        %v2193 = vadd.f32 %v1749, %v2192
        %2194 = vmatprep.mubr.bf16.mxu0 %v1649
        %2195 = vmatmul.mubr.bf16.gmra.mrb[0].mxu0 %v1648
        %v2196 = vpop.f32.mrb[0].mxu0
        %v2197 = vadd.f32 %v1745, %v2196
        %v2198 = vpop.f32.mrb[0].mxu0
        %v2199 = vadd.f32 %v1749, %v2198
        %v2200 = vpop.f32.mrb[0].mxu0
        %v2201 = vadd.f32 %v1745, %v2200
        %v2202 = vpop.f32.mrb[0].mxu0
        %v2203 = vadd.f32 %v1749, %v2202
        %2204 = vmatprep.mubr.bf16.mxu0 %v1653
        %2205 = vmatmul.mubr.bf16.gmra.mrb[0].mxu0 %v1652
        %v2206 = vpop.f32.mrb[0].mxu0
        %v2207 = vadd.f32 %v1745, %v2206
        %v2208 = vpop.f32.mrb[0].mxu0
        %v2209 = vadd.f32 %v1749, %v2208
        %v2210 = vpop.f32.mrb[0].mxu0
        %v2211 = vadd.f32 %v1745, %v2210
        %v2212 = vpop.f32.mrb[0].mxu0
        %v2213 = vadd.f32 %v1749, %v2212
        %2214 = vmatprep.mubr.bf16.mxu0 %v1657
        %2215 = vmatmul.mubr.bf16.gmra.mrb[0].mxu0 %v1656
        %v2216 = vpop.f32.mrb[0].mxu0
        %v2217 = vadd.f32 %v1745, %v2216
        %v2218 = vpop.f32.mrb[0].mxu0
        %v2219 = vadd.f32 %v1749, %v2218
        %v2220 = vpop.f32.mrb[0].mxu0
        %v2221 = vadd.f32 %v1745, %v2220
        %v2222 = vpop.f32.mrb[0].mxu0
        %v2223 = vadd.f32 %v1749, %v2222
        %2224 = vmatprep.mubr.bf16.mxu0 %v1661
        %2225 = vmatmul.mubr.bf16.gmra.mrb[0].mxu0 %v1660
        %v2226 = vpop.f32.mrb[0].mxu0
        %v2227 = vadd.f32 %v1745, %v2226
        %v2228 = vpop.f32.mrb[0].mxu0
        %v2229 = vadd.f32 %v1749, %v2228
        %v2230 = vpop.f32.mrb[0].mxu0
        %v2231 = vadd.f32 %v1745, %v2230
        %v2232 = vpop.f32.mrb[0].mxu0
        %v2233 = vadd.f32 %v1749, %v2232
        %2234 = vmatprep.mubr.bf16.mxu0 %v1665
        %2235 = vmatmul.mubr.bf16.gmra.mrb[0].mxu0 %v1664
        %v2236 = vpop.f32.mrb[0].mxu0
        %v2237 = vadd.f32 %v1745, %v2236
        %v2238 = vpop.f32.mrb[0].mxu0
        %v2239 = vadd.f32 %v1749, %v2238
        %v2240 = vpop.f32.mrb[0].mxu0
        %v2241 = vadd.f32 %v1745, %v2240
        %v2242 = vpop.f32.mrb[0].mxu0
        %v2243 = vadd.f32 %v1749, %v2242
        %2244 = vmatprep.mubr.bf16.mxu0 %v1669
        %2245 = vmatmul.mubr.bf16.gmra.mrb[0].mxu0 %v1668
        %v2246 = vpop.f32.mrb[0].mxu0
        %v2247 = vadd.f32 %v1745, %v2246
        %v2248 = vpop.f32.mrb[0].mxu0
        %v2249 = vadd.f32 %v1749, %v2248
        %v2250 = vpop.f32.mrb[0].mxu0
        %v2251 = vadd.f32 %v1745, %v2250
        %v2252 = vpop.f32.mrb[0].mxu0
        %v2253 = vadd.f32 %v1749, %v2252
        %2254 = vmatprep.mubr.bf16.mxu0 %v1673
        %2255 = vmatmul.mubr.bf16.gmra.mrb[0].mxu0 %v1672
        %v2256 = vpop.f32.mrb[0].mxu0
        %v2257 = vadd.f32 %v1745, %v2256
        %v2258 = vpop.f32.mrb[0].mxu0
        %v2259 = vadd.f32 %v1749, %v2258
        %v2260 = vpop.f32.mrb[0].mxu0
        %v2261 = vadd.f32 %v1745, %v2260
        %v2262 = vpop.f32.mrb[0].mxu0
        %v2263 = vadd.f32 %v1749, %v2262
        %2264 = vdwg.mxu0
        %2265 = vmatprep.subr.bf16.mxu0 %v1977
        %2266 = vmatpush1.bf16.msra.mxu0 %v1976
        %2267 = vmatprep.subr.bf16.mxu0 %v1979
        %2268 = vmatpush1.bf16.msra.mxu0 %v1978
        %2269 = vmatprep.subr.bf16.mxu0 %v1981
        %2270 = vmatpush1.bf16.msra.mxu0 %v1980
        %2271 = vmatprep.subr.bf16.mxu0 %v1983
        %2272 = vmatpush1.bf16.msra.mxu0 %v1982
        %2273 = vmatprep.subr.bf16.mxu0 %v1985
        %2274 = vmatpush1.bf16.msra.mxu0 %v1984
        %2275 = vmatprep.subr.bf16.mxu0 %v1987
        %2276 = vmatpush1.bf16.msra.mxu0 %v1986
        %2277 = vmatprep.subr.bf16.mxu0 %v1989
        %2278 = vmatpush1.bf16.msra.mxu0 %v1988
        %2279 = vmatprep.subr.bf16.mxu0 %v1991
        %2280 = vmatpush1.bf16.msra.mxu0 %v1990
        %2281 = vmatprep.subr.bf16.mxu0 %v1993
        %2282 = vmatpush1.bf16.msra.mxu0 %v1992
        %2283 = vmatprep.subr.bf16.mxu0 %v1995
        %2284 = vmatpush1.bf16.msra.mxu0 %v1994
        %2285 = vmatprep.subr.bf16.mxu0 %v1997
        %2286 = vmatpush1.bf16.msra.mxu0 %v1996
        %2287 = vmatprep.subr.bf16.mxu0 %v1999
        %2288 = vmatpush1.bf16.msra.mxu0 %v1998
        %2289 = vmatprep.subr.bf16.mxu0 %v2001
        %2290 = vmatpush1.bf16.msra.mxu0 %v2000
        %2291 = vmatprep.subr.bf16.mxu0 %v2003
        %2292 = vmatpush1.bf16.msra.mxu0 %v2002
        %2293 = vmatprep.subr.bf16.mxu0 %v2005
        %2294 = vmatpush1.bf16.msra.mxu0 %v2004
        %2295 = vmatprep.subr.bf16.mxu0 %v2007
        %2296 = vmatpush1.bf16.msra.mxu0 %v2006
        %2297 = vmatprep.mubr.bf16.mxu0 %v1615
        %2298 = vmatmul.mubr.bf16.gmra.mrb[0].mxu0 %v1614
        %v2299 = vpop.f32.mrb[0].mxu0
        %v2300 = vadd.f32 %v2107, %v2299
        %v2301 = vpop.f32.mrb[0].mxu0
        %v2302 = vadd.f32 %v2109, %v2301
        %v2303 = vpop.f32.mrb[0].mxu0
        %v2304 = vadd.f32 %v2111, %v2303
        %v2305 = vpop.f32.mrb[0].mxu0
        %v2306 = vadd.f32 %v2113, %v2305
        %2307 = vmatprep.mubr.bf16.mxu0 %v1619
        %2308 = vmatmul.mubr.bf16.gmra.mrb[0].mxu0 %v1618
        %v2309 = vpop.f32.mrb[0].mxu0
        %v2310 = vadd.f32 %v2117, %v2309
        %v2311 = vpop.f32.mrb[0].mxu0
        %v2312 = vadd.f32 %v2119, %v2311
        %v2313 = vpop.f32.mrb[0].mxu0
        %v2314 = vadd.f32 %v2121, %v2313
        %v2315 = vpop.f32.mrb[0].mxu0
        %v2316 = vadd.f32 %v2123, %v2315
        %2317 = vmatprep.mubr.bf16.mxu0 %v1623
        %2318 = vmatmul.mubr.bf16.gmra.mrb[0].mxu0 %v1622
        %v2319 = vpop.f32.mrb[0].mxu0
        %v2320 = vadd.f32 %v2127, %v2319
        %v2321 = vpop.f32.mrb[0].mxu0
        %v2322 = vadd.f32 %v2129, %v2321
        %v2323 = vpop.f32.mrb[0].mxu0
        %v2324 = vadd.f32 %v2131, %v2323
        %v2325 = vpop.f32.mrb[0].mxu0
        %v2326 = vadd.f32 %v2133, %v2325
        %2327 = vmatprep.mubr.bf16.mxu0 %v1627
        %2328 = vmatmul.mubr.bf16.gmra.mrb[0].mxu0 %v1626
        %v2329 = vpop.f32.mrb[0].mxu0
        %v2330 = vadd.f32 %v2137, %v2329
        %v2331 = vpop.f32.mrb[0].mxu0
        %v2332 = vadd.f32 %v2139, %v2331
        %v2333 = vpop.f32.mrb[0].mxu0
        %v2334 = vadd.f32 %v2141, %v2333
        %v2335 = vpop.f32.mrb[0].mxu0
        %v2336 = vadd.f32 %v2143, %v2335
        %2337 = vmatprep.mubr.bf16.mxu0 %v1631
        %2338 = vmatmul.mubr.bf16.gmra.mrb[0].mxu0 %v1630
        %v2339 = vpop.f32.mrb[0].mxu0
        %v2340 = vadd.f32 %v2147, %v2339
        %v2341 = vpop.f32.mrb[0].mxu0
        %v2342 = vadd.f32 %v2149, %v2341
        %v2343 = vpop.f32.mrb[0].mxu0
        %v2344 = vadd.f32 %v2151, %v2343
        %v2345 = vpop.f32.mrb[0].mxu0
        %v2346 = vadd.f32 %v2153, %v2345
        %2347 = vmatprep.mubr.bf16.mxu0 %v1635
        %2348 = vmatmul.mubr.bf16.gmra.mrb[0].mxu0 %v1634
        %v2349 = vpop.f32.mrb[0].mxu0
        %v2350 = vadd.f32 %v2157, %v2349
        %v2351 = vpop.f32.mrb[0].mxu0
        %v2352 = vadd.f32 %v2159, %v2351
        %v2353 = vpop.f32.mrb[0].mxu0
        %v2354 = vadd.f32 %v2161, %v2353
        %v2355 = vpop.f32.mrb[0].mxu0
        %v2356 = vadd.f32 %v2163, %v2355
        %2357 = vmatprep.mubr.bf16.mxu0 %v1639
        %2358 = vmatmul.mubr.bf16.gmra.mrb[0].mxu0 %v1638
        %v2359 = vpop.f32.mrb[0].mxu0
        %v2360 = vadd.f32 %v2167, %v2359
        %v2361 = vpop.f32.mrb[0].mxu0
        %v2362 = vadd.f32 %v2169, %v2361
        %v2363 = vpop.f32.mrb[0].mxu0
        %v2364 = vadd.f32 %v2171, %v2363
        %v2365 = vpop.f32.mrb[0].mxu0
        %v2366 = vadd.f32 %v2173, %v2365
        %2367 = vmatprep.mubr.bf16.mxu0 %v1643
        %2368 = vmatmul.mubr.bf16.gmra.mrb[0].mxu0 %v1642
        %v2369 = vpop.f32.mrb[0].mxu0
        %v2370 = vadd.f32 %v2177, %v2369
        %v2371 = vpop.f32.mrb[0].mxu0
        %v2372 = vadd.f32 %v2179, %v2371
        %v2373 = vpop.f32.mrb[0].mxu0
        %v2374 = vadd.f32 %v2181, %v2373
        %v2375 = vpop.f32.mrb[0].mxu0
        %v2376 = vadd.f32 %v2183, %v2375
        %2377 = vmatprep.mubr.bf16.mxu0 %v1647
        %2378 = vmatmul.mubr.bf16.gmra.mrb[0].mxu0 %v1646
        %v2379 = vpop.f32.mrb[0].mxu0
        %v2380 = vadd.f32 %v2187, %v2379
        %v2381 = vpop.f32.mrb[0].mxu0
        %v2382 = vadd.f32 %v2189, %v2381
        %v2383 = vpop.f32.mrb[0].mxu0
        %v2384 = vadd.f32 %v2191, %v2383
        %v2385 = vpop.f32.mrb[0].mxu0
        %v2386 = vadd.f32 %v2193, %v2385
        %2387 = vmatprep.mubr.bf16.mxu0 %v1651
        %2388 = vmatmul.mubr.bf16.gmra.mrb[0].mxu0 %v1650
        %v2389 = vpop.f32.mrb[0].mxu0
        %v2390 = vadd.f32 %v2197, %v2389
        %v2391 = vpop.f32.mrb[0].mxu0
        %v2392 = vadd.f32 %v2199, %v2391
        %v2393 = vpop.f32.mrb[0].mxu0
        %v2394 = vadd.f32 %v2201, %v2393
        %v2395 = vpop.f32.mrb[0].mxu0
        %v2396 = vadd.f32 %v2203, %v2395
        %2397 = vmatprep.mubr.bf16.mxu0 %v1655
        %2398 = vmatmul.mubr.bf16.gmra.mrb[0].mxu0 %v1654
        %v2399 = vpop.f32.mrb[0].mxu0
        %v2400 = vadd.f32 %v2207, %v2399
        %v2401 = vpop.f32.mrb[0].mxu0
        %v2402 = vadd.f32 %v2209, %v2401
        %v2403 = vpop.f32.mrb[0].mxu0
        %v2404 = vadd.f32 %v2211, %v2403
        %v2405 = vpop.f32.mrb[0].mxu0
        %v2406 = vadd.f32 %v2213, %v2405
        %2407 = vmatprep.mubr.bf16.mxu0 %v1659
        %2408 = vmatmul.mubr.bf16.gmra.mrb[0].mxu0 %v1658
        %v2409 = vpop.f32.mrb[0].mxu0
        %v2410 = vadd.f32 %v2217, %v2409
        %v2411 = vpop.f32.mrb[0].mxu0
        %v2412 = vadd.f32 %v2219, %v2411
        %v2413 = vpop.f32.mrb[0].mxu0
        %v2414 = vadd.f32 %v2221, %v2413
        %v2415 = vpop.f32.mrb[0].mxu0
        %v2416 = vadd.f32 %v2223, %v2415
        %2417 = vmatprep.mubr.bf16.mxu0 %v1663
        %2418 = vmatmul.mubr.bf16.gmra.mrb[0].mxu0 %v1662
        %v2419 = vpop.f32.mrb[0].mxu0
        %v2420 = vadd.f32 %v2227, %v2419
        %v2421 = vpop.f32.mrb[0].mxu0
        %v2422 = vadd.f32 %v2229, %v2421
        %v2423 = vpop.f32.mrb[0].mxu0
        %v2424 = vadd.f32 %v2231, %v2423
        %v2425 = vpop.f32.mrb[0].mxu0
        %v2426 = vadd.f32 %v2233, %v2425
        %2427 = vmatprep.mubr.bf16.mxu0 %v1667
        %2428 = vmatmul.mubr.bf16.gmra.mrb[0].mxu0 %v1666
        %v2429 = vpop.f32.mrb[0].mxu0
        %v2430 = vadd.f32 %v2237, %v2429
        %v2431 = vpop.f32.mrb[0].mxu0
        %v2432 = vadd.f32 %v2239, %v2431
        %v2433 = vpop.f32.mrb[0].mxu0
        %v2434 = vadd.f32 %v2241, %v2433
        %v2435 = vpop.f32.mrb[0].mxu0
        %v2436 = vadd.f32 %v2243, %v2435
        %2437 = vmatprep.mubr.bf16.mxu0 %v1671
        %2438 = vmatmul.mubr.bf16.gmra.mrb[0].mxu0 %v1670
        %v2439 = vpop.f32.mrb[0].mxu0
        %v2440 = vadd.f32 %v2247, %v2439
        %v2441 = vpop.f32.mrb[0].mxu0
        %v2442 = vadd.f32 %v2249, %v2441
        %v2443 = vpop.f32.mrb[0].mxu0
        %v2444 = vadd.f32 %v2251, %v2443
        %v2445 = vpop.f32.mrb[0].mxu0
        %v2446 = vadd.f32 %v2253, %v2445
        %2447 = vmatprep.mubr.bf16.mxu0 %v1675
        %2448 = vmatmul.mubr.bf16.gmra.mrb[0].mxu0 %v1674
        %v2449 = vpop.f32.mrb[0].mxu0
        %v2450 = vadd.f32 %v2257, %v2449
        %v2451 = vpop.f32.mrb[0].mxu0
        %v2452 = vadd.f32 %v2259, %v2451
        %v2453 = vpop.f32.mrb[0].mxu0
        %v2454 = vadd.f32 %v2261, %v2453
        %v2455 = vpop.f32.mrb[0].mxu0
        %v2456 = vadd.f32 %v2263, %v2455
        %2457 = vdwg.mxu0
        %v2458 = vpack.c.bf16 %v2304, %v2300
        %v2459 = vpack.c.bf16 %v2306, %v2302
        %v2460 = vpack.c.bf16 %v2314, %v2310
        %v2461 = vpack.c.bf16 %v2316, %v2312
        %v2462 = vpack.c.bf16 %v2324, %v2320
        %v2463 = vpack.c.bf16 %v2326, %v2322
        %v2464 = vpack.c.bf16 %v2334, %v2330
        %v2465 = vpack.c.bf16 %v2336, %v2332
        %v2466 = vpack.c.bf16 %v2344, %v2340
        %v2467 = vpack.c.bf16 %v2346, %v2342
        %v2468 = vpack.c.bf16 %v2354, %v2350
        %v2469 = vpack.c.bf16 %v2356, %v2352
        %v2470 = vpack.c.bf16 %v2364, %v2360
        %v2471 = vpack.c.bf16 %v2366, %v2362
        %v2472 = vpack.c.bf16 %v2374, %v2370
        %v2473 = vpack.c.bf16 %v2376, %v2372
        %v2474 = vpack.c.bf16 %v2384, %v2380
        %v2475 = vpack.c.bf16 %v2386, %v2382
        %v2476 = vpack.c.bf16 %v2394, %v2390
        %v2477 = vpack.c.bf16 %v2396, %v2392
        %v2478 = vpack.c.bf16 %v2404, %v2400
        %v2479 = vpack.c.bf16 %v2406, %v2402
        %v2480 = vpack.c.bf16 %v2414, %v2410
        %v2481 = vpack.c.bf16 %v2416, %v2412
        %v2482 = vpack.c.bf16 %v2424, %v2420
        %v2483 = vpack.c.bf16 %v2426, %v2422
        %v2484 = vpack.c.bf16 %v2434, %v2430
        %v2485 = vpack.c.bf16 %v2436, %v2432
        %v2486 = vpack.c.bf16 %v2444, %v2440
        %v2487 = vpack.c.bf16 %v2446, %v2442
        %v2488 = vpack.c.bf16 %v2454, %v2450
        %v2489 = vpack.c.bf16 %v2456, %v2452
        %v2490 = vmax.bf16 %v2458, 0
        %v2491 = vmax.bf16 %v2459, 0
        %v2492 = vmax.bf16 %v2460, 0
        %v2493 = vmax.bf16 %v2461, 0
        %v2494 = vmax.bf16 %v2462, 0
        %v2495 = vmax.bf16 %v2463, 0
        %v2496 = vmax.bf16 %v2464, 0
        %v2497 = vmax.bf16 %v2465, 0
        %v2498 = vmax.bf16 %v2466, 0
        %v2499 = vmax.bf16 %v2467, 0
        %v2500 = vmax.bf16 %v2468, 0
        %v2501 = vmax.bf16 %v2469, 0
        %v2502 = vmax.bf16 %v2470, 0
        %v2503 = vmax.bf16 %v2471, 0
        %v2504 = vmax.bf16 %v2472, 0
        %v2505 = vmax.bf16 %v2473, 0
        %v2506 = vmax.bf16 %v2474, 0
        %v2507 = vmax.bf16 %v2475, 0
        %v2508 = vmax.bf16 %v2476, 0
        %v2509 = vmax.bf16 %v2477, 0
        %v2510 = vmax.bf16 %v2478, 0
        %v2511 = vmax.bf16 %v2479, 0
        %v2512 = vmax.bf16 %v2480, 0
        %v2513 = vmax.bf16 %v2481, 0
        %v2514 = vmax.bf16 %v2482, 0
        %v2515 = vmax.bf16 %v2483, 0
        %v2516 = vmax.bf16 %v2484, 0
        %v2517 = vmax.bf16 %v2485, 0
        %v2518 = vmax.bf16 %v2486, 0
        %v2519 = vmax.bf16 %v2487, 0
        %v2520 = vmax.bf16 %v2488, 0
        %v2521 = vmax.bf16 %v2489, 0
        %v2522 = vld [vmem:[#allocation8] sm:$0xf]
        %v2523 = vld [vmem:[#allocation8 + $0x4] sm:$0xf]
        %v2524 = vld [vmem:[#allocation8 + $0x8] sm:$0xf]
        %v2525 = vld [vmem:[#allocation8 + $0xc] sm:$0xf]
        %v2526 = vld [vmem:[#allocation8 + $0x10] sm:$0xf]
        %v2527 = vld [vmem:[#allocation8 + $0x14] sm:$0xf]
        %v2528 = vld [vmem:[#allocation8 + $0x18] sm:$0xf]
        %v2529 = vld [vmem:[#allocation8 + $0x1c] sm:$0xf]
        %v2530 = vld [vmem:[#allocation8 + $0x20] sm:$0xf]
        %v2531 = vld [vmem:[#allocation8 + $0x24] sm:$0xf]
        %v2532 = vld [vmem:[#allocation8 + $0x28] sm:$0xf]
        %v2533 = vld [vmem:[#allocation8 + $0x2c] sm:$0xf]
        %v2534 = vld [vmem:[#allocation8 + $0x30] sm:$0xf]
        %v2535 = vld [vmem:[#allocation8 + $0x34] sm:$0xf]
        %v2536 = vld [vmem:[#allocation8 + $0x38] sm:$0xf]
        %v2537 = vld [vmem:[#allocation8 + $0x3c] sm:$0xf]
        %v2538 = vld [vmem:[#allocation8 + $0x40] sm:$0xf]
        %v2539 = vld [vmem:[#allocation8 + $0x44] sm:$0xf]
        %v2540 = vld [vmem:[#allocation8 + $0x48] sm:$0xf]
        %v2541 = vld [vmem:[#allocation8 + $0x4c] sm:$0xf]
        %v2542 = vld [vmem:[#allocation8 + $0x50] sm:$0xf]
        %v2543 = vld [vmem:[#allocation8 + $0x54] sm:$0xf]
        %v2544 = vld [vmem:[#allocation8 + $0x58] sm:$0xf]
        %v2545 = vld [vmem:[#allocation8 + $0x5c] sm:$0xf]
        %v2546 = vld [vmem:[#allocation8 + $0x60] sm:$0xf]
        %v2547 = vld [vmem:[#allocation8 + $0x64] sm:$0xf]
        %v2548 = vld [vmem:[#allocation8 + $0x68] sm:$0xf]
        %v2549 = vld [vmem:[#allocation8 + $0x6c] sm:$0xf]
        %v2550 = vld [vmem:[#allocation8 + $0x70] sm:$0xf]
        %v2551 = vld [vmem:[#allocation8 + $0x74] sm:$0xf]
        %v2552 = vld [vmem:[#allocation8 + $0x78] sm:$0xf]
        %v2553 = vld [vmem:[#allocation8 + $0x7c] sm:$0xf]
        %v2554 = vld [vmem:[%s6] sm:$0x1]
        %v2556 = vlaneseq
        %v2557 = vshrl.u32 %v2556, 7
        %v2558 = vsub.s32 0, %v2557
        %v2559 = vrot.slane %v2554, %v2558
        %v2593 = vunpack.c.l.b16 %v2522
        %v2594 = vunpack.c.l.b16 %v2523
        %v2595 = vunpack.c.l.b16 %v2524
        %v2596 = vunpack.c.l.b16 %v2525
        %v2597 = vunpack.c.l.b16 %v2526
        %v2598 = vunpack.c.l.b16 %v2527
        %v2599 = vunpack.c.l.b16 %v2528
        %v2600 = vunpack.c.l.b16 %v2529
        %v2601 = vunpack.c.l.b16 %v2530
        %v2602 = vunpack.c.l.b16 %v2531
        %v2603 = vunpack.c.l.b16 %v2532
        %v2604 = vunpack.c.l.b16 %v2533
        %v2605 = vunpack.c.l.b16 %v2534
        %v2606 = vunpack.c.l.b16 %v2535
        %v2607 = vunpack.c.l.b16 %v2536
        %v2608 = vunpack.c.l.b16 %v2537
        %v2609 = vunpack.c.l.b16 %v2538
        %v2610 = vunpack.c.l.b16 %v2539
        %v2611 = vunpack.c.l.b16 %v2540
        %v2612 = vunpack.c.l.b16 %v2541
        %v2613 = vunpack.c.l.b16 %v2542
        %v2614 = vunpack.c.l.b16 %v2543
        %v2615 = vunpack.c.l.b16 %v2544
        %v2616 = vunpack.c.l.b16 %v2545
        %v2617 = vunpack.c.l.b16 %v2546
        %v2618 = vunpack.c.l.b16 %v2547
        %v2619 = vunpack.c.l.b16 %v2548
        %v2620 = vunpack.c.l.b16 %v2549
        %v2621 = vunpack.c.l.b16 %v2550
        %v2622 = vunpack.c.l.b16 %v2551
        %v2623 = vunpack.c.l.b16 %v2552
        %v2624 = vunpack.c.l.b16 %v2553
        %v2625 = vpack.c.b16 %v2594, %v2593
        %v2626 = vpack.c.b16 %v2596, %v2595
        %v2627 = vpack.c.b16 %v2598, %v2597
        %v2628 = vpack.c.b16 %v2600, %v2599
        %v2629 = vpack.c.b16 %v2602, %v2601
        %v2630 = vpack.c.b16 %v2604, %v2603
        %v2631 = vpack.c.b16 %v2606, %v2605
        %v2632 = vpack.c.b16 %v2608, %v2607
        %v2633 = vpack.c.b16 %v2610, %v2609
        %v2634 = vpack.c.b16 %v2612, %v2611
        %v2635 = vpack.c.b16 %v2614, %v2613
        %v2636 = vpack.c.b16 %v2616, %v2615
        %v2637 = vpack.c.b16 %v2618, %v2617
        %v2638 = vpack.c.b16 %v2620, %v2619
        %v2639 = vpack.c.b16 %v2622, %v2621
        %v2640 = vpack.c.b16 %v2624, %v2623
        %2657 = vmatprep.subr.bf16.mxu0 0
        %2658 = vmatpush1.bf16.msra.mxu0 %v2625
        %2659 = vmatprep.subr.bf16.mxu0 0
        %2660 = vmatpush1.bf16.msra.mxu0 %v2626
        %2661 = vmatprep.subr.bf16.mxu0 0
        %2662 = vmatpush1.bf16.msra.mxu0 %v2627
        %2663 = vmatprep.subr.bf16.mxu0 0
        %2664 = vmatpush1.bf16.msra.mxu0 %v2628
        %2665 = vmatprep.subr.bf16.mxu0 0
        %2666 = vmatpush1.bf16.msra.mxu0 %v2629
        %2667 = vmatprep.subr.bf16.mxu0 0
        %2668 = vmatpush1.bf16.msra.mxu0 %v2630
        %2669 = vmatprep.subr.bf16.mxu0 0
        %2670 = vmatpush1.bf16.msra.mxu0 %v2631
        %2671 = vmatprep.subr.bf16.mxu0 0
        %2672 = vmatpush1.bf16.msra.mxu0 %v2632
        %2673 = vmatprep.subr.bf16.mxu0 0
        %2674 = vmatpush1.bf16.msra.mxu0 %v2633
        %2675 = vmatprep.subr.bf16.mxu0 0
        %2676 = vmatpush1.bf16.msra.mxu0 %v2634
        %2677 = vmatprep.subr.bf16.mxu0 0
        %2678 = vmatpush1.bf16.msra.mxu0 %v2635
        %2679 = vmatprep.subr.bf16.mxu0 0
        %2680 = vmatpush1.bf16.msra.mxu0 %v2636
        %2681 = vmatprep.subr.bf16.mxu0 0
        %2682 = vmatpush1.bf16.msra.mxu0 %v2637
        %2683 = vmatprep.subr.bf16.mxu0 0
        %2684 = vmatpush1.bf16.msra.mxu0 %v2638
        %2685 = vmatprep.subr.bf16.mxu0 0
        %2686 = vmatpush1.bf16.msra.mxu0 %v2639
        %2687 = vmatprep.subr.bf16.mxu0 0
        %2688 = vmatpush1.bf16.msra.mxu0 %v2640
        %2689 = vmatprep.mubr.bf16.mxu0 %v2491
        %2690 = vmatmul.mubr.bf16.gmra.mrb[0].mxu0 %v2490
        %v2691 = vpop.f32.mrb[0].mxu0
        %v2692 = vadd.f32 %v2559, %v2691
        %v2693 = vpop.f32.mrb[0].mxu0
        %v2694 = vpop.f32.mrb[0].mxu0
        %v2695 = vadd.f32 %v2559, %v2694
        %v2696 = vpop.f32.mrb[0].mxu0
        %2697 = vmatprep.mubr.bf16.mxu0 %v2493
        %2698 = vmatmul.mubr.bf16.gmra.mrb[0].mxu0 %v2492
        %v2699 = vpop.f32.mrb[0].mxu0
        %v2700 = vadd.f32 %v2559, %v2699
        %v2701 = vpop.f32.mrb[0].mxu0
        %v2702 = vpop.f32.mrb[0].mxu0
        %v2703 = vadd.f32 %v2559, %v2702
        %v2704 = vpop.f32.mrb[0].mxu0
        %2705 = vmatprep.mubr.bf16.mxu0 %v2495
        %2706 = vmatmul.mubr.bf16.gmra.mrb[0].mxu0 %v2494
        %v2707 = vpop.f32.mrb[0].mxu0
        %v2708 = vadd.f32 %v2559, %v2707
        %v2709 = vpop.f32.mrb[0].mxu0
        %v2710 = vpop.f32.mrb[0].mxu0
        %v2711 = vadd.f32 %v2559, %v2710
        %v2712 = vpop.f32.mrb[0].mxu0
        %2713 = vmatprep.mubr.bf16.mxu0 %v2497
        %2714 = vmatmul.mubr.bf16.gmra.mrb[0].mxu0 %v2496
        %v2715 = vpop.f32.mrb[0].mxu0
        %v2716 = vadd.f32 %v2559, %v2715
        %v2717 = vpop.f32.mrb[0].mxu0
        %v2718 = vpop.f32.mrb[0].mxu0
        %v2719 = vadd.f32 %v2559, %v2718
        %v2720 = vpop.f32.mrb[0].mxu0
        %2721 = vmatprep.mubr.bf16.mxu0 %v2499
        %2722 = vmatmul.mubr.bf16.gmra.mrb[0].mxu0 %v2498
        %v2723 = vpop.f32.mrb[0].mxu0
        %v2724 = vadd.f32 %v2559, %v2723
        %v2725 = vpop.f32.mrb[0].mxu0
        %v2726 = vpop.f32.mrb[0].mxu0
        %v2727 = vadd.f32 %v2559, %v2726
        %v2728 = vpop.f32.mrb[0].mxu0
        %2729 = vmatprep.mubr.bf16.mxu0 %v2501
        %2730 = vmatmul.mubr.bf16.gmra.mrb[0].mxu0 %v2500
        %v2731 = vpop.f32.mrb[0].mxu0
        %v2732 = vadd.f32 %v2559, %v2731
        %v2733 = vpop.f32.mrb[0].mxu0
        %v2734 = vpop.f32.mrb[0].mxu0
        %v2735 = vadd.f32 %v2559, %v2734
        %v2736 = vpop.f32.mrb[0].mxu0
        %2737 = vmatprep.mubr.bf16.mxu0 %v2503
        %2738 = vmatmul.mubr.bf16.gmra.mrb[0].mxu0 %v2502
        %v2739 = vpop.f32.mrb[0].mxu0
        %v2740 = vadd.f32 %v2559, %v2739
        %v2741 = vpop.f32.mrb[0].mxu0
        %v2742 = vpop.f32.mrb[0].mxu0
        %v2743 = vadd.f32 %v2559, %v2742
        %v2744 = vpop.f32.mrb[0].mxu0
        %2745 = vmatprep.mubr.bf16.mxu0 %v2505
        %2746 = vmatmul.mubr.bf16.gmra.mrb[0].mxu0 %v2504
        %v2747 = vpop.f32.mrb[0].mxu0
        %v2748 = vadd.f32 %v2559, %v2747
        %v2749 = vpop.f32.mrb[0].mxu0
        %v2750 = vpop.f32.mrb[0].mxu0
        %v2751 = vadd.f32 %v2559, %v2750
        %v2752 = vpop.f32.mrb[0].mxu0
        %2753 = vmatprep.mubr.bf16.mxu0 %v2507
        %2754 = vmatmul.mubr.bf16.gmra.mrb[0].mxu0 %v2506
        %v2755 = vpop.f32.mrb[0].mxu0
        %v2756 = vadd.f32 %v2559, %v2755
        %v2757 = vpop.f32.mrb[0].mxu0
        %v2758 = vpop.f32.mrb[0].mxu0
        %v2759 = vadd.f32 %v2559, %v2758
        %v2760 = vpop.f32.mrb[0].mxu0
        %2761 = vmatprep.mubr.bf16.mxu0 %v2509
        %2762 = vmatmul.mubr.bf16.gmra.mrb[0].mxu0 %v2508
        %v2763 = vpop.f32.mrb[0].mxu0
        %v2764 = vadd.f32 %v2559, %v2763
        %v2765 = vpop.f32.mrb[0].mxu0
        %v2766 = vpop.f32.mrb[0].mxu0
        %v2767 = vadd.f32 %v2559, %v2766
        %v2768 = vpop.f32.mrb[0].mxu0
        %2769 = vmatprep.mubr.bf16.mxu0 %v2511
        %2770 = vmatmul.mubr.bf16.gmra.mrb[0].mxu0 %v2510
        %v2771 = vpop.f32.mrb[0].mxu0
        %v2772 = vadd.f32 %v2559, %v2771
        %v2773 = vpop.f32.mrb[0].mxu0
        %v2774 = vpop.f32.mrb[0].mxu0
        %v2775 = vadd.f32 %v2559, %v2774
        %v2776 = vpop.f32.mrb[0].mxu0
        %2777 = vmatprep.mubr.bf16.mxu0 %v2513
        %2778 = vmatmul.mubr.bf16.gmra.mrb[0].mxu0 %v2512
        %v2779 = vpop.f32.mrb[0].mxu0
        %v2780 = vadd.f32 %v2559, %v2779
        %v2781 = vpop.f32.mrb[0].mxu0
        %v2782 = vpop.f32.mrb[0].mxu0
        %v2783 = vadd.f32 %v2559, %v2782
        %v2784 = vpop.f32.mrb[0].mxu0
        %2785 = vmatprep.mubr.bf16.mxu0 %v2515
        %2786 = vmatmul.mubr.bf16.gmra.mrb[0].mxu0 %v2514
        %v2787 = vpop.f32.mrb[0].mxu0
        %v2788 = vadd.f32 %v2559, %v2787
        %v2789 = vpop.f32.mrb[0].mxu0
        %v2790 = vpop.f32.mrb[0].mxu0
        %v2791 = vadd.f32 %v2559, %v2790
        %v2792 = vpop.f32.mrb[0].mxu0
        %2793 = vmatprep.mubr.bf16.mxu0 %v2517
        %2794 = vmatmul.mubr.bf16.gmra.mrb[0].mxu0 %v2516
        %v2795 = vpop.f32.mrb[0].mxu0
        %v2796 = vadd.f32 %v2559, %v2795
        %v2797 = vpop.f32.mrb[0].mxu0
        %v2798 = vpop.f32.mrb[0].mxu0
        %v2799 = vadd.f32 %v2559, %v2798
        %v2800 = vpop.f32.mrb[0].mxu0
        %2801 = vmatprep.mubr.bf16.mxu0 %v2519
        %2802 = vmatmul.mubr.bf16.gmra.mrb[0].mxu0 %v2518
        %v2803 = vpop.f32.mrb[0].mxu0
        %v2804 = vadd.f32 %v2559, %v2803
        %v2805 = vpop.f32.mrb[0].mxu0
        %v2806 = vpop.f32.mrb[0].mxu0
        %v2807 = vadd.f32 %v2559, %v2806
        %v2808 = vpop.f32.mrb[0].mxu0
        %2809 = vmatprep.mubr.bf16.mxu0 %v2521
        %2810 = vmatmul.mubr.bf16.gmra.mrb[0].mxu0 %v2520
        %v2811 = vpop.f32.mrb[0].mxu0
        %v2812 = vadd.f32 %v2559, %v2811
        %v2813 = vpop.f32.mrb[0].mxu0
        %v2814 = vpop.f32.mrb[0].mxu0
        %v2815 = vadd.f32 %v2559, %v2814
        %v2816 = vpop.f32.mrb[0].mxu0
        %2817 = vdwg.mxu0
        %v2818 = vpack.c.bf16 %v2695, %v2692
        %v2819 = vpack.c.bf16 %v2703, %v2700
        %v2820 = vpack.c.bf16 %v2711, %v2708
        %v2821 = vpack.c.bf16 %v2719, %v2716
        %v2822 = vpack.c.bf16 %v2727, %v2724
        %v2823 = vpack.c.bf16 %v2735, %v2732
        %v2824 = vpack.c.bf16 %v2743, %v2740
        %v2825 = vpack.c.bf16 %v2751, %v2748
        %v2826 = vpack.c.bf16 %v2759, %v2756
        %v2827 = vpack.c.bf16 %v2767, %v2764
        %v2828 = vpack.c.bf16 %v2775, %v2772
        %v2829 = vpack.c.bf16 %v2783, %v2780
        %v2830 = vpack.c.bf16 %v2791, %v2788
        %v2831 = vpack.c.bf16 %v2799, %v2796
        %v2832 = vpack.c.bf16 %v2807, %v2804
        %v2833 = vpack.c.bf16 %v2815, %v2812
        %v2834 = vmax.bf16 %v2818, 0
        %v2835 = vmax.bf16 %v2819, 0
        %v2836 = vmax.bf16 %v2820, 0
        %v2837 = vmax.bf16 %v2821, 0
        %v2838 = vmax.bf16 %v2822, 0
        %v2839 = vmax.bf16 %v2823, 0
        %v2840 = vmax.bf16 %v2824, 0
        %v2841 = vmax.bf16 %v2825, 0
        %v2842 = vmax.bf16 %v2826, 0
        %v2843 = vmax.bf16 %v2827, 0
        %v2844 = vmax.bf16 %v2828, 0
        %v2845 = vmax.bf16 %v2829, 0
        %v2846 = vmax.bf16 %v2830, 0
        %v2847 = vmax.bf16 %v2831, 0
        %v2848 = vmax.bf16 %v2832, 0
        %v2849 = vmax.bf16 %v2833, 0
        %v2850 = vld [vmem:[#allocation10] sm:$0xff]
        %v2851 = vld [vmem:[#allocation10 + $0x8] sm:$0xff]
        %v2852 = vld [vmem:[#allocation10 + $0x10] sm:$0xff]
        %v2853 = vld [vmem:[#allocation10 + $0x18] sm:$0xff]
        %v2854 = vld [vmem:[#allocation10 + $0x20] sm:$0xff]
        %v2855 = vld [vmem:[#allocation10 + $0x28] sm:$0xff]
        %v2856 = vld [vmem:[#allocation10 + $0x30] sm:$0xff]
        %v2857 = vld [vmem:[#allocation10 + $0x38] sm:$0xff]
        %v2858 = vld [vmem:[#allocation10 + $0x40] sm:$0xff]
        %v2859 = vld [vmem:[#allocation10 + $0x48] sm:$0xff]
        %v2860 = vld [vmem:[#allocation10 + $0x50] sm:$0xff]
        %v2861 = vld [vmem:[#allocation10 + $0x58] sm:$0xff]
        %v2862 = vld [vmem:[#allocation10 + $0x60] sm:$0xff]
        %v2863 = vld [vmem:[#allocation10 + $0x68] sm:$0xff]
        %v2864 = vld [vmem:[#allocation10 + $0x70] sm:$0xff]
        %v2865 = vld [vmem:[#allocation10 + $0x78] sm:$0xff]
        %v2866 = vld [vmem:[%s8] sm:$0x3]
        %v2868 = vlaneseq
        %v2869 = vshrl.u32 %v2868, 7
        %v2870 = vsub.s32 0, %v2869
        %v2871 = vrot.slane %v2866, %v2870
        %v2872 = vlaneseq
        %v2873 = vshrl.u32 %v2872, 7
        %v2874 = vsub.s32 1, %v2873
        %v2875 = vrot.slane %v2866, %v2874
        %v2894 = vunpack.c.l.b16 %v2850
        %v2895 = vunpack.c.h.b16 %v2850
        %v2896 = vunpack.c.l.b16 %v2851
        %v2897 = vunpack.c.h.b16 %v2851
        %v2898 = vunpack.c.l.b16 %v2852
        %v2899 = vunpack.c.h.b16 %v2852
        %v2900 = vunpack.c.l.b16 %v2853
        %v2901 = vunpack.c.h.b16 %v2853
        %v2902 = vunpack.c.l.b16 %v2854
        %v2903 = vunpack.c.h.b16 %v2854
        %v2904 = vunpack.c.l.b16 %v2855
        %v2905 = vunpack.c.h.b16 %v2855
        %v2906 = vunpack.c.l.b16 %v2856
        %v2907 = vunpack.c.h.b16 %v2856
        %v2908 = vunpack.c.l.b16 %v2857
        %v2909 = vunpack.c.h.b16 %v2857
        %v2910 = vunpack.c.l.b16 %v2858
        %v2911 = vunpack.c.h.b16 %v2858
        %v2912 = vunpack.c.l.b16 %v2859
        %v2913 = vunpack.c.h.b16 %v2859
        %v2914 = vunpack.c.l.b16 %v2860
        %v2915 = vunpack.c.h.b16 %v2860
        %v2916 = vunpack.c.l.b16 %v2861
        %v2917 = vunpack.c.h.b16 %v2861
        %v2918 = vunpack.c.l.b16 %v2862
        %v2919 = vunpack.c.h.b16 %v2862
        %v2920 = vunpack.c.l.b16 %v2863
        %v2921 = vunpack.c.h.b16 %v2863
        %v2922 = vunpack.c.l.b16 %v2864
        %v2923 = vunpack.c.h.b16 %v2864
        %v2924 = vunpack.c.l.b16 %v2865
        %v2925 = vunpack.c.h.b16 %v2865
        %v2926 = vpack.c.b16 %v2896, %v2894
        %v2927 = vpack.c.b16 %v2897, %v2895
        %v2928 = vpack.c.b16 %v2900, %v2898
        %v2929 = vpack.c.b16 %v2901, %v2899
        %v2930 = vpack.c.b16 %v2904, %v2902
        %v2931 = vpack.c.b16 %v2905, %v2903
        %v2932 = vpack.c.b16 %v2908, %v2906
        %v2933 = vpack.c.b16 %v2909, %v2907
        %v2934 = vpack.c.b16 %v2912, %v2910
        %v2935 = vpack.c.b16 %v2913, %v2911
        %v2936 = vpack.c.b16 %v2916, %v2914
        %v2937 = vpack.c.b16 %v2917, %v2915
        %v2938 = vpack.c.b16 %v2920, %v2918
        %v2939 = vpack.c.b16 %v2921, %v2919
        %v2940 = vpack.c.b16 %v2924, %v2922
        %v2941 = vpack.c.b16 %v2925, %v2923
        %2958 = vmatprep.subr.bf16.mxu0 %v2927
        %2959 = vmatpush1.bf16.msra.mxu0 %v2926
        %2960 = vmatprep.subr.bf16.mxu0 %v2929
        %2961 = vmatpush1.bf16.msra.mxu0 %v2928
        %2962 = vmatprep.subr.bf16.mxu0 %v2931
        %2963 = vmatpush1.bf16.msra.mxu0 %v2930
        %2964 = vmatprep.subr.bf16.mxu0 %v2933
        %2965 = vmatpush1.bf16.msra.mxu0 %v2932
        %2966 = vmatprep.subr.bf16.mxu0 %v2935
        %2967 = vmatpush1.bf16.msra.mxu0 %v2934
        %2968 = vmatprep.subr.bf16.mxu0 %v2937
        %2969 = vmatpush1.bf16.msra.mxu0 %v2936
        %2970 = vmatprep.subr.bf16.mxu0 %v2939
        %2971 = vmatpush1.bf16.msra.mxu0 %v2938
        %2972 = vmatprep.subr.bf16.mxu0 %v2941
        %2973 = vmatpush1.bf16.msra.mxu0 %v2940
        %2974 = vmatprep.subr.bf16.mxu0 0
        %2975 = vmatpush1.bf16.msra.mxu0 0
        %2976 = vmatprep.subr.bf16.mxu0 0
        %2977 = vmatpush1.bf16.msra.mxu0 0
        %2978 = vmatprep.subr.bf16.mxu0 0
        %2979 = vmatpush1.bf16.msra.mxu0 0
        %2980 = vmatprep.subr.bf16.mxu0 0
        %2981 = vmatpush1.bf16.msra.mxu0 0
        %2982 = vmatprep.subr.bf16.mxu0 0
        %2983 = vmatpush1.bf16.msra.mxu0 0
        %2984 = vmatprep.subr.bf16.mxu0 0
        %2985 = vmatpush1.bf16.msra.mxu0 0
        %2986 = vmatprep.subr.bf16.mxu0 0
        %2987 = vmatpush1.bf16.msra.mxu0 0
        %2988 = vmatprep.subr.bf16.mxu0 0
        %2989 = vmatpush1.bf16.msra.mxu0 0
        %2990 = vmatprep.mubr.bf16.mxu0 0
        %2991 = vmatmul.mubr.bf16.gmra.mrb[0].mxu0 %v2834
        %v2992 = vpop.f32.mrb[0].mxu0
        %v2993 = vadd.f32 %v2871, %v2992
        %v2994 = vpop.f32.mrb[0].mxu0
        %v2995 = vadd.f32 %v2875, %v2994
        %v2996 = vpop.f32.mrb[0].mxu0
        %v2997 = vadd.f32 %v2871, %v2996
        %v2998 = vpop.f32.mrb[0].mxu0
        %v2999 = vadd.f32 %v2875, %v2998
        %3000 = vmatprep.mubr.bf16.mxu0 0
        %3001 = vmatmul.mubr.bf16.gmra.mrb[0].mxu0 %v2835
        %v3002 = vpop.f32.mrb[0].mxu0
        %v3003 = vadd.f32 %v2871, %v3002
        %v3004 = vpop.f32.mrb[0].mxu0
        %v3005 = vadd.f32 %v2875, %v3004
        %v3006 = vpop.f32.mrb[0].mxu0
        %v3007 = vadd.f32 %v2871, %v3006
        %v3008 = vpop.f32.mrb[0].mxu0
        %v3009 = vadd.f32 %v2875, %v3008
        %3010 = vmatprep.mubr.bf16.mxu0 0
        %3011 = vmatmul.mubr.bf16.gmra.mrb[0].mxu0 %v2836
        %v3012 = vpop.f32.mrb[0].mxu0
        %v3013 = vadd.f32 %v2871, %v3012
        %v3014 = vpop.f32.mrb[0].mxu0
        %v3015 = vadd.f32 %v2875, %v3014
        %v3016 = vpop.f32.mrb[0].mxu0
        %v3017 = vadd.f32 %v2871, %v3016
        %v3018 = vpop.f32.mrb[0].mxu0
        %v3019 = vadd.f32 %v2875, %v3018
        %3020 = vmatprep.mubr.bf16.mxu0 0
        %3021 = vmatmul.mubr.bf16.gmra.mrb[0].mxu0 %v2837
        %v3022 = vpop.f32.mrb[0].mxu0
        %v3023 = vadd.f32 %v2871, %v3022
        %v3024 = vpop.f32.mrb[0].mxu0
        %v3025 = vadd.f32 %v2875, %v3024
        %v3026 = vpop.f32.mrb[0].mxu0
        %v3027 = vadd.f32 %v2871, %v3026
        %v3028 = vpop.f32.mrb[0].mxu0
        %v3029 = vadd.f32 %v2875, %v3028
        %3030 = vmatprep.mubr.bf16.mxu0 0
        %3031 = vmatmul.mubr.bf16.gmra.mrb[0].mxu0 %v2838
        %v3032 = vpop.f32.mrb[0].mxu0
        %v3033 = vadd.f32 %v2871, %v3032
        %v3034 = vpop.f32.mrb[0].mxu0
        %v3035 = vadd.f32 %v2875, %v3034
        %v3036 = vpop.f32.mrb[0].mxu0
        %v3037 = vadd.f32 %v2871, %v3036
        %v3038 = vpop.f32.mrb[0].mxu0
        %v3039 = vadd.f32 %v2875, %v3038
        %3040 = vmatprep.mubr.bf16.mxu0 0
        %3041 = vmatmul.mubr.bf16.gmra.mrb[0].mxu0 %v2839
        %v3042 = vpop.f32.mrb[0].mxu0
        %v3043 = vadd.f32 %v2871, %v3042
        %v3044 = vpop.f32.mrb[0].mxu0
        %v3045 = vadd.f32 %v2875, %v3044
        %v3046 = vpop.f32.mrb[0].mxu0
        %v3047 = vadd.f32 %v2871, %v3046
        %v3048 = vpop.f32.mrb[0].mxu0
        %v3049 = vadd.f32 %v2875, %v3048
        %3050 = vmatprep.mubr.bf16.mxu0 0
        %3051 = vmatmul.mubr.bf16.gmra.mrb[0].mxu0 %v2840
        %v3052 = vpop.f32.mrb[0].mxu0
        %v3053 = vadd.f32 %v2871, %v3052
        %v3054 = vpop.f32.mrb[0].mxu0
        %v3055 = vadd.f32 %v2875, %v3054
        %v3056 = vpop.f32.mrb[0].mxu0
        %v3057 = vadd.f32 %v2871, %v3056
        %v3058 = vpop.f32.mrb[0].mxu0
        %v3059 = vadd.f32 %v2875, %v3058
        %3060 = vmatprep.mubr.bf16.mxu0 0
        %3061 = vmatmul.mubr.bf16.gmra.mrb[0].mxu0 %v2841
        %v3062 = vpop.f32.mrb[0].mxu0
        %v3063 = vadd.f32 %v2871, %v3062
        %v3064 = vpop.f32.mrb[0].mxu0
        %v3065 = vadd.f32 %v2875, %v3064
        %v3066 = vpop.f32.mrb[0].mxu0
        %v3067 = vadd.f32 %v2871, %v3066
        %v3068 = vpop.f32.mrb[0].mxu0
        %v3069 = vadd.f32 %v2875, %v3068
        %3070 = vmatprep.mubr.bf16.mxu0 0
        %3071 = vmatmul.mubr.bf16.gmra.mrb[0].mxu0 %v2842
        %v3072 = vpop.f32.mrb[0].mxu0
        %v3073 = vadd.f32 %v2871, %v3072
        %v3074 = vpop.f32.mrb[0].mxu0
        %v3075 = vadd.f32 %v2875, %v3074
        %v3076 = vpop.f32.mrb[0].mxu0
        %v3077 = vadd.f32 %v2871, %v3076
        %v3078 = vpop.f32.mrb[0].mxu0
        %v3079 = vadd.f32 %v2875, %v3078
        %3080 = vmatprep.mubr.bf16.mxu0 0
        %3081 = vmatmul.mubr.bf16.gmra.mrb[0].mxu0 %v2843
        %v3082 = vpop.f32.mrb[0].mxu0
        %v3083 = vadd.f32 %v2871, %v3082
        %v3084 = vpop.f32.mrb[0].mxu0
        %v3085 = vadd.f32 %v2875, %v3084
        %v3086 = vpop.f32.mrb[0].mxu0
        %v3087 = vadd.f32 %v2871, %v3086
        %v3088 = vpop.f32.mrb[0].mxu0
        %v3089 = vadd.f32 %v2875, %v3088
        %3090 = vmatprep.mubr.bf16.mxu0 0
        %3091 = vmatmul.mubr.bf16.gmra.mrb[0].mxu0 %v2844
        %v3092 = vpop.f32.mrb[0].mxu0
        %v3093 = vadd.f32 %v2871, %v3092
        %v3094 = vpop.f32.mrb[0].mxu0
        %v3095 = vadd.f32 %v2875, %v3094
        %v3096 = vpop.f32.mrb[0].mxu0
        %v3097 = vadd.f32 %v2871, %v3096
        %v3098 = vpop.f32.mrb[0].mxu0
        %v3099 = vadd.f32 %v2875, %v3098
        %3100 = vmatprep.mubr.bf16.mxu0 0
        %3101 = vmatmul.mubr.bf16.gmra.mrb[0].mxu0 %v2845
        %v3102 = vpop.f32.mrb[0].mxu0
        %v3103 = vadd.f32 %v2871, %v3102
        %v3104 = vpop.f32.mrb[0].mxu0
        %v3105 = vadd.f32 %v2875, %v3104
        %v3106 = vpop.f32.mrb[0].mxu0
        %v3107 = vadd.f32 %v2871, %v3106
        %v3108 = vpop.f32.mrb[0].mxu0
        %v3109 = vadd.f32 %v2875, %v3108
        %3110 = vmatprep.mubr.bf16.mxu0 0
        %3111 = vmatmul.mubr.bf16.gmra.mrb[0].mxu0 %v2846
        %v3112 = vpop.f32.mrb[0].mxu0
        %v3113 = vadd.f32 %v2871, %v3112
        %v3114 = vpop.f32.mrb[0].mxu0
        %v3115 = vadd.f32 %v2875, %v3114
        %v3116 = vpop.f32.mrb[0].mxu0
        %v3117 = vadd.f32 %v2871, %v3116
        %v3118 = vpop.f32.mrb[0].mxu0
        %v3119 = vadd.f32 %v2875, %v3118
        %3120 = vmatprep.mubr.bf16.mxu0 0
        %3121 = vmatmul.mubr.bf16.gmra.mrb[0].mxu0 %v2847
        %v3122 = vpop.f32.mrb[0].mxu0
        %v3123 = vadd.f32 %v2871, %v3122
        %v3124 = vpop.f32.mrb[0].mxu0
        %v3125 = vadd.f32 %v2875, %v3124
        %v3126 = vpop.f32.mrb[0].mxu0
        %v3127 = vadd.f32 %v2871, %v3126
        %v3128 = vpop.f32.mrb[0].mxu0
        %v3129 = vadd.f32 %v2875, %v3128
        %3130 = vmatprep.mubr.bf16.mxu0 0
        %3131 = vmatmul.mubr.bf16.gmra.mrb[0].mxu0 %v2848
        %v3132 = vpop.f32.mrb[0].mxu0
        %v3133 = vadd.f32 %v2871, %v3132
        %v3134 = vpop.f32.mrb[0].mxu0
        %v3135 = vadd.f32 %v2875, %v3134
        %v3136 = vpop.f32.mrb[0].mxu0
        %v3137 = vadd.f32 %v2871, %v3136
        %v3138 = vpop.f32.mrb[0].mxu0
        %v3139 = vadd.f32 %v2875, %v3138
        %3140 = vmatprep.mubr.bf16.mxu0 0
        %3141 = vmatmul.mubr.bf16.gmra.mrb[0].mxu0 %v2849
        %v3142 = vpop.f32.mrb[0].mxu0
        %v3143 = vadd.f32 %v2871, %v3142
        %v3144 = vpop.f32.mrb[0].mxu0
        %v3145 = vadd.f32 %v2875, %v3144
        %v3146 = vpop.f32.mrb[0].mxu0
        %v3147 = vadd.f32 %v2871, %v3146
        %v3148 = vpop.f32.mrb[0].mxu0
        %v3149 = vadd.f32 %v2875, %v3148
        %3150 = vdwg.mxu0
        %v3151 = vpack.c.bf16 %v2997, %v2993
        %v3152 = vpack.c.bf16 %v3007, %v3003
        %v3153 = vpack.c.bf16 %v3017, %v3013
        %v3154 = vpack.c.bf16 %v3027, %v3023
        %v3155 = vpack.c.bf16 %v3037, %v3033
        %v3156 = vpack.c.bf16 %v3047, %v3043
        %v3157 = vpack.c.bf16 %v3057, %v3053
        %v3158 = vpack.c.bf16 %v3067, %v3063
        %v3159 = vpack.c.bf16 %v3077, %v3073
        %v3160 = vpack.c.bf16 %v3087, %v3083
        %v3161 = vpack.c.bf16 %v3097, %v3093
        %v3162 = vpack.c.bf16 %v3107, %v3103
        %v3163 = vpack.c.bf16 %v3117, %v3113
        %v3164 = vpack.c.bf16 %v3127, %v3123
        %v3165 = vpack.c.bf16 %v3137, %v3133
        %v3166 = vpack.c.bf16 %v3147, %v3143
        %v3183 = vunpack.c.l.b16 %v3151
        %v3184 = vunpack.c.h.b16 %v3151
        %v3185 = vunpack.c.l.b16 %v3152
        %v3186 = vunpack.c.h.b16 %v3152
        %v3187 = vunpack.c.l.b16 %v3153
        %v3188 = vunpack.c.h.b16 %v3153
        %v3189 = vunpack.c.l.b16 %v3154
        %v3190 = vunpack.c.h.b16 %v3154
        %v3191 = vunpack.c.l.b16 %v3155
        %v3192 = vunpack.c.h.b16 %v3155
        %v3193 = vunpack.c.l.b16 %v3156
        %v3194 = vunpack.c.h.b16 %v3156
        %v3195 = vunpack.c.l.b16 %v3157
        %v3196 = vunpack.c.h.b16 %v3157
        %v3197 = vunpack.c.l.b16 %v3158
        %v3198 = vunpack.c.h.b16 %v3158
        %v3199 = vunpack.c.l.b16 %v3159
        %v3200 = vunpack.c.h.b16 %v3159
        %v3201 = vunpack.c.l.b16 %v3160
        %v3202 = vunpack.c.h.b16 %v3160
        %v3203 = vunpack.c.l.b16 %v3161
        %v3204 = vunpack.c.h.b16 %v3161
        %v3205 = vunpack.c.l.b16 %v3162
        %v3206 = vunpack.c.h.b16 %v3162
        %v3207 = vunpack.c.l.b16 %v3163
        %v3208 = vunpack.c.h.b16 %v3163
        %v3209 = vunpack.c.l.b16 %v3164
        %v3210 = vunpack.c.h.b16 %v3164
        %v3211 = vunpack.c.l.b16 %v3165
        %v3212 = vunpack.c.h.b16 %v3165
        %v3213 = vunpack.c.l.b16 %v3166
        %v3214 = vunpack.c.h.b16 %v3166
        %v3215 = vpack.c.b16 %v3183, %v3183
        %v3216 = vpack.c.b16 %v3184, %v3184
        %v3217 = vpack.c.b16 %v3185, %v3185
        %v3218 = vpack.c.b16 %v3186, %v3186
        %v3219 = vpack.c.b16 %v3187, %v3187
        %v3220 = vpack.c.b16 %v3188, %v3188
        %v3221 = vpack.c.b16 %v3189, %v3189
        %v3222 = vpack.c.b16 %v3190, %v3190
        %v3223 = vpack.c.b16 %v3191, %v3191
        %v3224 = vpack.c.b16 %v3192, %v3192
        %v3225 = vpack.c.b16 %v3193, %v3193
        %v3226 = vpack.c.b16 %v3194, %v3194
        %v3227 = vpack.c.b16 %v3195, %v3195
        %v3228 = vpack.c.b16 %v3196, %v3196
        %v3229 = vpack.c.b16 %v3197, %v3197
        %v3230 = vpack.c.b16 %v3198, %v3198
        %v3231 = vpack.c.b16 %v3199, %v3199
        %v3232 = vpack.c.b16 %v3200, %v3200
        %v3233 = vpack.c.b16 %v3201, %v3201
        %v3234 = vpack.c.b16 %v3202, %v3202
        %v3235 = vpack.c.b16 %v3203, %v3203
        %v3236 = vpack.c.b16 %v3204, %v3204
        %v3237 = vpack.c.b16 %v3205, %v3205
        %v3238 = vpack.c.b16 %v3206, %v3206
        %v3239 = vpack.c.b16 %v3207, %v3207
        %v3240 = vpack.c.b16 %v3208, %v3208
        %v3241 = vpack.c.b16 %v3209, %v3209
        %v3242 = vpack.c.b16 %v3210, %v3210
        %v3243 = vpack.c.b16 %v3211, %v3211
        %v3244 = vpack.c.b16 %v3212, %v3212
        %v3245 = vpack.c.b16 %v3213, %v3213
        %v3246 = vpack.c.b16 %v3214, %v3214
        %3279 = vst [vmem:[%s656] sm:$0xf] %v3215
        %3280 = vst [vmem:[%s656 + $0x4] sm:$0xf] %v3216
        %3281 = vst [vmem:[%s656 + $0x8] sm:$0xf] %v3217
        %3282 = vst [vmem:[%s656 + $0xc] sm:$0xf] %v3218
        %3283 = vst [vmem:[%s656 + $0x10] sm:$0xf] %v3219
        %3284 = vst [vmem:[%s656 + $0x14] sm:$0xf] %v3220
        %3285 = vst [vmem:[%s656 + $0x18] sm:$0xf] %v3221
        %3286 = vst [vmem:[%s656 + $0x1c] sm:$0xf] %v3222
        %3287 = vst [vmem:[%s656 + $0x20] sm:$0xf] %v3223
        %3288 = vst [vmem:[%s656 + $0x24] sm:$0xf] %v3224
        %3289 = vst [vmem:[%s656 + $0x28] sm:$0xf] %v3225
        %3290 = vst [vmem:[%s656 + $0x2c] sm:$0xf] %v3226
        %3291 = vst [vmem:[%s656 + $0x30] sm:$0xf] %v3227
        %3292 = vst [vmem:[%s656 + $0x34] sm:$0xf] %v3228
        %3293 = vst [vmem:[%s656 + $0x38] sm:$0xf] %v3229
        %3294 = vst [vmem:[%s656 + $0x3c] sm:$0xf] %v3230
        %3295 = vst [vmem:[%s656 + $0x40] sm:$0xf] %v3231
        %3296 = vst [vmem:[%s656 + $0x44] sm:$0xf] %v3232
        %3297 = vst [vmem:[%s656 + $0x48] sm:$0xf] %v3233
        %3298 = vst [vmem:[%s656 + $0x4c] sm:$0xf] %v3234
        %3299 = vst [vmem:[%s656 + $0x50] sm:$0xf] %v3235
        %3300 = vst [vmem:[%s656 + $0x54] sm:$0xf] %v3236
        %3301 = vst [vmem:[%s656 + $0x58] sm:$0xf] %v3237
        %3302 = vst [vmem:[%s656 + $0x5c] sm:$0xf] %v3238
        %3303 = vst [vmem:[%s656 + $0x60] sm:$0xf] %v3239
        %3304 = vst [vmem:[%s656 + $0x64] sm:$0xf] %v3240
        %3305 = vst [vmem:[%s656 + $0x68] sm:$0xf] %v3241
        %3306 = vst [vmem:[%s656 + $0x6c] sm:$0xf] %v3242
        %3307 = vst [vmem:[%s656 + $0x70] sm:$0xf] %v3243
        %3308 = vst [vmem:[%s656 + $0x74] sm:$0xf] %v3244
        %3309 = vst [vmem:[%s656 + $0x78] sm:$0xf] %v3245
        %3310 = vst [vmem:[%s656 + $0x7c] sm:$0xf] %v3246
        %v3311 = vpack.c.bf16 %v2999, %v2995
        %v3312 = vpack.c.bf16 %v3009, %v3005
        %v3313 = vpack.c.bf16 %v3019, %v3015
        %v3314 = vpack.c.bf16 %v3029, %v3025
        %v3315 = vpack.c.bf16 %v3039, %v3035
        %v3316 = vpack.c.bf16 %v3049, %v3045
        %v3317 = vpack.c.bf16 %v3059, %v3055
        %v3318 = vpack.c.bf16 %v3069, %v3065
        %v3319 = vpack.c.bf16 %v3079, %v3075
        %v3320 = vpack.c.bf16 %v3089, %v3085
        %v3321 = vpack.c.bf16 %v3099, %v3095
        %v3322 = vpack.c.bf16 %v3109, %v3105
        %v3323 = vpack.c.bf16 %v3119, %v3115
        %v3324 = vpack.c.bf16 %v3129, %v3125
        %v3325 = vpack.c.bf16 %v3139, %v3135
        %v3326 = vpack.c.bf16 %v3149, %v3145
        %v3327 = vmax.bf16 %v3311, 0
        %v3328 = vmax.bf16 %v3312, 0
        %v3329 = vmax.bf16 %v3313, 0
        %v3330 = vmax.bf16 %v3314, 0
        %v3331 = vmax.bf16 %v3315, 0
        %v3332 = vmax.bf16 %v3316, 0
        %v3333 = vmax.bf16 %v3317, 0
        %v3334 = vmax.bf16 %v3318, 0
        %v3335 = vmax.bf16 %v3319, 0
        %v3336 = vmax.bf16 %v3320, 0
        %v3337 = vmax.bf16 %v3321, 0
        %v3338 = vmax.bf16 %v3322, 0
        %v3339 = vmax.bf16 %v3323, 0
        %v3340 = vmax.bf16 %v3324, 0
        %v3341 = vmax.bf16 %v3325, 0
        %v3342 = vmax.bf16 %v3326, 0
        %v3343 = vld [vmem:[#allocation11] sm:$0xff]
        %v3344 = vld [vmem:[#allocation11 + $0x8] sm:$0xff]
        %v3345 = vld [vmem:[#allocation11 + $0x10] sm:$0xff]
        %v3346 = vld [vmem:[#allocation11 + $0x18] sm:$0xff]
        %v3347 = vld [vmem:[#allocation11 + $0x20] sm:$0xff]
        %v3348 = vld [vmem:[#allocation11 + $0x28] sm:$0xff]
        %v3349 = vld [vmem:[#allocation11 + $0x30] sm:$0xff]
        %v3350 = vld [vmem:[#allocation11 + $0x38] sm:$0xff]
        %v3351 = vld [vmem:[#allocation11 + $0x40] sm:$0xff]
        %v3352 = vld [vmem:[#allocation11 + $0x48] sm:$0xff]
        %v3353 = vld [vmem:[#allocation11 + $0x50] sm:$0xff]
        %v3354 = vld [vmem:[#allocation11 + $0x58] sm:$0xff]
        %v3355 = vld [vmem:[#allocation11 + $0x60] sm:$0xff]
        %v3356 = vld [vmem:[#allocation11 + $0x68] sm:$0xff]
        %v3357 = vld [vmem:[#allocation11 + $0x70] sm:$0xff]
        %v3358 = vld [vmem:[#allocation11 + $0x78] sm:$0xff]
        %v3359 = vld [vmem:[%s10] sm:$0x3]
        %v3361 = vlaneseq
        %v3362 = vshrl.u32 %v3361, 7
        %v3363 = vsub.s32 0, %v3362
        %v3364 = vrot.slane %v3359, %v3363
        %v3365 = vlaneseq
        %v3366 = vshrl.u32 %v3365, 7
        %v3367 = vsub.s32 1, %v3366
        %v3368 = vrot.slane %v3359, %v3367
        %v3387 = vunpack.c.l.b16 %v3343
        %v3388 = vunpack.c.h.b16 %v3343
        %v3389 = vunpack.c.l.b16 %v3344
        %v3390 = vunpack.c.h.b16 %v3344
        %v3391 = vunpack.c.l.b16 %v3345
        %v3392 = vunpack.c.h.b16 %v3345
        %v3393 = vunpack.c.l.b16 %v3346
        %v3394 = vunpack.c.h.b16 %v3346
        %v3395 = vunpack.c.l.b16 %v3347
        %v3396 = vunpack.c.h.b16 %v3347
        %v3397 = vunpack.c.l.b16 %v3348
        %v3398 = vunpack.c.h.b16 %v3348
        %v3399 = vunpack.c.l.b16 %v3349
        %v3400 = vunpack.c.h.b16 %v3349
        %v3401 = vunpack.c.l.b16 %v3350
        %v3402 = vunpack.c.h.b16 %v3350
        %v3403 = vunpack.c.l.b16 %v3351
        %v3404 = vunpack.c.h.b16 %v3351
        %v3405 = vunpack.c.l.b16 %v3352
        %v3406 = vunpack.c.h.b16 %v3352
        %v3407 = vunpack.c.l.b16 %v3353
        %v3408 = vunpack.c.h.b16 %v3353
        %v3409 = vunpack.c.l.b16 %v3354
        %v3410 = vunpack.c.h.b16 %v3354
        %v3411 = vunpack.c.l.b16 %v3355
        %v3412 = vunpack.c.h.b16 %v3355
        %v3413 = vunpack.c.l.b16 %v3356
        %v3414 = vunpack.c.h.b16 %v3356
        %v3415 = vunpack.c.l.b16 %v3357
        %v3416 = vunpack.c.h.b16 %v3357
        %v3417 = vunpack.c.l.b16 %v3358
        %v3418 = vunpack.c.h.b16 %v3358
        %v3419 = vpack.c.b16 %v3389, %v3387
        %v3420 = vpack.c.b16 %v3390, %v3388
        %v3421 = vpack.c.b16 %v3393, %v3391
        %v3422 = vpack.c.b16 %v3394, %v3392
        %v3423 = vpack.c.b16 %v3397, %v3395
        %v3424 = vpack.c.b16 %v3398, %v3396
        %v3425 = vpack.c.b16 %v3401, %v3399
        %v3426 = vpack.c.b16 %v3402, %v3400
        %v3427 = vpack.c.b16 %v3405, %v3403
        %v3428 = vpack.c.b16 %v3406, %v3404
        %v3429 = vpack.c.b16 %v3409, %v3407
        %v3430 = vpack.c.b16 %v3410, %v3408
        %v3431 = vpack.c.b16 %v3413, %v3411
        %v3432 = vpack.c.b16 %v3414, %v3412
        %v3433 = vpack.c.b16 %v3417, %v3415
        %v3434 = vpack.c.b16 %v3418, %v3416
        %3451 = vmatprep.subr.bf16.mxu0 %v3420
        %3452 = vmatpush1.bf16.msra.mxu0 %v3419
        %3453 = vmatprep.subr.bf16.mxu0 %v3422
        %3454 = vmatpush1.bf16.msra.mxu0 %v3421
        %3455 = vmatprep.subr.bf16.mxu0 %v3424
        %3456 = vmatpush1.bf16.msra.mxu0 %v3423
        %3457 = vmatprep.subr.bf16.mxu0 %v3426
        %3458 = vmatpush1.bf16.msra.mxu0 %v3425
        %3459 = vmatprep.subr.bf16.mxu0 %v3428
        %3460 = vmatpush1.bf16.msra.mxu0 %v3427
        %3461 = vmatprep.subr.bf16.mxu0 %v3430
        %3462 = vmatpush1.bf16.msra.mxu0 %v3429
        %3463 = vmatprep.subr.bf16.mxu0 %v3432
        %3464 = vmatpush1.bf16.msra.mxu0 %v3431
        %3465 = vmatprep.subr.bf16.mxu0 %v3434
        %3466 = vmatpush1.bf16.msra.mxu0 %v3433
        %3467 = vmatprep.subr.bf16.mxu0 0
        %3468 = vmatpush1.bf16.msra.mxu0 0
        %3469 = vmatprep.subr.bf16.mxu0 0
        %3470 = vmatpush1.bf16.msra.mxu0 0
        %3471 = vmatprep.subr.bf16.mxu0 0
        %3472 = vmatpush1.bf16.msra.mxu0 0
        %3473 = vmatprep.subr.bf16.mxu0 0
        %3474 = vmatpush1.bf16.msra.mxu0 0
        %3475 = vmatprep.subr.bf16.mxu0 0
        %3476 = vmatpush1.bf16.msra.mxu0 0
        %3477 = vmatprep.subr.bf16.mxu0 0
        %3478 = vmatpush1.bf16.msra.mxu0 0
        %3479 = vmatprep.subr.bf16.mxu0 0
        %3480 = vmatpush1.bf16.msra.mxu0 0
        %3481 = vmatprep.subr.bf16.mxu0 0
        %3482 = vmatpush1.bf16.msra.mxu0 0
        %3483 = vmatprep.mubr.bf16.mxu0 0
        %3484 = vmatmul.mubr.bf16.gmra.mrb[0].mxu0 %v3327
        %v3485 = vpop.f32.mrb[0].mxu0
        %v3486 = vadd.f32 %v3364, %v3485
        %v3487 = vpop.f32.mrb[0].mxu0
        %v3488 = vadd.f32 %v3368, %v3487
        %v3489 = vpop.f32.mrb[0].mxu0
        %v3490 = vadd.f32 %v3364, %v3489
        %v3491 = vpop.f32.mrb[0].mxu0
        %v3492 = vadd.f32 %v3368, %v3491
        %3493 = vmatprep.mubr.bf16.mxu0 0
        %3494 = vmatmul.mubr.bf16.gmra.mrb[0].mxu0 %v3328
        %v3495 = vpop.f32.mrb[0].mxu0
        %v3496 = vadd.f32 %v3364, %v3495
        %v3497 = vpop.f32.mrb[0].mxu0
        %v3498 = vadd.f32 %v3368, %v3497
        %v3499 = vpop.f32.mrb[0].mxu0
        %v3500 = vadd.f32 %v3364, %v3499
        %v3501 = vpop.f32.mrb[0].mxu0
        %v3502 = vadd.f32 %v3368, %v3501
        %3503 = vmatprep.mubr.bf16.mxu0 0
        %3504 = vmatmul.mubr.bf16.gmra.mrb[0].mxu0 %v3329
        %v3505 = vpop.f32.mrb[0].mxu0
        %v3506 = vadd.f32 %v3364, %v3505
        %v3507 = vpop.f32.mrb[0].mxu0
        %v3508 = vadd.f32 %v3368, %v3507
        %v3509 = vpop.f32.mrb[0].mxu0
        %v3510 = vadd.f32 %v3364, %v3509
        %v3511 = vpop.f32.mrb[0].mxu0
        %v3512 = vadd.f32 %v3368, %v3511
        %3513 = vmatprep.mubr.bf16.mxu0 0
        %3514 = vmatmul.mubr.bf16.gmra.mrb[0].mxu0 %v3330
        %v3515 = vpop.f32.mrb[0].mxu0
        %v3516 = vadd.f32 %v3364, %v3515
        %v3517 = vpop.f32.mrb[0].mxu0
        %v3518 = vadd.f32 %v3368, %v3517
        %v3519 = vpop.f32.mrb[0].mxu0
        %v3520 = vadd.f32 %v3364, %v3519
        %v3521 = vpop.f32.mrb[0].mxu0
        %v3522 = vadd.f32 %v3368, %v3521
        %3523 = vmatprep.mubr.bf16.mxu0 0
        %3524 = vmatmul.mubr.bf16.gmra.mrb[0].mxu0 %v3331
        %v3525 = vpop.f32.mrb[0].mxu0
        %v3526 = vadd.f32 %v3364, %v3525
        %v3527 = vpop.f32.mrb[0].mxu0
        %v3528 = vadd.f32 %v3368, %v3527
        %v3529 = vpop.f32.mrb[0].mxu0
        %v3530 = vadd.f32 %v3364, %v3529
        %v3531 = vpop.f32.mrb[0].mxu0
        %v3532 = vadd.f32 %v3368, %v3531
        %3533 = vmatprep.mubr.bf16.mxu0 0
        %3534 = vmatmul.mubr.bf16.gmra.mrb[0].mxu0 %v3332
        %v3535 = vpop.f32.mrb[0].mxu0
        %v3536 = vadd.f32 %v3364, %v3535
        %v3537 = vpop.f32.mrb[0].mxu0
        %v3538 = vadd.f32 %v3368, %v3537
        %v3539 = vpop.f32.mrb[0].mxu0
        %v3540 = vadd.f32 %v3364, %v3539
        %v3541 = vpop.f32.mrb[0].mxu0
        %v3542 = vadd.f32 %v3368, %v3541
        %3543 = vmatprep.mubr.bf16.mxu0 0
        %3544 = vmatmul.mubr.bf16.gmra.mrb[0].mxu0 %v3333
        %v3545 = vpop.f32.mrb[0].mxu0
        %v3546 = vadd.f32 %v3364, %v3545
        %v3547 = vpop.f32.mrb[0].mxu0
        %v3548 = vadd.f32 %v3368, %v3547
        %v3549 = vpop.f32.mrb[0].mxu0
        %v3550 = vadd.f32 %v3364, %v3549
        %v3551 = vpop.f32.mrb[0].mxu0
        %v3552 = vadd.f32 %v3368, %v3551
        %3553 = vmatprep.mubr.bf16.mxu0 0
        %3554 = vmatmul.mubr.bf16.gmra.mrb[0].mxu0 %v3334
        %v3555 = vpop.f32.mrb[0].mxu0
        %v3556 = vadd.f32 %v3364, %v3555
        %v3557 = vpop.f32.mrb[0].mxu0
        %v3558 = vadd.f32 %v3368, %v3557
        %v3559 = vpop.f32.mrb[0].mxu0
        %v3560 = vadd.f32 %v3364, %v3559
        %v3561 = vpop.f32.mrb[0].mxu0
        %v3562 = vadd.f32 %v3368, %v3561
        %3563 = vmatprep.mubr.bf16.mxu0 0
        %3564 = vmatmul.mubr.bf16.gmra.mrb[0].mxu0 %v3335
        %v3565 = vpop.f32.mrb[0].mxu0
        %v3566 = vadd.f32 %v3364, %v3565
        %v3567 = vpop.f32.mrb[0].mxu0
        %v3568 = vadd.f32 %v3368, %v3567
        %v3569 = vpop.f32.mrb[0].mxu0
        %v3570 = vadd.f32 %v3364, %v3569
        %v3571 = vpop.f32.mrb[0].mxu0
        %v3572 = vadd.f32 %v3368, %v3571
        %3573 = vmatprep.mubr.bf16.mxu0 0
        %3574 = vmatmul.mubr.bf16.gmra.mrb[0].mxu0 %v3336
        %v3575 = vpop.f32.mrb[0].mxu0
        %v3576 = vadd.f32 %v3364, %v3575
        %v3577 = vpop.f32.mrb[0].mxu0
        %v3578 = vadd.f32 %v3368, %v3577
        %v3579 = vpop.f32.mrb[0].mxu0
        %v3580 = vadd.f32 %v3364, %v3579
        %v3581 = vpop.f32.mrb[0].mxu0
        %v3582 = vadd.f32 %v3368, %v3581
        %3583 = vmatprep.mubr.bf16.mxu0 0
        %3584 = vmatmul.mubr.bf16.gmra.mrb[0].mxu0 %v3337
        %v3585 = vpop.f32.mrb[0].mxu0
        %v3586 = vadd.f32 %v3364, %v3585
        %v3587 = vpop.f32.mrb[0].mxu0
        %v3588 = vadd.f32 %v3368, %v3587
        %v3589 = vpop.f32.mrb[0].mxu0
        %v3590 = vadd.f32 %v3364, %v3589
        %v3591 = vpop.f32.mrb[0].mxu0
        %v3592 = vadd.f32 %v3368, %v3591
        %3593 = vmatprep.mubr.bf16.mxu0 0
        %3594 = vmatmul.mubr.bf16.gmra.mrb[0].mxu0 %v3338
        %v3595 = vpop.f32.mrb[0].mxu0
        %v3596 = vadd.f32 %v3364, %v3595
        %v3597 = vpop.f32.mrb[0].mxu0
        %v3598 = vadd.f32 %v3368, %v3597
        %v3599 = vpop.f32.mrb[0].mxu0
        %v3600 = vadd.f32 %v3364, %v3599
        %v3601 = vpop.f32.mrb[0].mxu0
        %v3602 = vadd.f32 %v3368, %v3601
        %3603 = vmatprep.mubr.bf16.mxu0 0
        %3604 = vmatmul.mubr.bf16.gmra.mrb[0].mxu0 %v3339
        %v3605 = vpop.f32.mrb[0].mxu0
        %v3606 = vadd.f32 %v3364, %v3605
        %v3607 = vpop.f32.mrb[0].mxu0
        %v3608 = vadd.f32 %v3368, %v3607
        %v3609 = vpop.f32.mrb[0].mxu0
        %v3610 = vadd.f32 %v3364, %v3609
        %v3611 = vpop.f32.mrb[0].mxu0
        %v3612 = vadd.f32 %v3368, %v3611
        %3613 = vmatprep.mubr.bf16.mxu0 0
        %3614 = vmatmul.mubr.bf16.gmra.mrb[0].mxu0 %v3340
        %v3615 = vpop.f32.mrb[0].mxu0
        %v3616 = vadd.f32 %v3364, %v3615
        %v3617 = vpop.f32.mrb[0].mxu0
        %v3618 = vadd.f32 %v3368, %v3617
        %v3619 = vpop.f32.mrb[0].mxu0
        %v3620 = vadd.f32 %v3364, %v3619
        %v3621 = vpop.f32.mrb[0].mxu0
        %v3622 = vadd.f32 %v3368, %v3621
        %3623 = vmatprep.mubr.bf16.mxu0 0
        %3624 = vmatmul.mubr.bf16.gmra.mrb[0].mxu0 %v3341
        %v3625 = vpop.f32.mrb[0].mxu0
        %v3626 = vadd.f32 %v3364, %v3625
        %v3627 = vpop.f32.mrb[0].mxu0
        %v3628 = vadd.f32 %v3368, %v3627
        %v3629 = vpop.f32.mrb[0].mxu0
        %v3630 = vadd.f32 %v3364, %v3629
        %v3631 = vpop.f32.mrb[0].mxu0
        %v3632 = vadd.f32 %v3368, %v3631
        %3633 = vmatprep.mubr.bf16.mxu0 0
        %3634 = vmatmul.mubr.bf16.gmra.mrb[0].mxu0 %v3342
        %v3635 = vpop.f32.mrb[0].mxu0
        %v3636 = vadd.f32 %v3364, %v3635
        %v3637 = vpop.f32.mrb[0].mxu0
        %v3638 = vadd.f32 %v3368, %v3637
        %v3639 = vpop.f32.mrb[0].mxu0
        %v3640 = vadd.f32 %v3364, %v3639
        %v3641 = vpop.f32.mrb[0].mxu0
        %v3642 = vadd.f32 %v3368, %v3641
        %3643 = vdwg.mxu0
        %v3644 = vpack.c.bf16 %v3490, %v3486
        %v3645 = vpack.c.bf16 %v3492, %v3488
        %v3646 = vpack.c.bf16 %v3500, %v3496
        %v3647 = vpack.c.bf16 %v3502, %v3498
        %v3648 = vpack.c.bf16 %v3510, %v3506
        %v3649 = vpack.c.bf16 %v3512, %v3508
        %v3650 = vpack.c.bf16 %v3520, %v3516
        %v3651 = vpack.c.bf16 %v3522, %v3518
        %v3652 = vpack.c.bf16 %v3530, %v3526
        %v3653 = vpack.c.bf16 %v3532, %v3528
        %v3654 = vpack.c.bf16 %v3540, %v3536
        %v3655 = vpack.c.bf16 %v3542, %v3538
        %v3656 = vpack.c.bf16 %v3550, %v3546
        %v3657 = vpack.c.bf16 %v3552, %v3548
        %v3658 = vpack.c.bf16 %v3560, %v3556
        %v3659 = vpack.c.bf16 %v3562, %v3558
        %v3660 = vpack.c.bf16 %v3570, %v3566
        %v3661 = vpack.c.bf16 %v3572, %v3568
        %v3662 = vpack.c.bf16 %v3580, %v3576
        %v3663 = vpack.c.bf16 %v3582, %v3578
        %v3664 = vpack.c.bf16 %v3590, %v3586
        %v3665 = vpack.c.bf16 %v3592, %v3588
        %v3666 = vpack.c.bf16 %v3600, %v3596
        %v3667 = vpack.c.bf16 %v3602, %v3598
        %v3668 = vpack.c.bf16 %v3610, %v3606
        %v3669 = vpack.c.bf16 %v3612, %v3608
        %v3670 = vpack.c.bf16 %v3620, %v3616
        %v3671 = vpack.c.bf16 %v3622, %v3618
        %v3672 = vpack.c.bf16 %v3630, %v3626
        %v3673 = vpack.c.bf16 %v3632, %v3628
        %v3674 = vpack.c.bf16 %v3640, %v3636
        %v3675 = vpack.c.bf16 %v3642, %v3638
        %v3676 = vmax.bf16 %v3644, 0
        %v3677 = vmax.bf16 %v3645, 0
        %v3678 = vmax.bf16 %v3646, 0
        %v3679 = vmax.bf16 %v3647, 0
        %v3680 = vmax.bf16 %v3648, 0
        %v3681 = vmax.bf16 %v3649, 0
        %v3682 = vmax.bf16 %v3650, 0
        %v3683 = vmax.bf16 %v3651, 0
        %v3684 = vmax.bf16 %v3652, 0
        %v3685 = vmax.bf16 %v3653, 0
        %v3686 = vmax.bf16 %v3654, 0
        %v3687 = vmax.bf16 %v3655, 0
        %v3688 = vmax.bf16 %v3656, 0
        %v3689 = vmax.bf16 %v3657, 0
        %v3690 = vmax.bf16 %v3658, 0
        %v3691 = vmax.bf16 %v3659, 0
        %v3692 = vmax.bf16 %v3660, 0
        %v3693 = vmax.bf16 %v3661, 0
        %v3694 = vmax.bf16 %v3662, 0
        %v3695 = vmax.bf16 %v3663, 0
        %v3696 = vmax.bf16 %v3664, 0
        %v3697 = vmax.bf16 %v3665, 0
        %v3698 = vmax.bf16 %v3666, 0
        %v3699 = vmax.bf16 %v3667, 0
        %v3700 = vmax.bf16 %v3668, 0
        %v3701 = vmax.bf16 %v3669, 0
        %v3702 = vmax.bf16 %v3670, 0
        %v3703 = vmax.bf16 %v3671, 0
        %v3704 = vmax.bf16 %v3672, 0
        %v3705 = vmax.bf16 %v3673, 0
        %v3706 = vmax.bf16 %v3674, 0
        %v3707 = vmax.bf16 %v3675, 0
        %v3708 = vld [vmem:[#allocation13] sm:$0xff]
        %v3709 = vld [vmem:[#allocation13 + $0x8] sm:$0xff]
        %v3710 = vld [vmem:[#allocation13 + $0x10] sm:$0xff]
        %v3711 = vld [vmem:[#allocation13 + $0x18] sm:$0xff]
        %v3712 = vld [vmem:[#allocation13 + $0x20] sm:$0xff]
        %v3713 = vld [vmem:[#allocation13 + $0x28] sm:$0xff]
        %v3714 = vld [vmem:[#allocation13 + $0x30] sm:$0xff]
        %v3715 = vld [vmem:[#allocation13 + $0x38] sm:$0xff]
        %v3716 = vld [vmem:[#allocation13 + $0x40] sm:$0xff]
        %v3717 = vld [vmem:[#allocation13 + $0x48] sm:$0xff]
        %v3718 = vld [vmem:[#allocation13 + $0x50] sm:$0xff]
        %v3719 = vld [vmem:[#allocation13 + $0x58] sm:$0xff]
        %v3720 = vld [vmem:[#allocation13 + $0x60] sm:$0xff]
        %v3721 = vld [vmem:[#allocation13 + $0x68] sm:$0xff]
        %v3722 = vld [vmem:[#allocation13 + $0x70] sm:$0xff]
        %v3723 = vld [vmem:[#allocation13 + $0x78] sm:$0xff]
        %v3724 = vld [vmem:[#allocation13 + $0x80] sm:$0xff]
        %v3725 = vld [vmem:[#allocation13 + $0x88] sm:$0xff]
        %v3726 = vld [vmem:[#allocation13 + $0x90] sm:$0xff]
        %v3727 = vld [vmem:[#allocation13 + $0x98] sm:$0xff]
        %v3728 = vld [vmem:[#allocation13 + $0xa0] sm:$0xff]
        %v3729 = vld [vmem:[#allocation13 + $0xa8] sm:$0xff]
        %v3730 = vld [vmem:[#allocation13 + $0xb0] sm:$0xff]
        %v3731 = vld [vmem:[#allocation13 + $0xb8] sm:$0xff]
        %v3732 = vld [vmem:[#allocation13 + $0xc0] sm:$0xff]
        %v3733 = vld [vmem:[#allocation13 + $0xc8] sm:$0xff]
        %v3734 = vld [vmem:[#allocation13 + $0xd0] sm:$0xff]
        %v3735 = vld [vmem:[#allocation13 + $0xd8] sm:$0xff]
        %v3736 = vld [vmem:[#allocation13 + $0xe0] sm:$0xff]
        %v3737 = vld [vmem:[#allocation13 + $0xe8] sm:$0xff]
        %v3738 = vld [vmem:[#allocation13 + $0xf0] sm:$0xff]
        %v3739 = vld [vmem:[#allocation13 + $0xf8] sm:$0xff]
        %v3740 = vld [vmem:[#allocation13 + $0x100] sm:$0xff]
        %v3741 = vld [vmem:[#allocation13 + $0x108] sm:$0xff]
        %v3742 = vld [vmem:[#allocation13 + $0x110] sm:$0xff]
        %v3743 = vld [vmem:[#allocation13 + $0x118] sm:$0xff]
        %v3744 = vld [vmem:[#allocation13 + $0x120] sm:$0xff]
        %v3745 = vld [vmem:[#allocation13 + $0x128] sm:$0xff]
        %v3746 = vld [vmem:[#allocation13 + $0x130] sm:$0xff]
        %v3747 = vld [vmem:[#allocation13 + $0x138] sm:$0xff]
        %v3748 = vld [vmem:[#allocation13 + $0x140] sm:$0xff]
        %v3749 = vld [vmem:[#allocation13 + $0x148] sm:$0xff]
        %v3750 = vld [vmem:[#allocation13 + $0x150] sm:$0xff]
        %v3751 = vld [vmem:[#allocation13 + $0x158] sm:$0xff]
        %v3752 = vld [vmem:[#allocation13 + $0x160] sm:$0xff]
        %v3753 = vld [vmem:[#allocation13 + $0x168] sm:$0xff]
        %v3754 = vld [vmem:[#allocation13 + $0x170] sm:$0xff]
        %v3755 = vld [vmem:[#allocation13 + $0x178] sm:$0xff]
        %v3756 = vld [vmem:[#allocation13 + $0x180] sm:$0xff]
        %v3757 = vld [vmem:[#allocation13 + $0x188] sm:$0xff]
        %v3758 = vld [vmem:[#allocation13 + $0x190] sm:$0xff]
        %v3759 = vld [vmem:[#allocation13 + $0x198] sm:$0xff]
        %v3760 = vld [vmem:[#allocation13 + $0x1a0] sm:$0xff]
        %v3761 = vld [vmem:[#allocation13 + $0x1a8] sm:$0xff]
        %v3762 = vld [vmem:[#allocation13 + $0x1b0] sm:$0xff]
        %v3763 = vld [vmem:[#allocation13 + $0x1b8] sm:$0xff]
        %v3764 = vld [vmem:[#allocation13 + $0x1c0] sm:$0xff]
        %v3765 = vld [vmem:[#allocation13 + $0x1c8] sm:$0xff]
        %v3766 = vld [vmem:[#allocation13 + $0x1d0] sm:$0xff]
        %v3767 = vld [vmem:[#allocation13 + $0x1d8] sm:$0xff]
        %v3768 = vld [vmem:[#allocation13 + $0x1e0] sm:$0xff]
        %v3769 = vld [vmem:[#allocation13 + $0x1e8] sm:$0xff]
        %v3770 = vld [vmem:[#allocation13 + $0x1f0] sm:$0xff]
        %v3771 = vld [vmem:[#allocation13 + $0x1f8] sm:$0xff]
        %v3772 = vld [vmem:[%s12] sm:$0xf]
        %v3774 = vlaneseq
        %v3775 = vshrl.u32 %v3774, 7
        %v3776 = vsub.s32 0, %v3775
        %v3777 = vrot.slane %v3772, %v3776
        %v3778 = vlaneseq
        %v3779 = vshrl.u32 %v3778, 7
        %v3780 = vsub.s32 1, %v3779
        %v3781 = vrot.slane %v3772, %v3780
        %v3782 = vlaneseq
        %v3783 = vshrl.u32 %v3782, 7
        %v3784 = vsub.s32 2, %v3783
        %v3785 = vrot.slane %v3772, %v3784
        %v3786 = vlaneseq
        %v3787 = vshrl.u32 %v3786, 7
        %v3788 = vsub.s32 3, %v3787
        %v3789 = vrot.slane %v3772, %v3788
        %v3858 = vunpack.c.l.b16 %v3708
        %v3859 = vunpack.c.h.b16 %v3708
        %v3860 = vunpack.c.l.b16 %v3709
        %v3861 = vunpack.c.h.b16 %v3709
        %v3862 = vunpack.c.l.b16 %v3710
        %v3863 = vunpack.c.h.b16 %v3710
        %v3864 = vunpack.c.l.b16 %v3711
        %v3865 = vunpack.c.h.b16 %v3711
        %v3866 = vunpack.c.l.b16 %v3712
        %v3867 = vunpack.c.h.b16 %v3712
        %v3868 = vunpack.c.l.b16 %v3713
        %v3869 = vunpack.c.h.b16 %v3713
        %v3870 = vunpack.c.l.b16 %v3714
        %v3871 = vunpack.c.h.b16 %v3714
        %v3872 = vunpack.c.l.b16 %v3715
        %v3873 = vunpack.c.h.b16 %v3715
        %v3874 = vunpack.c.l.b16 %v3716
        %v3875 = vunpack.c.h.b16 %v3716
        %v3876 = vunpack.c.l.b16 %v3717
        %v3877 = vunpack.c.h.b16 %v3717
        %v3878 = vunpack.c.l.b16 %v3718
        %v3879 = vunpack.c.h.b16 %v3718
        %v3880 = vunpack.c.l.b16 %v3719
        %v3881 = vunpack.c.h.b16 %v3719
        %v3882 = vunpack.c.l.b16 %v3720
        %v3883 = vunpack.c.h.b16 %v3720
        %v3884 = vunpack.c.l.b16 %v3721
        %v3885 = vunpack.c.h.b16 %v3721
        %v3886 = vunpack.c.l.b16 %v3722
        %v3887 = vunpack.c.h.b16 %v3722
        %v3888 = vunpack.c.l.b16 %v3723
        %v3889 = vunpack.c.h.b16 %v3723
        %v3890 = vunpack.c.l.b16 %v3724
        %v3891 = vunpack.c.h.b16 %v3724
        %v3892 = vunpack.c.l.b16 %v3725
        %v3893 = vunpack.c.h.b16 %v3725
        %v3894 = vunpack.c.l.b16 %v3726
        %v3895 = vunpack.c.h.b16 %v3726
        %v3896 = vunpack.c.l.b16 %v3727
        %v3897 = vunpack.c.h.b16 %v3727
        %v3898 = vunpack.c.l.b16 %v3728
        %v3899 = vunpack.c.h.b16 %v3728
        %v3900 = vunpack.c.l.b16 %v3729
        %v3901 = vunpack.c.h.b16 %v3729
        %v3902 = vunpack.c.l.b16 %v3730
        %v3903 = vunpack.c.h.b16 %v3730
        %v3904 = vunpack.c.l.b16 %v3731
        %v3905 = vunpack.c.h.b16 %v3731
        %v3906 = vunpack.c.l.b16 %v3732
        %v3907 = vunpack.c.h.b16 %v3732
        %v3908 = vunpack.c.l.b16 %v3733
        %v3909 = vunpack.c.h.b16 %v3733
        %v3910 = vunpack.c.l.b16 %v3734
        %v3911 = vunpack.c.h.b16 %v3734
        %v3912 = vunpack.c.l.b16 %v3735
        %v3913 = vunpack.c.h.b16 %v3735
        %v3914 = vunpack.c.l.b16 %v3736
        %v3915 = vunpack.c.h.b16 %v3736
        %v3916 = vunpack.c.l.b16 %v3737
        %v3917 = vunpack.c.h.b16 %v3737
        %v3918 = vunpack.c.l.b16 %v3738
        %v3919 = vunpack.c.h.b16 %v3738
        %v3920 = vunpack.c.l.b16 %v3739
        %v3921 = vunpack.c.h.b16 %v3739
        %v3922 = vunpack.c.l.b16 %v3740
        %v3923 = vunpack.c.h.b16 %v3740
        %v3924 = vunpack.c.l.b16 %v3741
        %v3925 = vunpack.c.h.b16 %v3741
        %v3926 = vunpack.c.l.b16 %v3742
        %v3927 = vunpack.c.h.b16 %v3742
        %v3928 = vunpack.c.l.b16 %v3743
        %v3929 = vunpack.c.h.b16 %v3743
        %v3930 = vunpack.c.l.b16 %v3744
        %v3931 = vunpack.c.h.b16 %v3744
        %v3932 = vunpack.c.l.b16 %v3745
        %v3933 = vunpack.c.h.b16 %v3745
        %v3934 = vunpack.c.l.b16 %v3746
        %v3935 = vunpack.c.h.b16 %v3746
        %v3936 = vunpack.c.l.b16 %v3747
        %v3937 = vunpack.c.h.b16 %v3747
        %v3938 = vunpack.c.l.b16 %v3748
        %v3939 = vunpack.c.h.b16 %v3748
        %v3940 = vunpack.c.l.b16 %v3749
        %v3941 = vunpack.c.h.b16 %v3749
        %v3942 = vunpack.c.l.b16 %v3750
        %v3943 = vunpack.c.h.b16 %v3750
        %v3944 = vunpack.c.l.b16 %v3751
        %v3945 = vunpack.c.h.b16 %v3751
        %v3946 = vunpack.c.l.b16 %v3752
        %v3947 = vunpack.c.h.b16 %v3752
        %v3948 = vunpack.c.l.b16 %v3753
        %v3949 = vunpack.c.h.b16 %v3753
        %v3950 = vunpack.c.l.b16 %v3754
        %v3951 = vunpack.c.h.b16 %v3754
        %v3952 = vunpack.c.l.b16 %v3755
        %v3953 = vunpack.c.h.b16 %v3755
        %v3954 = vunpack.c.l.b16 %v3756
        %v3955 = vunpack.c.h.b16 %v3756
        %v3956 = vunpack.c.l.b16 %v3757
        %v3957 = vunpack.c.h.b16 %v3757
        %v3958 = vunpack.c.l.b16 %v3758
        %v3959 = vunpack.c.h.b16 %v3758
        %v3960 = vunpack.c.l.b16 %v3759
        %v3961 = vunpack.c.h.b16 %v3759
        %v3962 = vunpack.c.l.b16 %v3760
        %v3963 = vunpack.c.h.b16 %v3760
        %v3964 = vunpack.c.l.b16 %v3761
        %v3965 = vunpack.c.h.b16 %v3761
        %v3966 = vunpack.c.l.b16 %v3762
        %v3967 = vunpack.c.h.b16 %v3762
        %v3968 = vunpack.c.l.b16 %v3763
        %v3969 = vunpack.c.h.b16 %v3763
        %v3970 = vunpack.c.l.b16 %v3764
        %v3971 = vunpack.c.h.b16 %v3764
        %v3972 = vunpack.c.l.b16 %v3765
        %v3973 = vunpack.c.h.b16 %v3765
        %v3974 = vunpack.c.l.b16 %v3766
        %v3975 = vunpack.c.h.b16 %v3766
        %v3976 = vunpack.c.l.b16 %v3767
        %v3977 = vunpack.c.h.b16 %v3767
        %v3978 = vunpack.c.l.b16 %v3768
        %v3979 = vunpack.c.h.b16 %v3768
        %v3980 = vunpack.c.l.b16 %v3769
        %v3981 = vunpack.c.h.b16 %v3769
        %v3982 = vunpack.c.l.b16 %v3770
        %v3983 = vunpack.c.h.b16 %v3770
        %v3984 = vunpack.c.l.b16 %v3771
        %v3985 = vunpack.c.h.b16 %v3771
        %v3986 = vpack.c.b16 %v3862, %v3858
        %v3987 = vpack.c.b16 %v3863, %v3859
        %v3988 = vpack.c.b16 %v3864, %v3860
        %v3989 = vpack.c.b16 %v3865, %v3861
        %v3990 = vpack.c.b16 %v3870, %v3866
        %v3991 = vpack.c.b16 %v3871, %v3867
        %v3992 = vpack.c.b16 %v3872, %v3868
        %v3993 = vpack.c.b16 %v3873, %v3869
        %v3994 = vpack.c.b16 %v3878, %v3874
        %v3995 = vpack.c.b16 %v3879, %v3875
        %v3996 = vpack.c.b16 %v3880, %v3876
        %v3997 = vpack.c.b16 %v3881, %v3877
        %v3998 = vpack.c.b16 %v3886, %v3882
        %v3999 = vpack.c.b16 %v3887, %v3883
        %v4000 = vpack.c.b16 %v3888, %v3884
        %v4001 = vpack.c.b16 %v3889, %v3885
        %v4002 = vpack.c.b16 %v3894, %v3890
        %v4003 = vpack.c.b16 %v3895, %v3891
        %v4004 = vpack.c.b16 %v3896, %v3892
        %v4005 = vpack.c.b16 %v3897, %v3893
        %v4006 = vpack.c.b16 %v3902, %v3898
        %v4007 = vpack.c.b16 %v3903, %v3899
        %v4008 = vpack.c.b16 %v3904, %v3900
        %v4009 = vpack.c.b16 %v3905, %v3901
        %v4010 = vpack.c.b16 %v3910, %v3906
        %v4011 = vpack.c.b16 %v3911, %v3907
        %v4012 = vpack.c.b16 %v3912, %v3908
        %v4013 = vpack.c.b16 %v3913, %v3909
        %v4014 = vpack.c.b16 %v3918, %v3914
        %v4015 = vpack.c.b16 %v3919, %v3915
        %v4016 = vpack.c.b16 %v3920, %v3916
        %v4017 = vpack.c.b16 %v3921, %v3917
        %v4018 = vpack.c.b16 %v3926, %v3922
        %v4019 = vpack.c.b16 %v3927, %v3923
        %v4020 = vpack.c.b16 %v3928, %v3924
        %v4021 = vpack.c.b16 %v3929, %v3925
        %v4022 = vpack.c.b16 %v3934, %v3930
        %v4023 = vpack.c.b16 %v3935, %v3931
        %v4024 = vpack.c.b16 %v3936, %v3932
        %v4025 = vpack.c.b16 %v3937, %v3933
        %v4026 = vpack.c.b16 %v3942, %v3938
        %v4027 = vpack.c.b16 %v3943, %v3939
        %v4028 = vpack.c.b16 %v3944, %v3940
        %v4029 = vpack.c.b16 %v3945, %v3941
        %v4030 = vpack.c.b16 %v3950, %v3946
        %v4031 = vpack.c.b16 %v3951, %v3947
        %v4032 = vpack.c.b16 %v3952, %v3948
        %v4033 = vpack.c.b16 %v3953, %v3949
        %v4034 = vpack.c.b16 %v3958, %v3954
        %v4035 = vpack.c.b16 %v3959, %v3955
        %v4036 = vpack.c.b16 %v3960, %v3956
        %v4037 = vpack.c.b16 %v3961, %v3957
        %v4038 = vpack.c.b16 %v3966, %v3962
        %v4039 = vpack.c.b16 %v3967, %v3963
        %v4040 = vpack.c.b16 %v3968, %v3964
        %v4041 = vpack.c.b16 %v3969, %v3965
        %v4042 = vpack.c.b16 %v3974, %v3970
        %v4043 = vpack.c.b16 %v3975, %v3971
        %v4044 = vpack.c.b16 %v3976, %v3972
        %v4045 = vpack.c.b16 %v3977, %v3973
        %v4046 = vpack.c.b16 %v3982, %v3978
        %v4047 = vpack.c.b16 %v3983, %v3979
        %v4048 = vpack.c.b16 %v3984, %v3980
        %v4049 = vpack.c.b16 %v3985, %v3981
        %4114 = vmatprep.subr.bf16.mxu0 %v3987
        %4115 = vmatpush1.bf16.msra.mxu0 %v3986
        %4116 = vmatprep.subr.bf16.mxu0 %v3991
        %4117 = vmatpush1.bf16.msra.mxu0 %v3990
        %4118 = vmatprep.subr.bf16.mxu0 %v3995
        %4119 = vmatpush1.bf16.msra.mxu0 %v3994
        %4120 = vmatprep.subr.bf16.mxu0 %v3999
        %4121 = vmatpush1.bf16.msra.mxu0 %v3998
        %4122 = vmatprep.subr.bf16.mxu0 %v4003
        %4123 = vmatpush1.bf16.msra.mxu0 %v4002
        %4124 = vmatprep.subr.bf16.mxu0 %v4007
        %4125 = vmatpush1.bf16.msra.mxu0 %v4006
        %4126 = vmatprep.subr.bf16.mxu0 %v4011
        %4127 = vmatpush1.bf16.msra.mxu0 %v4010
        %4128 = vmatprep.subr.bf16.mxu0 %v4015
        %4129 = vmatpush1.bf16.msra.mxu0 %v4014
        %4130 = vmatprep.subr.bf16.mxu0 %v4019
        %4131 = vmatpush1.bf16.msra.mxu0 %v4018
        %4132 = vmatprep.subr.bf16.mxu0 %v4023
        %4133 = vmatpush1.bf16.msra.mxu0 %v4022
        %4134 = vmatprep.subr.bf16.mxu0 %v4027
        %4135 = vmatpush1.bf16.msra.mxu0 %v4026
        %4136 = vmatprep.subr.bf16.mxu0 %v4031
        %4137 = vmatpush1.bf16.msra.mxu0 %v4030
        %4138 = vmatprep.subr.bf16.mxu0 %v4035
        %4139 = vmatpush1.bf16.msra.mxu0 %v4034
        %4140 = vmatprep.subr.bf16.mxu0 %v4039
        %4141 = vmatpush1.bf16.msra.mxu0 %v4038
        %4142 = vmatprep.subr.bf16.mxu0 %v4043
        %4143 = vmatpush1.bf16.msra.mxu0 %v4042
        %4144 = vmatprep.subr.bf16.mxu0 %v4047
        %4145 = vmatpush1.bf16.msra.mxu0 %v4046
        %4146 = vmatprep.mubr.bf16.mxu0 %v3677
        %4147 = vmatmul.mubr.bf16.gmra.mrb[0].mxu0 %v3676
        %v4148 = vpop.f32.mrb[0].mxu0
        %v4149 = vadd.f32 %v3777, %v4148
        %v4150 = vpop.f32.mrb[0].mxu0
        %v4151 = vadd.f32 %v3781, %v4150
        %v4152 = vpop.f32.mrb[0].mxu0
        %v4153 = vadd.f32 %v3777, %v4152
        %v4154 = vpop.f32.mrb[0].mxu0
        %v4155 = vadd.f32 %v3781, %v4154
        %4156 = vmatprep.mubr.bf16.mxu0 %v3679
        %4157 = vmatmul.mubr.bf16.gmra.mrb[0].mxu0 %v3678
        %v4158 = vpop.f32.mrb[0].mxu0
        %v4159 = vadd.f32 %v3777, %v4158
        %v4160 = vpop.f32.mrb[0].mxu0
        %v4161 = vadd.f32 %v3781, %v4160
        %v4162 = vpop.f32.mrb[0].mxu0
        %v4163 = vadd.f32 %v3777, %v4162
        %v4164 = vpop.f32.mrb[0].mxu0
        %v4165 = vadd.f32 %v3781, %v4164
        %4166 = vmatprep.mubr.bf16.mxu0 %v3681
        %4167 = vmatmul.mubr.bf16.gmra.mrb[0].mxu0 %v3680
        %v4168 = vpop.f32.mrb[0].mxu0
        %v4169 = vadd.f32 %v3777, %v4168
        %v4170 = vpop.f32.mrb[0].mxu0
        %v4171 = vadd.f32 %v3781, %v4170
        %v4172 = vpop.f32.mrb[0].mxu0
        %v4173 = vadd.f32 %v3777, %v4172
        %v4174 = vpop.f32.mrb[0].mxu0
        %v4175 = vadd.f32 %v3781, %v4174
        %4176 = vmatprep.mubr.bf16.mxu0 %v3683
        %4177 = vmatmul.mubr.bf16.gmra.mrb[0].mxu0 %v3682
        %v4178 = vpop.f32.mrb[0].mxu0
        %v4179 = vadd.f32 %v3777, %v4178
        %v4180 = vpop.f32.mrb[0].mxu0
        %v4181 = vadd.f32 %v3781, %v4180
        %v4182 = vpop.f32.mrb[0].mxu0
        %v4183 = vadd.f32 %v3777, %v4182
        %v4184 = vpop.f32.mrb[0].mxu0
        %v4185 = vadd.f32 %v3781, %v4184
        %4186 = vmatprep.mubr.bf16.mxu0 %v3685
        %4187 = vmatmul.mubr.bf16.gmra.mrb[0].mxu0 %v3684
        %v4188 = vpop.f32.mrb[0].mxu0
        %v4189 = vadd.f32 %v3777, %v4188
        %v4190 = vpop.f32.mrb[0].mxu0
        %v4191 = vadd.f32 %v3781, %v4190
        %v4192 = vpop.f32.mrb[0].mxu0
        %v4193 = vadd.f32 %v3777, %v4192
        %v4194 = vpop.f32.mrb[0].mxu0
        %v4195 = vadd.f32 %v3781, %v4194
        %4196 = vmatprep.mubr.bf16.mxu0 %v3687
        %4197 = vmatmul.mubr.bf16.gmra.mrb[0].mxu0 %v3686
        %v4198 = vpop.f32.mrb[0].mxu0
        %v4199 = vadd.f32 %v3777, %v4198
        %v4200 = vpop.f32.mrb[0].mxu0
        %v4201 = vadd.f32 %v3781, %v4200
        %v4202 = vpop.f32.mrb[0].mxu0
        %v4203 = vadd.f32 %v3777, %v4202
        %v4204 = vpop.f32.mrb[0].mxu0
        %v4205 = vadd.f32 %v3781, %v4204
        %4206 = vmatprep.mubr.bf16.mxu0 %v3689
        %4207 = vmatmul.mubr.bf16.gmra.mrb[0].mxu0 %v3688
        %v4208 = vpop.f32.mrb[0].mxu0
        %v4209 = vadd.f32 %v3777, %v4208
        %v4210 = vpop.f32.mrb[0].mxu0
        %v4211 = vadd.f32 %v3781, %v4210
        %v4212 = vpop.f32.mrb[0].mxu0
        %v4213 = vadd.f32 %v3777, %v4212
        %v4214 = vpop.f32.mrb[0].mxu0
        %v4215 = vadd.f32 %v3781, %v4214
        %4216 = vmatprep.mubr.bf16.mxu0 %v3691
        %4217 = vmatmul.mubr.bf16.gmra.mrb[0].mxu0 %v3690
        %v4218 = vpop.f32.mrb[0].mxu0
        %v4219 = vadd.f32 %v3777, %v4218
        %v4220 = vpop.f32.mrb[0].mxu0
        %v4221 = vadd.f32 %v3781, %v4220
        %v4222 = vpop.f32.mrb[0].mxu0
        %v4223 = vadd.f32 %v3777, %v4222
        %v4224 = vpop.f32.mrb[0].mxu0
        %v4225 = vadd.f32 %v3781, %v4224
        %4226 = vmatprep.mubr.bf16.mxu0 %v3693
        %4227 = vmatmul.mubr.bf16.gmra.mrb[0].mxu0 %v3692
        %v4228 = vpop.f32.mrb[0].mxu0
        %v4229 = vadd.f32 %v3777, %v4228
        %v4230 = vpop.f32.mrb[0].mxu0
        %v4231 = vadd.f32 %v3781, %v4230
        %v4232 = vpop.f32.mrb[0].mxu0
        %v4233 = vadd.f32 %v3777, %v4232
        %v4234 = vpop.f32.mrb[0].mxu0
        %v4235 = vadd.f32 %v3781, %v4234
        %4236 = vmatprep.mubr.bf16.mxu0 %v3695
        %4237 = vmatmul.mubr.bf16.gmra.mrb[0].mxu0 %v3694
        %v4238 = vpop.f32.mrb[0].mxu0
        %v4239 = vadd.f32 %v3777, %v4238
        %v4240 = vpop.f32.mrb[0].mxu0
        %v4241 = vadd.f32 %v3781, %v4240
        %v4242 = vpop.f32.mrb[0].mxu0
        %v4243 = vadd.f32 %v3777, %v4242
        %v4244 = vpop.f32.mrb[0].mxu0
        %v4245 = vadd.f32 %v3781, %v4244
        %4246 = vmatprep.mubr.bf16.mxu0 %v3697
        %4247 = vmatmul.mubr.bf16.gmra.mrb[0].mxu0 %v3696
        %v4248 = vpop.f32.mrb[0].mxu0
        %v4249 = vadd.f32 %v3777, %v4248
        %v4250 = vpop.f32.mrb[0].mxu0
        %v4251 = vadd.f32 %v3781, %v4250
        %v4252 = vpop.f32.mrb[0].mxu0
        %v4253 = vadd.f32 %v3777, %v4252
        %v4254 = vpop.f32.mrb[0].mxu0
        %v4255 = vadd.f32 %v3781, %v4254
        %4256 = vmatprep.mubr.bf16.mxu0 %v3699
        %4257 = vmatmul.mubr.bf16.gmra.mrb[0].mxu0 %v3698
        %v4258 = vpop.f32.mrb[0].mxu0
        %v4259 = vadd.f32 %v3777, %v4258
        %v4260 = vpop.f32.mrb[0].mxu0
        %v4261 = vadd.f32 %v3781, %v4260
        %v4262 = vpop.f32.mrb[0].mxu0
        %v4263 = vadd.f32 %v3777, %v4262
        %v4264 = vpop.f32.mrb[0].mxu0
        %v4265 = vadd.f32 %v3781, %v4264
        %4266 = vmatprep.mubr.bf16.mxu0 %v3701
        %4267 = vmatmul.mubr.bf16.gmra.mrb[0].mxu0 %v3700
        %v4268 = vpop.f32.mrb[0].mxu0
        %v4269 = vadd.f32 %v3777, %v4268
        %v4270 = vpop.f32.mrb[0].mxu0
        %v4271 = vadd.f32 %v3781, %v4270
        %v4272 = vpop.f32.mrb[0].mxu0
        %v4273 = vadd.f32 %v3777, %v4272
        %v4274 = vpop.f32.mrb[0].mxu0
        %v4275 = vadd.f32 %v3781, %v4274
        %4276 = vmatprep.mubr.bf16.mxu0 %v3703
        %4277 = vmatmul.mubr.bf16.gmra.mrb[0].mxu0 %v3702
        %v4278 = vpop.f32.mrb[0].mxu0
        %v4279 = vadd.f32 %v3777, %v4278
        %v4280 = vpop.f32.mrb[0].mxu0
        %v4281 = vadd.f32 %v3781, %v4280
        %v4282 = vpop.f32.mrb[0].mxu0
        %v4283 = vadd.f32 %v3777, %v4282
        %v4284 = vpop.f32.mrb[0].mxu0
        %v4285 = vadd.f32 %v3781, %v4284
        %4286 = vmatprep.mubr.bf16.mxu0 %v3705
        %4287 = vmatmul.mubr.bf16.gmra.mrb[0].mxu0 %v3704
        %v4288 = vpop.f32.mrb[0].mxu0
        %v4289 = vadd.f32 %v3777, %v4288
        %v4290 = vpop.f32.mrb[0].mxu0
        %v4291 = vadd.f32 %v3781, %v4290
        %v4292 = vpop.f32.mrb[0].mxu0
        %v4293 = vadd.f32 %v3777, %v4292
        %v4294 = vpop.f32.mrb[0].mxu0
        %v4295 = vadd.f32 %v3781, %v4294
        %4296 = vmatprep.mubr.bf16.mxu0 %v3707
        %4297 = vmatmul.mubr.bf16.gmra.mrb[0].mxu0 %v3706
        %v4298 = vpop.f32.mrb[0].mxu0
        %v4299 = vadd.f32 %v3777, %v4298
        %v4300 = vpop.f32.mrb[0].mxu0
        %v4301 = vadd.f32 %v3781, %v4300
        %v4302 = vpop.f32.mrb[0].mxu0
        %v4303 = vadd.f32 %v3777, %v4302
        %v4304 = vpop.f32.mrb[0].mxu0
        %v4305 = vadd.f32 %v3781, %v4304
        %4306 = vdwg.mxu0
        %4307 = vmatprep.subr.bf16.mxu0 %v3989
        %4308 = vmatpush1.bf16.msra.mxu0 %v3988
        %4309 = vmatprep.subr.bf16.mxu0 %v3993
        %4310 = vmatpush1.bf16.msra.mxu0 %v3992
        %4311 = vmatprep.subr.bf16.mxu0 %v3997
        %4312 = vmatpush1.bf16.msra.mxu0 %v3996
        %4313 = vmatprep.subr.bf16.mxu0 %v4001
        %4314 = vmatpush1.bf16.msra.mxu0 %v4000
        %4315 = vmatprep.subr.bf16.mxu0 %v4005
        %4316 = vmatpush1.bf16.msra.mxu0 %v4004
        %4317 = vmatprep.subr.bf16.mxu0 %v4009
        %4318 = vmatpush1.bf16.msra.mxu0 %v4008
        %4319 = vmatprep.subr.bf16.mxu0 %v4013
        %4320 = vmatpush1.bf16.msra.mxu0 %v4012
        %4321 = vmatprep.subr.bf16.mxu0 %v4017
        %4322 = vmatpush1.bf16.msra.mxu0 %v4016
        %4323 = vmatprep.subr.bf16.mxu0 %v4021
        %4324 = vmatpush1.bf16.msra.mxu0 %v4020
        %4325 = vmatprep.subr.bf16.mxu0 %v4025
        %4326 = vmatpush1.bf16.msra.mxu0 %v4024
        %4327 = vmatprep.subr.bf16.mxu0 %v4029
        %4328 = vmatpush1.bf16.msra.mxu0 %v4028
        %4329 = vmatprep.subr.bf16.mxu0 %v4033
        %4330 = vmatpush1.bf16.msra.mxu0 %v4032
        %4331 = vmatprep.subr.bf16.mxu0 %v4037
        %4332 = vmatpush1.bf16.msra.mxu0 %v4036
        %4333 = vmatprep.subr.bf16.mxu0 %v4041
        %4334 = vmatpush1.bf16.msra.mxu0 %v4040
        %4335 = vmatprep.subr.bf16.mxu0 %v4045
        %4336 = vmatpush1.bf16.msra.mxu0 %v4044
        %4337 = vmatprep.subr.bf16.mxu0 %v4049
        %4338 = vmatpush1.bf16.msra.mxu0 %v4048
        %4339 = vmatprep.mubr.bf16.mxu0 %v3677
        %4340 = vmatmul.mubr.bf16.gmra.mrb[0].mxu0 %v3676
        %v4341 = vpop.f32.mrb[0].mxu0
        %v4342 = vadd.f32 %v3785, %v4341
        %v4343 = vpop.f32.mrb[0].mxu0
        %v4344 = vadd.f32 %v3789, %v4343
        %v4345 = vpop.f32.mrb[0].mxu0
        %v4346 = vadd.f32 %v3785, %v4345
        %v4347 = vpop.f32.mrb[0].mxu0
        %v4348 = vadd.f32 %v3789, %v4347
        %4349 = vmatprep.mubr.bf16.mxu0 %v3679
        %4350 = vmatmul.mubr.bf16.gmra.mrb[0].mxu0 %v3678
        %v4351 = vpop.f32.mrb[0].mxu0
        %v4352 = vadd.f32 %v3785, %v4351
        %v4353 = vpop.f32.mrb[0].mxu0
        %v4354 = vadd.f32 %v3789, %v4353
        %v4355 = vpop.f32.mrb[0].mxu0
        %v4356 = vadd.f32 %v3785, %v4355
        %v4357 = vpop.f32.mrb[0].mxu0
        %v4358 = vadd.f32 %v3789, %v4357
        %4359 = vmatprep.mubr.bf16.mxu0 %v3681
        %4360 = vmatmul.mubr.bf16.gmra.mrb[0].mxu0 %v3680
        %v4361 = vpop.f32.mrb[0].mxu0
        %v4362 = vadd.f32 %v3785, %v4361
        %v4363 = vpop.f32.mrb[0].mxu0
        %v4364 = vadd.f32 %v3789, %v4363
        %v4365 = vpop.f32.mrb[0].mxu0
        %v4366 = vadd.f32 %v3785, %v4365
        %v4367 = vpop.f32.mrb[0].mxu0
        %v4368 = vadd.f32 %v3789, %v4367
        %4369 = vmatprep.mubr.bf16.mxu0 %v3683
        %4370 = vmatmul.mubr.bf16.gmra.mrb[0].mxu0 %v3682
        %v4371 = vpop.f32.mrb[0].mxu0
        %v4372 = vadd.f32 %v3785, %v4371
        %v4373 = vpop.f32.mrb[0].mxu0
        %v4374 = vadd.f32 %v3789, %v4373
        %v4375 = vpop.f32.mrb[0].mxu0
        %v4376 = vadd.f32 %v3785, %v4375
        %v4377 = vpop.f32.mrb[0].mxu0
        %v4378 = vadd.f32 %v3789, %v4377
        %4379 = vmatprep.mubr.bf16.mxu0 %v3685
        %4380 = vmatmul.mubr.bf16.gmra.mrb[0].mxu0 %v3684
        %v4381 = vpop.f32.mrb[0].mxu0
        %v4382 = vadd.f32 %v3785, %v4381
        %v4383 = vpop.f32.mrb[0].mxu0
        %v4384 = vadd.f32 %v3789, %v4383
        %v4385 = vpop.f32.mrb[0].mxu0
        %v4386 = vadd.f32 %v3785, %v4385
        %v4387 = vpop.f32.mrb[0].mxu0
        %v4388 = vadd.f32 %v3789, %v4387
        %4389 = vmatprep.mubr.bf16.mxu0 %v3687
        %4390 = vmatmul.mubr.bf16.gmra.mrb[0].mxu0 %v3686
        %v4391 = vpop.f32.mrb[0].mxu0
        %v4392 = vadd.f32 %v3785, %v4391
        %v4393 = vpop.f32.mrb[0].mxu0
        %v4394 = vadd.f32 %v3789, %v4393
        %v4395 = vpop.f32.mrb[0].mxu0
        %v4396 = vadd.f32 %v3785, %v4395
        %v4397 = vpop.f32.mrb[0].mxu0
        %v4398 = vadd.f32 %v3789, %v4397
        %4399 = vmatprep.mubr.bf16.mxu0 %v3689
        %4400 = vmatmul.mubr.bf16.gmra.mrb[0].mxu0 %v3688
        %v4401 = vpop.f32.mrb[0].mxu0
        %v4402 = vadd.f32 %v3785, %v4401
        %v4403 = vpop.f32.mrb[0].mxu0
        %v4404 = vadd.f32 %v3789, %v4403
        %v4405 = vpop.f32.mrb[0].mxu0
        %v4406 = vadd.f32 %v3785, %v4405
        %v4407 = vpop.f32.mrb[0].mxu0
        %v4408 = vadd.f32 %v3789, %v4407
        %4409 = vmatprep.mubr.bf16.mxu0 %v3691
        %4410 = vmatmul.mubr.bf16.gmra.mrb[0].mxu0 %v3690
        %v4411 = vpop.f32.mrb[0].mxu0
        %v4412 = vadd.f32 %v3785, %v4411
        %v4413 = vpop.f32.mrb[0].mxu0
        %v4414 = vadd.f32 %v3789, %v4413
        %v4415 = vpop.f32.mrb[0].mxu0
        %v4416 = vadd.f32 %v3785, %v4415
        %v4417 = vpop.f32.mrb[0].mxu0
        %v4418 = vadd.f32 %v3789, %v4417
        %4419 = vmatprep.mubr.bf16.mxu0 %v3693
        %4420 = vmatmul.mubr.bf16.gmra.mrb[0].mxu0 %v3692
        %v4421 = vpop.f32.mrb[0].mxu0
        %v4422 = vadd.f32 %v3785, %v4421
        %v4423 = vpop.f32.mrb[0].mxu0
        %v4424 = vadd.f32 %v3789, %v4423
        %v4425 = vpop.f32.mrb[0].mxu0
        %v4426 = vadd.f32 %v3785, %v4425
        %v4427 = vpop.f32.mrb[0].mxu0
        %v4428 = vadd.f32 %v3789, %v4427
        %4429 = vmatprep.mubr.bf16.mxu0 %v3695
        %4430 = vmatmul.mubr.bf16.gmra.mrb[0].mxu0 %v3694
        %v4431 = vpop.f32.mrb[0].mxu0
        %v4432 = vadd.f32 %v3785, %v4431
        %v4433 = vpop.f32.mrb[0].mxu0
        %v4434 = vadd.f32 %v3789, %v4433
        %v4435 = vpop.f32.mrb[0].mxu0
        %v4436 = vadd.f32 %v3785, %v4435
        %v4437 = vpop.f32.mrb[0].mxu0
        %v4438 = vadd.f32 %v3789, %v4437
        %4439 = vmatprep.mubr.bf16.mxu0 %v3697
        %4440 = vmatmul.mubr.bf16.gmra.mrb[0].mxu0 %v3696
        %v4441 = vpop.f32.mrb[0].mxu0
        %v4442 = vadd.f32 %v3785, %v4441
        %v4443 = vpop.f32.mrb[0].mxu0
        %v4444 = vadd.f32 %v3789, %v4443
        %v4445 = vpop.f32.mrb[0].mxu0
        %v4446 = vadd.f32 %v3785, %v4445
        %v4447 = vpop.f32.mrb[0].mxu0
        %v4448 = vadd.f32 %v3789, %v4447
        %4449 = vmatprep.mubr.bf16.mxu0 %v3699
        %4450 = vmatmul.mubr.bf16.gmra.mrb[0].mxu0 %v3698
        %v4451 = vpop.f32.mrb[0].mxu0
        %v4452 = vadd.f32 %v3785, %v4451
        %v4453 = vpop.f32.mrb[0].mxu0
        %v4454 = vadd.f32 %v3789, %v4453
        %v4455 = vpop.f32.mrb[0].mxu0
        %v4456 = vadd.f32 %v3785, %v4455
        %v4457 = vpop.f32.mrb[0].mxu0
        %v4458 = vadd.f32 %v3789, %v4457
        %4459 = vmatprep.mubr.bf16.mxu0 %v3701
        %4460 = vmatmul.mubr.bf16.gmra.mrb[0].mxu0 %v3700
        %v4461 = vpop.f32.mrb[0].mxu0
        %v4462 = vadd.f32 %v3785, %v4461
        %v4463 = vpop.f32.mrb[0].mxu0
        %v4464 = vadd.f32 %v3789, %v4463
        %v4465 = vpop.f32.mrb[0].mxu0
        %v4466 = vadd.f32 %v3785, %v4465
        %v4467 = vpop.f32.mrb[0].mxu0
        %v4468 = vadd.f32 %v3789, %v4467
        %4469 = vmatprep.mubr.bf16.mxu0 %v3703
        %4470 = vmatmul.mubr.bf16.gmra.mrb[0].mxu0 %v3702
        %v4471 = vpop.f32.mrb[0].mxu0
        %v4472 = vadd.f32 %v3785, %v4471
        %v4473 = vpop.f32.mrb[0].mxu0
        %v4474 = vadd.f32 %v3789, %v4473
        %v4475 = vpop.f32.mrb[0].mxu0
        %v4476 = vadd.f32 %v3785, %v4475
        %v4477 = vpop.f32.mrb[0].mxu0
        %v4478 = vadd.f32 %v3789, %v4477
        %4479 = vmatprep.mubr.bf16.mxu0 %v3705
        %4480 = vmatmul.mubr.bf16.gmra.mrb[0].mxu0 %v3704
        %v4481 = vpop.f32.mrb[0].mxu0
        %v4482 = vadd.f32 %v3785, %v4481
        %v4483 = vpop.f32.mrb[0].mxu0
        %v4484 = vadd.f32 %v3789, %v4483
        %v4485 = vpop.f32.mrb[0].mxu0
        %v4486 = vadd.f32 %v3785, %v4485
        %v4487 = vpop.f32.mrb[0].mxu0
        %v4488 = vadd.f32 %v3789, %v4487
        %4489 = vmatprep.mubr.bf16.mxu0 %v3707
        %4490 = vmatmul.mubr.bf16.gmra.mrb[0].mxu0 %v3706
        %v4491 = vpop.f32.mrb[0].mxu0
        %v4492 = vadd.f32 %v3785, %v4491
        %v4493 = vpop.f32.mrb[0].mxu0
        %v4494 = vadd.f32 %v3789, %v4493
        %v4495 = vpop.f32.mrb[0].mxu0
        %v4496 = vadd.f32 %v3785, %v4495
        %v4497 = vpop.f32.mrb[0].mxu0
        %v4498 = vadd.f32 %v3789, %v4497
        %4499 = vdwg.mxu0
        %v4500 = vpack.c.bf16 %v4153, %v4149
        %v4501 = vpack.c.bf16 %v4155, %v4151
        %v4502 = vpack.c.bf16 %v4346, %v4342
        %v4503 = vpack.c.bf16 %v4348, %v4344
        %v4504 = vpack.c.bf16 %v4163, %v4159
        %v4505 = vpack.c.bf16 %v4165, %v4161
        %v4506 = vpack.c.bf16 %v4356, %v4352
        %v4507 = vpack.c.bf16 %v4358, %v4354
        %v4508 = vpack.c.bf16 %v4173, %v4169
        %v4509 = vpack.c.bf16 %v4175, %v4171
        %v4510 = vpack.c.bf16 %v4366, %v4362
        %v4511 = vpack.c.bf16 %v4368, %v4364
        %v4512 = vpack.c.bf16 %v4183, %v4179
        %v4513 = vpack.c.bf16 %v4185, %v4181
        %v4514 = vpack.c.bf16 %v4376, %v4372
        %v4515 = vpack.c.bf16 %v4378, %v4374
        %v4516 = vpack.c.bf16 %v4193, %v4189
        %v4517 = vpack.c.bf16 %v4195, %v4191
        %v4518 = vpack.c.bf16 %v4386, %v4382
        %v4519 = vpack.c.bf16 %v4388, %v4384
        %v4520 = vpack.c.bf16 %v4203, %v4199
        %v4521 = vpack.c.bf16 %v4205, %v4201
        %v4522 = vpack.c.bf16 %v4396, %v4392
        %v4523 = vpack.c.bf16 %v4398, %v4394
        %v4524 = vpack.c.bf16 %v4213, %v4209
        %v4525 = vpack.c.bf16 %v4215, %v4211
        %v4526 = vpack.c.bf16 %v4406, %v4402
        %v4527 = vpack.c.bf16 %v4408, %v4404
        %v4528 = vpack.c.bf16 %v4223, %v4219
        %v4529 = vpack.c.bf16 %v4225, %v4221
        %v4530 = vpack.c.bf16 %v4416, %v4412
        %v4531 = vpack.c.bf16 %v4418, %v4414
        %v4532 = vpack.c.bf16 %v4233, %v4229
        %v4533 = vpack.c.bf16 %v4235, %v4231
        %v4534 = vpack.c.bf16 %v4426, %v4422
        %v4535 = vpack.c.bf16 %v4428, %v4424
        %v4536 = vpack.c.bf16 %v4243, %v4239
        %v4537 = vpack.c.bf16 %v4245, %v4241
        %v4538 = vpack.c.bf16 %v4436, %v4432
        %v4539 = vpack.c.bf16 %v4438, %v4434
        %v4540 = vpack.c.bf16 %v4253, %v4249
        %v4541 = vpack.c.bf16 %v4255, %v4251
        %v4542 = vpack.c.bf16 %v4446, %v4442
        %v4543 = vpack.c.bf16 %v4448, %v4444
        %v4544 = vpack.c.bf16 %v4263, %v4259
        %v4545 = vpack.c.bf16 %v4265, %v4261
        %v4546 = vpack.c.bf16 %v4456, %v4452
        %v4547 = vpack.c.bf16 %v4458, %v4454
        %v4548 = vpack.c.bf16 %v4273, %v4269
        %v4549 = vpack.c.bf16 %v4275, %v4271
        %v4550 = vpack.c.bf16 %v4466, %v4462
        %v4551 = vpack.c.bf16 %v4468, %v4464
        %v4552 = vpack.c.bf16 %v4283, %v4279
        %v4553 = vpack.c.bf16 %v4285, %v4281
        %v4554 = vpack.c.bf16 %v4476, %v4472
        %v4555 = vpack.c.bf16 %v4478, %v4474
        %v4556 = vpack.c.bf16 %v4293, %v4289
        %v4557 = vpack.c.bf16 %v4295, %v4291
        %v4558 = vpack.c.bf16 %v4486, %v4482
        %v4559 = vpack.c.bf16 %v4488, %v4484
        %v4560 = vpack.c.bf16 %v4303, %v4299
        %v4561 = vpack.c.bf16 %v4305, %v4301
        %v4562 = vpack.c.bf16 %v4496, %v4492
        %v4563 = vpack.c.bf16 %v4498, %v4494
        %v4564 = vmax.bf16 %v4500, 0
        %v4565 = vmax.bf16 %v4501, 0
        %v4566 = vmax.bf16 %v4502, 0
        %v4567 = vmax.bf16 %v4503, 0
        %v4568 = vmax.bf16 %v4504, 0
        %v4569 = vmax.bf16 %v4505, 0
        %v4570 = vmax.bf16 %v4506, 0
        %v4571 = vmax.bf16 %v4507, 0
        %v4572 = vmax.bf16 %v4508, 0
        %v4573 = vmax.bf16 %v4509, 0
        %v4574 = vmax.bf16 %v4510, 0
        %v4575 = vmax.bf16 %v4511, 0
        %v4576 = vmax.bf16 %v4512, 0
        %v4577 = vmax.bf16 %v4513, 0
        %v4578 = vmax.bf16 %v4514, 0
        %v4579 = vmax.bf16 %v4515, 0
        %v4580 = vmax.bf16 %v4516, 0
        %v4581 = vmax.bf16 %v4517, 0
        %v4582 = vmax.bf16 %v4518, 0
        %v4583 = vmax.bf16 %v4519, 0
        %v4584 = vmax.bf16 %v4520, 0
        %v4585 = vmax.bf16 %v4521, 0
        %v4586 = vmax.bf16 %v4522, 0
        %v4587 = vmax.bf16 %v4523, 0
        %v4588 = vmax.bf16 %v4524, 0
        %v4589 = vmax.bf16 %v4525, 0
        %v4590 = vmax.bf16 %v4526, 0
        %v4591 = vmax.bf16 %v4527, 0
        %v4592 = vmax.bf16 %v4528, 0
        %v4593 = vmax.bf16 %v4529, 0
        %v4594 = vmax.bf16 %v4530, 0
        %v4595 = vmax.bf16 %v4531, 0
        %v4596 = vmax.bf16 %v4532, 0
        %v4597 = vmax.bf16 %v4533, 0
        %v4598 = vmax.bf16 %v4534, 0
        %v4599 = vmax.bf16 %v4535, 0
        %v4600 = vmax.bf16 %v4536, 0
        %v4601 = vmax.bf16 %v4537, 0
        %v4602 = vmax.bf16 %v4538, 0
        %v4603 = vmax.bf16 %v4539, 0
        %v4604 = vmax.bf16 %v4540, 0
        %v4605 = vmax.bf16 %v4541, 0
        %v4606 = vmax.bf16 %v4542, 0
        %v4607 = vmax.bf16 %v4543, 0
        %v4608 = vmax.bf16 %v4544, 0
        %v4609 = vmax.bf16 %v4545, 0
        %v4610 = vmax.bf16 %v4546, 0
        %v4611 = vmax.bf16 %v4547, 0
        %v4612 = vmax.bf16 %v4548, 0
        %v4613 = vmax.bf16 %v4549, 0
        %v4614 = vmax.bf16 %v4550, 0
        %v4615 = vmax.bf16 %v4551, 0
        %v4616 = vmax.bf16 %v4552, 0
        %v4617 = vmax.bf16 %v4553, 0
        %v4618 = vmax.bf16 %v4554, 0
        %v4619 = vmax.bf16 %v4555, 0
        %v4620 = vmax.bf16 %v4556, 0
        %v4621 = vmax.bf16 %v4557, 0
        %v4622 = vmax.bf16 %v4558, 0
        %v4623 = vmax.bf16 %v4559, 0
        %v4624 = vmax.bf16 %v4560, 0
        %v4625 = vmax.bf16 %v4561, 0
        %v4626 = vmax.bf16 %v4562, 0
        %v4627 = vmax.bf16 %v4563, 0
        %v4628 = vld [vmem:[#allocation14] sm:$0xff]
        %v4629 = vld [vmem:[#allocation14 + $0x8] sm:$0xff]
        %v4630 = vld [vmem:[#allocation14 + $0x10] sm:$0xff]
        %v4631 = vld [vmem:[#allocation14 + $0x18] sm:$0xff]
        %v4632 = vld [vmem:[#allocation14 + $0x20] sm:$0xff]
        %v4633 = vld [vmem:[#allocation14 + $0x28] sm:$0xff]
        %v4634 = vld [vmem:[#allocation14 + $0x30] sm:$0xff]
        %v4635 = vld [vmem:[#allocation14 + $0x38] sm:$0xff]
        %v4636 = vld [vmem:[#allocation14 + $0x40] sm:$0xff]
        %v4637 = vld [vmem:[#allocation14 + $0x48] sm:$0xff]
        %v4638 = vld [vmem:[#allocation14 + $0x50] sm:$0xff]
        %v4639 = vld [vmem:[#allocation14 + $0x58] sm:$0xff]
        %v4640 = vld [vmem:[#allocation14 + $0x60] sm:$0xff]
        %v4641 = vld [vmem:[#allocation14 + $0x68] sm:$0xff]
        %v4642 = vld [vmem:[#allocation14 + $0x70] sm:$0xff]
        %v4643 = vld [vmem:[#allocation14 + $0x78] sm:$0xff]
        %v4644 = vld [vmem:[#allocation14 + $0x80] sm:$0xff]
        %v4645 = vld [vmem:[#allocation14 + $0x88] sm:$0xff]
        %v4646 = vld [vmem:[#allocation14 + $0x90] sm:$0xff]
        %v4647 = vld [vmem:[#allocation14 + $0x98] sm:$0xff]
        %v4648 = vld [vmem:[#allocation14 + $0xa0] sm:$0xff]
        %v4649 = vld [vmem:[#allocation14 + $0xa8] sm:$0xff]
        %v4650 = vld [vmem:[#allocation14 + $0xb0] sm:$0xff]
        %v4651 = vld [vmem:[#allocation14 + $0xb8] sm:$0xff]
        %v4652 = vld [vmem:[#allocation14 + $0xc0] sm:$0xff]
        %v4653 = vld [vmem:[#allocation14 + $0xc8] sm:$0xff]
        %v4654 = vld [vmem:[#allocation14 + $0xd0] sm:$0xff]
        %v4655 = vld [vmem:[#allocation14 + $0xd8] sm:$0xff]
        %v4656 = vld [vmem:[#allocation14 + $0xe0] sm:$0xff]
        %v4657 = vld [vmem:[#allocation14 + $0xe8] sm:$0xff]
        %v4658 = vld [vmem:[#allocation14 + $0xf0] sm:$0xff]
        %v4659 = vld [vmem:[#allocation14 + $0xf8] sm:$0xff]
        %v4660 = vld [vmem:[#allocation14 + $0x100] sm:$0xff]
        %v4661 = vld [vmem:[#allocation14 + $0x108] sm:$0xff]
        %v4662 = vld [vmem:[#allocation14 + $0x110] sm:$0xff]
        %v4663 = vld [vmem:[#allocation14 + $0x118] sm:$0xff]
        %v4664 = vld [vmem:[#allocation14 + $0x120] sm:$0xff]
        %v4665 = vld [vmem:[#allocation14 + $0x128] sm:$0xff]
        %v4666 = vld [vmem:[#allocation14 + $0x130] sm:$0xff]
        %v4667 = vld [vmem:[#allocation14 + $0x138] sm:$0xff]
        %v4668 = vld [vmem:[#allocation14 + $0x140] sm:$0xff]
        %v4669 = vld [vmem:[#allocation14 + $0x148] sm:$0xff]
        %v4670 = vld [vmem:[#allocation14 + $0x150] sm:$0xff]
        %v4671 = vld [vmem:[#allocation14 + $0x158] sm:$0xff]
        %v4672 = vld [vmem:[#allocation14 + $0x160] sm:$0xff]
        %v4673 = vld [vmem:[#allocation14 + $0x168] sm:$0xff]
        %v4674 = vld [vmem:[#allocation14 + $0x170] sm:$0xff]
        %v4675 = vld [vmem:[#allocation14 + $0x178] sm:$0xff]
        %v4676 = vld [vmem:[#allocation14 + $0x180] sm:$0xff]
        %v4677 = vld [vmem:[#allocation14 + $0x188] sm:$0xff]
        %v4678 = vld [vmem:[#allocation14 + $0x190] sm:$0xff]
        %v4679 = vld [vmem:[#allocation14 + $0x198] sm:$0xff]
        %v4680 = vld [vmem:[#allocation14 + $0x1a0] sm:$0xff]
        %v4681 = vld [vmem:[#allocation14 + $0x1a8] sm:$0xff]
        %v4682 = vld [vmem:[#allocation14 + $0x1b0] sm:$0xff]
        %v4683 = vld [vmem:[#allocation14 + $0x1b8] sm:$0xff]
        %v4684 = vld [vmem:[#allocation14 + $0x1c0] sm:$0xff]
        %v4685 = vld [vmem:[#allocation14 + $0x1c8] sm:$0xff]
        %v4686 = vld [vmem:[#allocation14 + $0x1d0] sm:$0xff]
        %v4687 = vld [vmem:[#allocation14 + $0x1d8] sm:$0xff]
        %v4688 = vld [vmem:[#allocation14 + $0x1e0] sm:$0xff]
        %v4689 = vld [vmem:[#allocation14 + $0x1e8] sm:$0xff]
        %v4690 = vld [vmem:[#allocation14 + $0x1f0] sm:$0xff]
        %v4691 = vld [vmem:[#allocation14 + $0x1f8] sm:$0xff]
        %v4692 = vld [vmem:[%s14] sm:$0x3]
        %v4694 = vlaneseq
        %v4695 = vshrl.u32 %v4694, 7
        %v4696 = vsub.s32 0, %v4695
        %v4697 = vrot.slane %v4692, %v4696
        %v4698 = vlaneseq
        %v4699 = vshrl.u32 %v4698, 7
        %v4700 = vsub.s32 1, %v4699
        %v4701 = vrot.slane %v4692, %v4700
        %v4768 = vunpack.c.l.b16 %v4628
        %v4769 = vunpack.c.h.b16 %v4628
        %v4770 = vunpack.c.l.b16 %v4629
        %v4771 = vunpack.c.h.b16 %v4629
        %v4772 = vunpack.c.l.b16 %v4630
        %v4773 = vunpack.c.h.b16 %v4630
        %v4774 = vunpack.c.l.b16 %v4631
        %v4775 = vunpack.c.h.b16 %v4631
        %v4776 = vunpack.c.l.b16 %v4632
        %v4777 = vunpack.c.h.b16 %v4632
        %v4778 = vunpack.c.l.b16 %v4633
        %v4779 = vunpack.c.h.b16 %v4633
        %v4780 = vunpack.c.l.b16 %v4634
        %v4781 = vunpack.c.h.b16 %v4634
        %v4782 = vunpack.c.l.b16 %v4635
        %v4783 = vunpack.c.h.b16 %v4635
        %v4784 = vunpack.c.l.b16 %v4636
        %v4785 = vunpack.c.h.b16 %v4636
        %v4786 = vunpack.c.l.b16 %v4637
        %v4787 = vunpack.c.h.b16 %v4637
        %v4788 = vunpack.c.l.b16 %v4638
        %v4789 = vunpack.c.h.b16 %v4638
        %v4790 = vunpack.c.l.b16 %v4639
        %v4791 = vunpack.c.h.b16 %v4639
        %v4792 = vunpack.c.l.b16 %v4640
        %v4793 = vunpack.c.h.b16 %v4640
        %v4794 = vunpack.c.l.b16 %v4641
        %v4795 = vunpack.c.h.b16 %v4641
        %v4796 = vunpack.c.l.b16 %v4642
        %v4797 = vunpack.c.h.b16 %v4642
        %v4798 = vunpack.c.l.b16 %v4643
        %v4799 = vunpack.c.h.b16 %v4643
        %v4800 = vunpack.c.l.b16 %v4644
        %v4801 = vunpack.c.h.b16 %v4644
        %v4802 = vunpack.c.l.b16 %v4645
        %v4803 = vunpack.c.h.b16 %v4645
        %v4804 = vunpack.c.l.b16 %v4646
        %v4805 = vunpack.c.h.b16 %v4646
        %v4806 = vunpack.c.l.b16 %v4647
        %v4807 = vunpack.c.h.b16 %v4647
        %v4808 = vunpack.c.l.b16 %v4648
        %v4809 = vunpack.c.h.b16 %v4648
        %v4810 = vunpack.c.l.b16 %v4649
        %v4811 = vunpack.c.h.b16 %v4649
        %v4812 = vunpack.c.l.b16 %v4650
        %v4813 = vunpack.c.h.b16 %v4650
        %v4814 = vunpack.c.l.b16 %v4651
        %v4815 = vunpack.c.h.b16 %v4651
        %v4816 = vunpack.c.l.b16 %v4652
        %v4817 = vunpack.c.h.b16 %v4652
        %v4818 = vunpack.c.l.b16 %v4653
        %v4819 = vunpack.c.h.b16 %v4653
        %v4820 = vunpack.c.l.b16 %v4654
        %v4821 = vunpack.c.h.b16 %v4654
        %v4822 = vunpack.c.l.b16 %v4655
        %v4823 = vunpack.c.h.b16 %v4655
        %v4824 = vunpack.c.l.b16 %v4656
        %v4825 = vunpack.c.h.b16 %v4656
        %v4826 = vunpack.c.l.b16 %v4657
        %v4827 = vunpack.c.h.b16 %v4657
        %v4828 = vunpack.c.l.b16 %v4658
        %v4829 = vunpack.c.h.b16 %v4658
        %v4830 = vunpack.c.l.b16 %v4659
        %v4831 = vunpack.c.h.b16 %v4659
        %v4832 = vunpack.c.l.b16 %v4660
        %v4833 = vunpack.c.h.b16 %v4660
        %v4834 = vunpack.c.l.b16 %v4661
        %v4835 = vunpack.c.h.b16 %v4661
        %v4836 = vunpack.c.l.b16 %v4662
        %v4837 = vunpack.c.h.b16 %v4662
        %v4838 = vunpack.c.l.b16 %v4663
        %v4839 = vunpack.c.h.b16 %v4663
        %v4840 = vunpack.c.l.b16 %v4664
        %v4841 = vunpack.c.h.b16 %v4664
        %v4842 = vunpack.c.l.b16 %v4665
        %v4843 = vunpack.c.h.b16 %v4665
        %v4844 = vunpack.c.l.b16 %v4666
        %v4845 = vunpack.c.h.b16 %v4666
        %v4846 = vunpack.c.l.b16 %v4667
        %v4847 = vunpack.c.h.b16 %v4667
        %v4848 = vunpack.c.l.b16 %v4668
        %v4849 = vunpack.c.h.b16 %v4668
        %v4850 = vunpack.c.l.b16 %v4669
        %v4851 = vunpack.c.h.b16 %v4669
        %v4852 = vunpack.c.l.b16 %v4670
        %v4853 = vunpack.c.h.b16 %v4670
        %v4854 = vunpack.c.l.b16 %v4671
        %v4855 = vunpack.c.h.b16 %v4671
        %v4856 = vunpack.c.l.b16 %v4672
        %v4857 = vunpack.c.h.b16 %v4672
        %v4858 = vunpack.c.l.b16 %v4673
        %v4859 = vunpack.c.h.b16 %v4673
        %v4860 = vunpack.c.l.b16 %v4674
        %v4861 = vunpack.c.h.b16 %v4674
        %v4862 = vunpack.c.l.b16 %v4675
        %v4863 = vunpack.c.h.b16 %v4675
        %v4864 = vunpack.c.l.b16 %v4676
        %v4865 = vunpack.c.h.b16 %v4676
        %v4866 = vunpack.c.l.b16 %v4677
        %v4867 = vunpack.c.h.b16 %v4677
        %v4868 = vunpack.c.l.b16 %v4678
        %v4869 = vunpack.c.h.b16 %v4678
        %v4870 = vunpack.c.l.b16 %v4679
        %v4871 = vunpack.c.h.b16 %v4679
        %v4872 = vunpack.c.l.b16 %v4680
        %v4873 = vunpack.c.h.b16 %v4680
        %v4874 = vunpack.c.l.b16 %v4681
        %v4875 = vunpack.c.h.b16 %v4681
        %v4876 = vunpack.c.l.b16 %v4682
        %v4877 = vunpack.c.h.b16 %v4682
        %v4878 = vunpack.c.l.b16 %v4683
        %v4879 = vunpack.c.h.b16 %v4683
        %v4880 = vunpack.c.l.b16 %v4684
        %v4881 = vunpack.c.h.b16 %v4684
        %v4882 = vunpack.c.l.b16 %v4685
        %v4883 = vunpack.c.h.b16 %v4685
        %v4884 = vunpack.c.l.b16 %v4686
        %v4885 = vunpack.c.h.b16 %v4686
        %v4886 = vunpack.c.l.b16 %v4687
        %v4887 = vunpack.c.h.b16 %v4687
        %v4888 = vunpack.c.l.b16 %v4688
        %v4889 = vunpack.c.h.b16 %v4688
        %v4890 = vunpack.c.l.b16 %v4689
        %v4891 = vunpack.c.h.b16 %v4689
        %v4892 = vunpack.c.l.b16 %v4690
        %v4893 = vunpack.c.h.b16 %v4690
        %v4894 = vunpack.c.l.b16 %v4691
        %v4895 = vunpack.c.h.b16 %v4691
        %v4896 = vpack.c.b16 %v4770, %v4768
        %v4897 = vpack.c.b16 %v4771, %v4769
        %v4898 = vpack.c.b16 %v4774, %v4772
        %v4899 = vpack.c.b16 %v4775, %v4773
        %v4900 = vpack.c.b16 %v4778, %v4776
        %v4901 = vpack.c.b16 %v4779, %v4777
        %v4902 = vpack.c.b16 %v4782, %v4780
        %v4903 = vpack.c.b16 %v4783, %v4781
        %v4904 = vpack.c.b16 %v4786, %v4784
        %v4905 = vpack.c.b16 %v4787, %v4785
        %v4906 = vpack.c.b16 %v4790, %v4788
        %v4907 = vpack.c.b16 %v4791, %v4789
        %v4908 = vpack.c.b16 %v4794, %v4792
        %v4909 = vpack.c.b16 %v4795, %v4793
        %v4910 = vpack.c.b16 %v4798, %v4796
        %v4911 = vpack.c.b16 %v4799, %v4797
        %v4912 = vpack.c.b16 %v4802, %v4800
        %v4913 = vpack.c.b16 %v4803, %v4801
        %v4914 = vpack.c.b16 %v4806, %v4804
        %v4915 = vpack.c.b16 %v4807, %v4805
        %v4916 = vpack.c.b16 %v4810, %v4808
        %v4917 = vpack.c.b16 %v4811, %v4809
        %v4918 = vpack.c.b16 %v4814, %v4812
        %v4919 = vpack.c.b16 %v4815, %v4813
        %v4920 = vpack.c.b16 %v4818, %v4816
        %v4921 = vpack.c.b16 %v4819, %v4817
        %v4922 = vpack.c.b16 %v4822, %v4820
        %v4923 = vpack.c.b16 %v4823, %v4821
        %v4924 = vpack.c.b16 %v4826, %v4824
        %v4925 = vpack.c.b16 %v4827, %v4825
        %v4926 = vpack.c.b16 %v4830, %v4828
        %v4927 = vpack.c.b16 %v4831, %v4829
        %v4928 = vpack.c.b16 %v4834, %v4832
        %v4929 = vpack.c.b16 %v4835, %v4833
        %v4930 = vpack.c.b16 %v4838, %v4836
        %v4931 = vpack.c.b16 %v4839, %v4837
        %v4932 = vpack.c.b16 %v4842, %v4840
        %v4933 = vpack.c.b16 %v4843, %v4841
        %v4934 = vpack.c.b16 %v4846, %v4844
        %v4935 = vpack.c.b16 %v4847, %v4845
        %v4936 = vpack.c.b16 %v4850, %v4848
        %v4937 = vpack.c.b16 %v4851, %v4849
        %v4938 = vpack.c.b16 %v4854, %v4852
        %v4939 = vpack.c.b16 %v4855, %v4853
        %v4940 = vpack.c.b16 %v4858, %v4856
        %v4941 = vpack.c.b16 %v4859, %v4857
        %v4942 = vpack.c.b16 %v4862, %v4860
        %v4943 = vpack.c.b16 %v4863, %v4861
        %v4944 = vpack.c.b16 %v4866, %v4864
        %v4945 = vpack.c.b16 %v4867, %v4865
        %v4946 = vpack.c.b16 %v4870, %v4868
        %v4947 = vpack.c.b16 %v4871, %v4869
        %v4948 = vpack.c.b16 %v4874, %v4872
        %v4949 = vpack.c.b16 %v4875, %v4873
        %v4950 = vpack.c.b16 %v4878, %v4876
        %v4951 = vpack.c.b16 %v4879, %v4877
        %v4952 = vpack.c.b16 %v4882, %v4880
        %v4953 = vpack.c.b16 %v4883, %v4881
        %v4954 = vpack.c.b16 %v4886, %v4884
        %v4955 = vpack.c.b16 %v4887, %v4885
        %v4956 = vpack.c.b16 %v4890, %v4888
        %v4957 = vpack.c.b16 %v4891, %v4889
        %v4958 = vpack.c.b16 %v4894, %v4892
        %v4959 = vpack.c.b16 %v4895, %v4893
        %5024 = vmatprep.subr.bf16.mxu0 %v4897
        %5025 = vmatpush1.bf16.msra.mxu0 %v4896
        %5026 = vmatprep.subr.bf16.mxu0 %v4899
        %5027 = vmatpush1.bf16.msra.mxu0 %v4898
        %5028 = vmatprep.subr.bf16.mxu0 %v4901
        %5029 = vmatpush1.bf16.msra.mxu0 %v4900
        %5030 = vmatprep.subr.bf16.mxu0 %v4903
        %5031 = vmatpush1.bf16.msra.mxu0 %v4902
        %5032 = vmatprep.subr.bf16.mxu0 %v4905
        %5033 = vmatpush1.bf16.msra.mxu0 %v4904
        %5034 = vmatprep.subr.bf16.mxu0 %v4907
        %5035 = vmatpush1.bf16.msra.mxu0 %v4906
        %5036 = vmatprep.subr.bf16.mxu0 %v4909
        %5037 = vmatpush1.bf16.msra.mxu0 %v4908
        %5038 = vmatprep.subr.bf16.mxu0 %v4911
        %5039 = vmatpush1.bf16.msra.mxu0 %v4910
        %5040 = vmatprep.subr.bf16.mxu0 %v4913
        %5041 = vmatpush1.bf16.msra.mxu0 %v4912
        %5042 = vmatprep.subr.bf16.mxu0 %v4915
        %5043 = vmatpush1.bf16.msra.mxu0 %v4914
        %5044 = vmatprep.subr.bf16.mxu0 %v4917
        %5045 = vmatpush1.bf16.msra.mxu0 %v4916
        %5046 = vmatprep.subr.bf16.mxu0 %v4919
        %5047 = vmatpush1.bf16.msra.mxu0 %v4918
        %5048 = vmatprep.subr.bf16.mxu0 %v4921
        %5049 = vmatpush1.bf16.msra.mxu0 %v4920
        %5050 = vmatprep.subr.bf16.mxu0 %v4923
        %5051 = vmatpush1.bf16.msra.mxu0 %v4922
        %5052 = vmatprep.subr.bf16.mxu0 %v4925
        %5053 = vmatpush1.bf16.msra.mxu0 %v4924
        %5054 = vmatprep.subr.bf16.mxu0 %v4927
        %5055 = vmatpush1.bf16.msra.mxu0 %v4926
        %5056 = vmatprep.mubr.bf16.mxu0 %v4565
        %5057 = vmatmul.mubr.bf16.gmra.mrb[0].mxu0 %v4564
        %v5058 = vpop.f32.mrb[0].mxu0
        %v5059 = vadd.f32 %v4697, %v5058
        %v5060 = vpop.f32.mrb[0].mxu0
        %v5061 = vadd.f32 %v4701, %v5060
        %v5062 = vpop.f32.mrb[0].mxu0
        %v5063 = vadd.f32 %v4697, %v5062
        %v5064 = vpop.f32.mrb[0].mxu0
        %v5065 = vadd.f32 %v4701, %v5064
        %5066 = vmatprep.mubr.bf16.mxu0 %v4569
        %5067 = vmatmul.mubr.bf16.gmra.mrb[0].mxu0 %v4568
        %v5068 = vpop.f32.mrb[0].mxu0
        %v5069 = vadd.f32 %v4697, %v5068
        %v5070 = vpop.f32.mrb[0].mxu0
        %v5071 = vadd.f32 %v4701, %v5070
        %v5072 = vpop.f32.mrb[0].mxu0
        %v5073 = vadd.f32 %v4697, %v5072
        %v5074 = vpop.f32.mrb[0].mxu0
        %v5075 = vadd.f32 %v4701, %v5074
        %5076 = vmatprep.mubr.bf16.mxu0 %v4573
        %5077 = vmatmul.mubr.bf16.gmra.mrb[0].mxu0 %v4572
        %v5078 = vpop.f32.mrb[0].mxu0
        %v5079 = vadd.f32 %v4697, %v5078
        %v5080 = vpop.f32.mrb[0].mxu0
        %v5081 = vadd.f32 %v4701, %v5080
        %v5082 = vpop.f32.mrb[0].mxu0
        %v5083 = vadd.f32 %v4697, %v5082
        %v5084 = vpop.f32.mrb[0].mxu0
        %v5085 = vadd.f32 %v4701, %v5084
        %5086 = vmatprep.mubr.bf16.mxu0 %v4577
        %5087 = vmatmul.mubr.bf16.gmra.mrb[0].mxu0 %v4576
        %v5088 = vpop.f32.mrb[0].mxu0
        %v5089 = vadd.f32 %v4697, %v5088
        %v5090 = vpop.f32.mrb[0].mxu0
        %v5091 = vadd.f32 %v4701, %v5090
        %v5092 = vpop.f32.mrb[0].mxu0
        %v5093 = vadd.f32 %v4697, %v5092
        %v5094 = vpop.f32.mrb[0].mxu0
        %v5095 = vadd.f32 %v4701, %v5094
        %5096 = vmatprep.mubr.bf16.mxu0 %v4581
        %5097 = vmatmul.mubr.bf16.gmra.mrb[0].mxu0 %v4580
        %v5098 = vpop.f32.mrb[0].mxu0
        %v5099 = vadd.f32 %v4697, %v5098
        %v5100 = vpop.f32.mrb[0].mxu0
        %v5101 = vadd.f32 %v4701, %v5100
        %v5102 = vpop.f32.mrb[0].mxu0
        %v5103 = vadd.f32 %v4697, %v5102
        %v5104 = vpop.f32.mrb[0].mxu0
        %v5105 = vadd.f32 %v4701, %v5104
        %5106 = vmatprep.mubr.bf16.mxu0 %v4585
        %5107 = vmatmul.mubr.bf16.gmra.mrb[0].mxu0 %v4584
        %v5108 = vpop.f32.mrb[0].mxu0
        %v5109 = vadd.f32 %v4697, %v5108
        %v5110 = vpop.f32.mrb[0].mxu0
        %v5111 = vadd.f32 %v4701, %v5110
        %v5112 = vpop.f32.mrb[0].mxu0
        %v5113 = vadd.f32 %v4697, %v5112
        %v5114 = vpop.f32.mrb[0].mxu0
        %v5115 = vadd.f32 %v4701, %v5114
        %5116 = vmatprep.mubr.bf16.mxu0 %v4589
        %5117 = vmatmul.mubr.bf16.gmra.mrb[0].mxu0 %v4588
        %v5118 = vpop.f32.mrb[0].mxu0
        %v5119 = vadd.f32 %v4697, %v5118
        %v5120 = vpop.f32.mrb[0].mxu0
        %v5121 = vadd.f32 %v4701, %v5120
        %v5122 = vpop.f32.mrb[0].mxu0
        %v5123 = vadd.f32 %v4697, %v5122
        %v5124 = vpop.f32.mrb[0].mxu0
        %v5125 = vadd.f32 %v4701, %v5124
        %5126 = vmatprep.mubr.bf16.mxu0 %v4593
        %5127 = vmatmul.mubr.bf16.gmra.mrb[0].mxu0 %v4592
        %v5128 = vpop.f32.mrb[0].mxu0
        %v5129 = vadd.f32 %v4697, %v5128
        %v5130 = vpop.f32.mrb[0].mxu0
        %v5131 = vadd.f32 %v4701, %v5130
        %v5132 = vpop.f32.mrb[0].mxu0
        %v5133 = vadd.f32 %v4697, %v5132
        %v5134 = vpop.f32.mrb[0].mxu0
        %v5135 = vadd.f32 %v4701, %v5134
        %5136 = vmatprep.mubr.bf16.mxu0 %v4597
        %5137 = vmatmul.mubr.bf16.gmra.mrb[0].mxu0 %v4596
        %v5138 = vpop.f32.mrb[0].mxu0
        %v5139 = vadd.f32 %v4697, %v5138
        %v5140 = vpop.f32.mrb[0].mxu0
        %v5141 = vadd.f32 %v4701, %v5140
        %v5142 = vpop.f32.mrb[0].mxu0
        %v5143 = vadd.f32 %v4697, %v5142
        %v5144 = vpop.f32.mrb[0].mxu0
        %v5145 = vadd.f32 %v4701, %v5144
        %5146 = vmatprep.mubr.bf16.mxu0 %v4601
        %5147 = vmatmul.mubr.bf16.gmra.mrb[0].mxu0 %v4600
        %v5148 = vpop.f32.mrb[0].mxu0
        %v5149 = vadd.f32 %v4697, %v5148
        %v5150 = vpop.f32.mrb[0].mxu0
        %v5151 = vadd.f32 %v4701, %v5150
        %v5152 = vpop.f32.mrb[0].mxu0
        %v5153 = vadd.f32 %v4697, %v5152
        %v5154 = vpop.f32.mrb[0].mxu0
        %v5155 = vadd.f32 %v4701, %v5154
        %5156 = vmatprep.mubr.bf16.mxu0 %v4605
        %5157 = vmatmul.mubr.bf16.gmra.mrb[0].mxu0 %v4604
        %v5158 = vpop.f32.mrb[0].mxu0
        %v5159 = vadd.f32 %v4697, %v5158
        %v5160 = vpop.f32.mrb[0].mxu0
        %v5161 = vadd.f32 %v4701, %v5160
        %v5162 = vpop.f32.mrb[0].mxu0
        %v5163 = vadd.f32 %v4697, %v5162
        %v5164 = vpop.f32.mrb[0].mxu0
        %v5165 = vadd.f32 %v4701, %v5164
        %5166 = vmatprep.mubr.bf16.mxu0 %v4609
        %5167 = vmatmul.mubr.bf16.gmra.mrb[0].mxu0 %v4608
        %v5168 = vpop.f32.mrb[0].mxu0
        %v5169 = vadd.f32 %v4697, %v5168
        %v5170 = vpop.f32.mrb[0].mxu0
        %v5171 = vadd.f32 %v4701, %v5170
        %v5172 = vpop.f32.mrb[0].mxu0
        %v5173 = vadd.f32 %v4697, %v5172
        %v5174 = vpop.f32.mrb[0].mxu0
        %v5175 = vadd.f32 %v4701, %v5174
        %5176 = vmatprep.mubr.bf16.mxu0 %v4613
        %5177 = vmatmul.mubr.bf16.gmra.mrb[0].mxu0 %v4612
        %v5178 = vpop.f32.mrb[0].mxu0
        %v5179 = vadd.f32 %v4697, %v5178
        %v5180 = vpop.f32.mrb[0].mxu0
        %v5181 = vadd.f32 %v4701, %v5180
        %v5182 = vpop.f32.mrb[0].mxu0
        %v5183 = vadd.f32 %v4697, %v5182
        %v5184 = vpop.f32.mrb[0].mxu0
        %v5185 = vadd.f32 %v4701, %v5184
        %5186 = vmatprep.mubr.bf16.mxu0 %v4617
        %5187 = vmatmul.mubr.bf16.gmra.mrb[0].mxu0 %v4616
        %v5188 = vpop.f32.mrb[0].mxu0
        %v5189 = vadd.f32 %v4697, %v5188
        %v5190 = vpop.f32.mrb[0].mxu0
        %v5191 = vadd.f32 %v4701, %v5190
        %v5192 = vpop.f32.mrb[0].mxu0
        %v5193 = vadd.f32 %v4697, %v5192
        %v5194 = vpop.f32.mrb[0].mxu0
        %v5195 = vadd.f32 %v4701, %v5194
        %5196 = vmatprep.mubr.bf16.mxu0 %v4621
        %5197 = vmatmul.mubr.bf16.gmra.mrb[0].mxu0 %v4620
        %v5198 = vpop.f32.mrb[0].mxu0
        %v5199 = vadd.f32 %v4697, %v5198
        %v5200 = vpop.f32.mrb[0].mxu0
        %v5201 = vadd.f32 %v4701, %v5200
        %v5202 = vpop.f32.mrb[0].mxu0
        %v5203 = vadd.f32 %v4697, %v5202
        %v5204 = vpop.f32.mrb[0].mxu0
        %v5205 = vadd.f32 %v4701, %v5204
        %5206 = vmatprep.mubr.bf16.mxu0 %v4625
        %5207 = vmatmul.mubr.bf16.gmra.mrb[0].mxu0 %v4624
        %v5208 = vpop.f32.mrb[0].mxu0
        %v5209 = vadd.f32 %v4697, %v5208
        %v5210 = vpop.f32.mrb[0].mxu0
        %v5211 = vadd.f32 %v4701, %v5210
        %v5212 = vpop.f32.mrb[0].mxu0
        %v5213 = vadd.f32 %v4697, %v5212
        %v5214 = vpop.f32.mrb[0].mxu0
        %v5215 = vadd.f32 %v4701, %v5214
        %5216 = vdwg.mxu0
        %5217 = vmatprep.subr.bf16.mxu0 %v4929
        %5218 = vmatpush1.bf16.msra.mxu0 %v4928
        %5219 = vmatprep.subr.bf16.mxu0 %v4931
        %5220 = vmatpush1.bf16.msra.mxu0 %v4930
        %5221 = vmatprep.subr.bf16.mxu0 %v4933
        %5222 = vmatpush1.bf16.msra.mxu0 %v4932
        %5223 = vmatprep.subr.bf16.mxu0 %v4935
        %5224 = vmatpush1.bf16.msra.mxu0 %v4934
        %5225 = vmatprep.subr.bf16.mxu0 %v4937
        %5226 = vmatpush1.bf16.msra.mxu0 %v4936
        %5227 = vmatprep.subr.bf16.mxu0 %v4939
        %5228 = vmatpush1.bf16.msra.mxu0 %v4938
        %5229 = vmatprep.subr.bf16.mxu0 %v4941
        %5230 = vmatpush1.bf16.msra.mxu0 %v4940
        %5231 = vmatprep.subr.bf16.mxu0 %v4943
        %5232 = vmatpush1.bf16.msra.mxu0 %v4942
        %5233 = vmatprep.subr.bf16.mxu0 %v4945
        %5234 = vmatpush1.bf16.msra.mxu0 %v4944
        %5235 = vmatprep.subr.bf16.mxu0 %v4947
        %5236 = vmatpush1.bf16.msra.mxu0 %v4946
        %5237 = vmatprep.subr.bf16.mxu0 %v4949
        %5238 = vmatpush1.bf16.msra.mxu0 %v4948
        %5239 = vmatprep.subr.bf16.mxu0 %v4951
        %5240 = vmatpush1.bf16.msra.mxu0 %v4950
        %5241 = vmatprep.subr.bf16.mxu0 %v4953
        %5242 = vmatpush1.bf16.msra.mxu0 %v4952
        %5243 = vmatprep.subr.bf16.mxu0 %v4955
        %5244 = vmatpush1.bf16.msra.mxu0 %v4954
        %5245 = vmatprep.subr.bf16.mxu0 %v4957
        %5246 = vmatpush1.bf16.msra.mxu0 %v4956
        %5247 = vmatprep.subr.bf16.mxu0 %v4959
        %5248 = vmatpush1.bf16.msra.mxu0 %v4958
        %5249 = vmatprep.mubr.bf16.mxu0 %v4567
        %5250 = vmatmul.mubr.bf16.gmra.mrb[0].mxu0 %v4566
        %v5251 = vpop.f32.mrb[0].mxu0
        %v5252 = vadd.f32 %v5059, %v5251
        %v5253 = vpop.f32.mrb[0].mxu0
        %v5254 = vadd.f32 %v5061, %v5253
        %v5255 = vpop.f32.mrb[0].mxu0
        %v5256 = vadd.f32 %v5063, %v5255
        %v5257 = vpop.f32.mrb[0].mxu0
        %v5258 = vadd.f32 %v5065, %v5257
        %5259 = vmatprep.mubr.bf16.mxu0 %v4571
        %5260 = vmatmul.mubr.bf16.gmra.mrb[0].mxu0 %v4570
        %v5261 = vpop.f32.mrb[0].mxu0
        %v5262 = vadd.f32 %v5069, %v5261
        %v5263 = vpop.f32.mrb[0].mxu0
        %v5264 = vadd.f32 %v5071, %v5263
        %v5265 = vpop.f32.mrb[0].mxu0
        %v5266 = vadd.f32 %v5073, %v5265
        %v5267 = vpop.f32.mrb[0].mxu0
        %v5268 = vadd.f32 %v5075, %v5267
        %5269 = vmatprep.mubr.bf16.mxu0 %v4575
        %5270 = vmatmul.mubr.bf16.gmra.mrb[0].mxu0 %v4574
        %v5271 = vpop.f32.mrb[0].mxu0
        %v5272 = vadd.f32 %v5079, %v5271
        %v5273 = vpop.f32.mrb[0].mxu0
        %v5274 = vadd.f32 %v5081, %v5273
        %v5275 = vpop.f32.mrb[0].mxu0
        %v5276 = vadd.f32 %v5083, %v5275
        %v5277 = vpop.f32.mrb[0].mxu0
        %v5278 = vadd.f32 %v5085, %v5277
        %5279 = vmatprep.mubr.bf16.mxu0 %v4579
        %5280 = vmatmul.mubr.bf16.gmra.mrb[0].mxu0 %v4578
        %v5281 = vpop.f32.mrb[0].mxu0
        %v5282 = vadd.f32 %v5089, %v5281
        %v5283 = vpop.f32.mrb[0].mxu0
        %v5284 = vadd.f32 %v5091, %v5283
        %v5285 = vpop.f32.mrb[0].mxu0
        %v5286 = vadd.f32 %v5093, %v5285
        %v5287 = vpop.f32.mrb[0].mxu0
        %v5288 = vadd.f32 %v5095, %v5287
        %5289 = vmatprep.mubr.bf16.mxu0 %v4583
        %5290 = vmatmul.mubr.bf16.gmra.mrb[0].mxu0 %v4582
        %v5291 = vpop.f32.mrb[0].mxu0
        %v5292 = vadd.f32 %v5099, %v5291
        %v5293 = vpop.f32.mrb[0].mxu0
        %v5294 = vadd.f32 %v5101, %v5293
        %v5295 = vpop.f32.mrb[0].mxu0
        %v5296 = vadd.f32 %v5103, %v5295
        %v5297 = vpop.f32.mrb[0].mxu0
        %v5298 = vadd.f32 %v5105, %v5297
        %5299 = vmatprep.mubr.bf16.mxu0 %v4587
        %5300 = vmatmul.mubr.bf16.gmra.mrb[0].mxu0 %v4586
        %v5301 = vpop.f32.mrb[0].mxu0
        %v5302 = vadd.f32 %v5109, %v5301
        %v5303 = vpop.f32.mrb[0].mxu0
        %v5304 = vadd.f32 %v5111, %v5303
        %v5305 = vpop.f32.mrb[0].mxu0
        %v5306 = vadd.f32 %v5113, %v5305
        %v5307 = vpop.f32.mrb[0].mxu0
        %v5308 = vadd.f32 %v5115, %v5307
        %5309 = vmatprep.mubr.bf16.mxu0 %v4591
        %5310 = vmatmul.mubr.bf16.gmra.mrb[0].mxu0 %v4590
        %v5311 = vpop.f32.mrb[0].mxu0
        %v5312 = vadd.f32 %v5119, %v5311
        %v5313 = vpop.f32.mrb[0].mxu0
        %v5314 = vadd.f32 %v5121, %v5313
        %v5315 = vpop.f32.mrb[0].mxu0
        %v5316 = vadd.f32 %v5123, %v5315
        %v5317 = vpop.f32.mrb[0].mxu0
        %v5318 = vadd.f32 %v5125, %v5317
        %5319 = vmatprep.mubr.bf16.mxu0 %v4595
        %5320 = vmatmul.mubr.bf16.gmra.mrb[0].mxu0 %v4594
        %v5321 = vpop.f32.mrb[0].mxu0
        %v5322 = vadd.f32 %v5129, %v5321
        %v5323 = vpop.f32.mrb[0].mxu0
        %v5324 = vadd.f32 %v5131, %v5323
        %v5325 = vpop.f32.mrb[0].mxu0
        %v5326 = vadd.f32 %v5133, %v5325
        %v5327 = vpop.f32.mrb[0].mxu0
        %v5328 = vadd.f32 %v5135, %v5327
        %5329 = vmatprep.mubr.bf16.mxu0 %v4599
        %5330 = vmatmul.mubr.bf16.gmra.mrb[0].mxu0 %v4598
        %v5331 = vpop.f32.mrb[0].mxu0
        %v5332 = vadd.f32 %v5139, %v5331
        %v5333 = vpop.f32.mrb[0].mxu0
        %v5334 = vadd.f32 %v5141, %v5333
        %v5335 = vpop.f32.mrb[0].mxu0
        %v5336 = vadd.f32 %v5143, %v5335
        %v5337 = vpop.f32.mrb[0].mxu0
        %v5338 = vadd.f32 %v5145, %v5337
        %5339 = vmatprep.mubr.bf16.mxu0 %v4603
        %5340 = vmatmul.mubr.bf16.gmra.mrb[0].mxu0 %v4602
        %v5341 = vpop.f32.mrb[0].mxu0
        %v5342 = vadd.f32 %v5149, %v5341
        %v5343 = vpop.f32.mrb[0].mxu0
        %v5344 = vadd.f32 %v5151, %v5343
        %v5345 = vpop.f32.mrb[0].mxu0
        %v5346 = vadd.f32 %v5153, %v5345
        %v5347 = vpop.f32.mrb[0].mxu0
        %v5348 = vadd.f32 %v5155, %v5347
        %5349 = vmatprep.mubr.bf16.mxu0 %v4607
        %5350 = vmatmul.mubr.bf16.gmra.mrb[0].mxu0 %v4606
        %v5351 = vpop.f32.mrb[0].mxu0
        %v5352 = vadd.f32 %v5159, %v5351
        %v5353 = vpop.f32.mrb[0].mxu0
        %v5354 = vadd.f32 %v5161, %v5353
        %v5355 = vpop.f32.mrb[0].mxu0
        %v5356 = vadd.f32 %v5163, %v5355
        %v5357 = vpop.f32.mrb[0].mxu0
        %v5358 = vadd.f32 %v5165, %v5357
        %5359 = vmatprep.mubr.bf16.mxu0 %v4611
        %5360 = vmatmul.mubr.bf16.gmra.mrb[0].mxu0 %v4610
        %v5361 = vpop.f32.mrb[0].mxu0
        %v5362 = vadd.f32 %v5169, %v5361
        %v5363 = vpop.f32.mrb[0].mxu0
        %v5364 = vadd.f32 %v5171, %v5363
        %v5365 = vpop.f32.mrb[0].mxu0
        %v5366 = vadd.f32 %v5173, %v5365
        %v5367 = vpop.f32.mrb[0].mxu0
        %v5368 = vadd.f32 %v5175, %v5367
        %5369 = vmatprep.mubr.bf16.mxu0 %v4615
        %5370 = vmatmul.mubr.bf16.gmra.mrb[0].mxu0 %v4614
        %v5371 = vpop.f32.mrb[0].mxu0
        %v5372 = vadd.f32 %v5179, %v5371
        %v5373 = vpop.f32.mrb[0].mxu0
        %v5374 = vadd.f32 %v5181, %v5373
        %v5375 = vpop.f32.mrb[0].mxu0
        %v5376 = vadd.f32 %v5183, %v5375
        %v5377 = vpop.f32.mrb[0].mxu0
        %v5378 = vadd.f32 %v5185, %v5377
        %5379 = vmatprep.mubr.bf16.mxu0 %v4619
        %5380 = vmatmul.mubr.bf16.gmra.mrb[0].mxu0 %v4618
        %v5381 = vpop.f32.mrb[0].mxu0
        %v5382 = vadd.f32 %v5189, %v5381
        %v5383 = vpop.f32.mrb[0].mxu0
        %v5384 = vadd.f32 %v5191, %v5383
        %v5385 = vpop.f32.mrb[0].mxu0
        %v5386 = vadd.f32 %v5193, %v5385
        %v5387 = vpop.f32.mrb[0].mxu0
        %v5388 = vadd.f32 %v5195, %v5387
        %5389 = vmatprep.mubr.bf16.mxu0 %v4623
        %5390 = vmatmul.mubr.bf16.gmra.mrb[0].mxu0 %v4622
        %v5391 = vpop.f32.mrb[0].mxu0
        %v5392 = vadd.f32 %v5199, %v5391
        %v5393 = vpop.f32.mrb[0].mxu0
        %v5394 = vadd.f32 %v5201, %v5393
        %v5395 = vpop.f32.mrb[0].mxu0
        %v5396 = vadd.f32 %v5203, %v5395
        %v5397 = vpop.f32.mrb[0].mxu0
        %v5398 = vadd.f32 %v5205, %v5397
        %5399 = vmatprep.mubr.bf16.mxu0 %v4627
        %5400 = vmatmul.mubr.bf16.gmra.mrb[0].mxu0 %v4626
        %v5401 = vpop.f32.mrb[0].mxu0
        %v5402 = vadd.f32 %v5209, %v5401
        %v5403 = vpop.f32.mrb[0].mxu0
        %v5404 = vadd.f32 %v5211, %v5403
        %v5405 = vpop.f32.mrb[0].mxu0
        %v5406 = vadd.f32 %v5213, %v5405
        %v5407 = vpop.f32.mrb[0].mxu0
        %v5408 = vadd.f32 %v5215, %v5407
        %5409 = vdwg.mxu0
        %5410 = vst [vmem:[%s650] sm:$0xff] %v5252
        %5411 = vst [vmem:[%s650 + $0x8] sm:$0xff] %v5254
        %5412 = vst [vmem:[%s650 + $0x10] sm:$0xff] %v5256
        %5413 = vst [vmem:[%s650 + $0x18] sm:$0xff] %v5258
        %5414 = vst [vmem:[%s650 + $0x20] sm:$0xff] %v5262
        %5415 = vst [vmem:[%s650 + $0x28] sm:$0xff] %v5264
        %5416 = vst [vmem:[%s650 + $0x30] sm:$0xff] %v5266
        %5417 = vst [vmem:[%s650 + $0x38] sm:$0xff] %v5268
        %5418 = vst [vmem:[%s650 + $0x40] sm:$0xff] %v5272
        %5419 = vst [vmem:[%s650 + $0x48] sm:$0xff] %v5274
        %5420 = vst [vmem:[%s650 + $0x50] sm:$0xff] %v5276
        %5421 = vst [vmem:[%s650 + $0x58] sm:$0xff] %v5278
        %5422 = vst [vmem:[%s650 + $0x60] sm:$0xff] %v5282
        %5423 = vst [vmem:[%s650 + $0x68] sm:$0xff] %v5284
        %5424 = vst [vmem:[%s650 + $0x70] sm:$0xff] %v5286
        %5425 = vst [vmem:[%s650 + $0x78] sm:$0xff] %v5288
        %5426 = vst [vmem:[%s650 + $0x80] sm:$0xff] %v5292
        %5427 = vst [vmem:[%s650 + $0x88] sm:$0xff] %v5294
        %5428 = vst [vmem:[%s650 + $0x90] sm:$0xff] %v5296
        %5429 = vst [vmem:[%s650 + $0x98] sm:$0xff] %v5298
        %5430 = vst [vmem:[%s650 + $0xa0] sm:$0xff] %v5302
        %5431 = vst [vmem:[%s650 + $0xa8] sm:$0xff] %v5304
        %5432 = vst [vmem:[%s650 + $0xb0] sm:$0xff] %v5306
        %5433 = vst [vmem:[%s650 + $0xb8] sm:$0xff] %v5308
        %5434 = vst [vmem:[%s650 + $0xc0] sm:$0xff] %v5312
        %5435 = vst [vmem:[%s650 + $0xc8] sm:$0xff] %v5314
        %5436 = vst [vmem:[%s650 + $0xd0] sm:$0xff] %v5316
        %5437 = vst [vmem:[%s650 + $0xd8] sm:$0xff] %v5318
        %5438 = vst [vmem:[%s650 + $0xe0] sm:$0xff] %v5322
        %5439 = vst [vmem:[%s650 + $0xe8] sm:$0xff] %v5324
        %5440 = vst [vmem:[%s650 + $0xf0] sm:$0xff] %v5326
        %5441 = vst [vmem:[%s650 + $0xf8] sm:$0xff] %v5328
        %5442 = vst [vmem:[%s650 + $0x100] sm:$0xff] %v5332
        %5443 = vst [vmem:[%s650 + $0x108] sm:$0xff] %v5334
        %5444 = vst [vmem:[%s650 + $0x110] sm:$0xff] %v5336
        %5445 = vst [vmem:[%s650 + $0x118] sm:$0xff] %v5338
        %5446 = vst [vmem:[%s650 + $0x120] sm:$0xff] %v5342
        %5447 = vst [vmem:[%s650 + $0x128] sm:$0xff] %v5344
        %5448 = vst [vmem:[%s650 + $0x130] sm:$0xff] %v5346
        %5449 = vst [vmem:[%s650 + $0x138] sm:$0xff] %v5348
        %5450 = vst [vmem:[%s650 + $0x140] sm:$0xff] %v5352
        %5451 = vst [vmem:[%s650 + $0x148] sm:$0xff] %v5354
        %5452 = vst [vmem:[%s650 + $0x150] sm:$0xff] %v5356
        %5453 = vst [vmem:[%s650 + $0x158] sm:$0xff] %v5358
        %5454 = vst [vmem:[%s650 + $0x160] sm:$0xff] %v5362
        %5455 = vst [vmem:[%s650 + $0x168] sm:$0xff] %v5364
        %5456 = vst [vmem:[%s650 + $0x170] sm:$0xff] %v5366
        %5457 = vst [vmem:[%s650 + $0x178] sm:$0xff] %v5368
        %5458 = vst [vmem:[%s650 + $0x180] sm:$0xff] %v5372
        %5459 = vst [vmem:[%s650 + $0x188] sm:$0xff] %v5374
        %5460 = vst [vmem:[%s650 + $0x190] sm:$0xff] %v5376
        %5461 = vst [vmem:[%s650 + $0x198] sm:$0xff] %v5378
        %5462 = vst [vmem:[%s650 + $0x1a0] sm:$0xff] %v5382
        %5463 = vst [vmem:[%s650 + $0x1a8] sm:$0xff] %v5384
        %5464 = vst [vmem:[%s650 + $0x1b0] sm:$0xff] %v5386
        %5465 = vst [vmem:[%s650 + $0x1b8] sm:$0xff] %v5388
        %5466 = vst [vmem:[%s650 + $0x1c0] sm:$0xff] %v5392
        %5467 = vst [vmem:[%s650 + $0x1c8] sm:$0xff] %v5394
        %5468 = vst [vmem:[%s650 + $0x1d0] sm:$0xff] %v5396
        %5469 = vst [vmem:[%s650 + $0x1d8] sm:$0xff] %v5398
        %5470 = vst [vmem:[%s650 + $0x1e0] sm:$0xff] %v5402
        %5471 = vst [vmem:[%s650 + $0x1e8] sm:$0xff] %v5404
        %5472 = vst [vmem:[%s650 + $0x1f0] sm:$0xff] %v5406
        %5473 = vst [vmem:[%s650 + $0x1f8] sm:$0xff] %v5408
        %s5474 = smul.u32 32, %s38
        %p5475 = scmp.lt.s32.totalorder %s5474, 63
        %s5476 = scalar_select %p5475, %s5474, 63
        %s5477 = smul.addr %s5476, 4
        %s5478 = scalar_lea.vmem %s15, %s5477
        %s5479 = sand.u32 %s392, 1
        %s5480 = scalar_lea.sflag [#allocation4], %s5479
        %s5481 = sand.u32 %s392, 1
        %s5482 = smul.addr %s5481, 512
        %s5483 = scalar_lea.vmem [#allocation16], %s5482
        // Predicated region
        $region113: #{autoencoder_forward.1} parent=79 // pred_check
          %p5484 = pneg %p376
        $region114: #{autoencoder_forward.1} parent=79 // pred_check_branch
          %5486 = sbr.rel (%p5484) target = $region116
        $region115: #{autoencoder_forward.1} parent=79 // pred_region
          %s5487 = smul.u32 32, %s38
        $region116: #{autoencoder_forward.1} parent=79 // pred_fallthru
          _
        // Predicated region
        $region117: #{autoencoder_forward.1} parent=79 // pred_check
          %p5488 = pneg %p402
        $region118: #{autoencoder_forward.1} parent=79 // pred_check_branch
          %5490 = sbr.rel (%p5488) target = $region120
        $region119: #{autoencoder_forward.1} parent=79 // pred_region
          %s5491 = smul.u32 32, %s38
          %s5493 = ssub.s32 8192, 8192
          %5494 = vsyncadd %s5480, %s5493
          %s5495 = smul.addr %s5491, 2
          %s5496 = smul.addr %s5495, 128
          %s5497 = scalar_lea.hbm %s16, %s5496
          %s5498 = sshll.u32 %s5483, 4
          %s5499 = int_to_ptr.vmem [resolvable:$true] %s5498
          %5504 = dma.vmem_to_hbm [thread:$0]  %s5499, 8192, %s5497, %s5480, 256, 256, 16
        $region120: #{autoencoder_forward.1} parent=79 // pred_fallthru
          _
      $region80: #{autoencoder_forward.1} parent=5 // pred_fallthru
        _
      %p5505 = scmp.le.s32.totalorder 2, %s33
      // Predicated region
      $region121: #{autoencoder_forward.1} parent=5 // pred_check
        %p5506 = pneg %p5505
      $region122: #{autoencoder_forward.1} parent=5 // pred_check_branch
        %5508 = sbr.rel (%p5506) target = $region124
      $region123: #{autoencoder_forward.1} parent=5 // pred_region
        %s5509 = ssub.s32 %s33, 2
        // Predicated region
        $region125: #{autoencoder_forward.1} parent=123 // pred_check
          %p5510 = pneg %p382
        $region126: #{autoencoder_forward.1} parent=123 // pred_check_branch
          %5512 = sbr.rel (%p5510) target = $region128
        $region127: #{autoencoder_forward.1} parent=123 // pred_region
          %s5513 = smul.u32 32, %s39
          %p5514 = scmp.lt.s32.totalorder %s5513, 63
          %s5515 = scalar_select %p5514, %s5513, 63
          %s5516 = smul.addr %s5515, 4
          %s5517 = scalar_lea.vmem %s15, %s5516
        $region128: #{autoencoder_forward.1} parent=123 // pred_fallthru
          _
        // Predicated region
        $region129: #{autoencoder_forward.1} parent=123 // pred_check
          %p5518 = pneg %p408
        $region130: #{autoencoder_forward.1} parent=123 // pred_check_branch
          %5520 = sbr.rel (%p5518) target = $region132
        $region131: #{autoencoder_forward.1} parent=123 // pred_region
          %s5521 = sand.u32 %s393, 1
          %s5522 = scalar_lea.sflag [#allocation4], %s5521
          %s5523 = sand.u32 %s393, 1
          %s5524 = smul.addr %s5523, 512
          %s5525 = scalar_lea.vmem [#allocation16], %s5524
          %5526 = dma.done %s5522, 8192
        $region132: #{autoencoder_forward.1} parent=123 // pred_fallthru
          _
      $region124: #{autoencoder_forward.1} parent=5 // pred_fallthru
        _
    $region6: #{autoencoder_forward.1} parent=1 // loop_footer
      %s37 = sadd.s32 1, %s33
    $region7: #{autoencoder_forward.1} parent=1 // loop_footer_branch
      %32 = sbr.rel target = $region3
    $region8: #{autoencoder_forward.1} parent=1 // loop_exit
      _
    %5527 = vsyncpa [#allocation3], 1
    %s5528 = scalar_lea.sflag [#allocation3], 1
    %5529 = vsyncpa %s5528, 1
    %5530 = vsyncpa [#allocation6], 1
    %5531 = vsyncpa [#allocation9], 1
    %5532 = vsyncpa [#allocation12], 1
    %5533 = vsyncpa [#allocation15], 1
    %5534 = vsyncpa [#allocation4], 1
    %s5535 = scalar_lea.sflag [#allocation4], 1
    %5536 = vsyncpa %s5535, 1

</llo_original>
